<compile_context>
chip_gen: v7x
topology: tpu7x:2x2x1
jax: 0.10.0
libtpu: 0.0.40
codegen_flags: <defaults>
</compile_context>

<pallas_src>
import functools

import numpy as np
import jax
import jax.numpy as jnp
from jax.experimental import pallas as pl
from jax.experimental.pallas import tpu as pltpu
from jax.scipy.special import ndtri


# ----------------------------- Pallas kernel -----------------------------
def wisard_kernel(hv_ref, xg_ref, thr_ref, sign_ref, mask_ref, bias_ref, out_ref,
                  *, onehot_dtype):
    """One batch tile: binarize -> H3 hash -> per-hash one-hot contracted against the
    block-diagonal sign LUT on the MXU -> min over hashes -> masked class sum + bias.
    Batch stays on the lane axis throughout."""
    U, F, TB = xg_ref.shape
    _, Cp, _ = mask_ref.shape
    E = sign_ref.shape[1] // F
    H = hv_ref.shape[0] // U

    # ---- H3 hash.  u-outer / h-inner keeps only 2*H small (F,TB) i32 accumulators
    # live (the (U,F,TB) bit tensor is never materialized); two partial accumulators
    # per hash halve the XOR dependency chain and interleave the H chains (ILP).
    part = [[jnp.zeros((F, TB), jnp.int32) for _ in range(2)] for _ in range(H)]
    for u in range(U):                                     # static unroll (U small)
        b_u = xg_ref[u] >= thr_ref[u]                      # (F, TB) bool, transient
        for h in range(H):                                 # static unroll (H small)
            coef = hv_ref[h * U + u]                       # scalar read from SMEM
            part[h][u & 1] = part[h][u & 1] ^ jnp.where(b_u, coef, 0)
    acc = [part[h][0] ^ part[h][1] for h in range(H)]      # hash index per (f, b)

    # ---- LUT sign lookup on the MXU: per-hash one-hot over the E entries,
    # contracted in ONE (F*Cp, F*E) x (F*E, TB) matmul per hash.  Only the small
    # (F*Cp, TB) f32 result stays live across the h loop; the iota / one-hot temps
    # are regenerated per h and consumed immediately by the matmul operand.
    s = None
    for h in range(H):
        eiota = jax.lax.broadcasted_iota(jnp.int32, (F, E, TB), 1)   # per-h, transient
        oh = acc[h][:, None, :] == eiota                             # (F, E, TB) bool
        if onehot_dtype == jnp.bfloat16:
            oh = oh.astype(jnp.bfloat16)                   # v6e/v7x: bf16 VPU selects
        else:
            # v5e: no bf16 VPU ops -- build the 0/1 one-hot in f32, pack to bf16 only
            # at the MXU operand (exact, since values are 0/1).
            oh = oh.astype(jnp.float32).astype(jnp.bfloat16)
        oh = oh.reshape(F * E, TB)                         # tile-aligned (E % 8 == 0)
        r = jnp.dot(sign_ref[...], oh,
                    preferred_element_type=jnp.float32)    # (F*Cp, TB)
        s = r if s is None else s + r

    # min over hashes of the binarized lookups == 1 iff every lookup was >= 0,
    # i.e. iff all H per-hash sign bits are 1 (duplicate hash hits handled exactly).
    resp = (s > (H - 0.5)).astype(jnp.float32).reshape(F, Cp, TB)
    out_ref[...] = jnp.sum(resp * mask_ref[...], axis=0) + bias_ref[...]


# --------------------- per-generation default tiling -----------------------
def _device_defaults(batch):
    """Pick (tile_batch, one-hot dtype) per TPU generation:
       v5e: TB=128 (MXU N is 128-wide), f32 compares (no bf16 VPU).
       v6e: TB=256 (fill the 256-wide MXU N), bf16 one-hots.
       v7x: same as v6e but keep >=2 grid steps (both TensorCores) when B < 512."""
    try:
        kind = jax.devices()[0].device_kind.lower()
    except Exception:
        kind = ""
    is_v5e = ("v5e" in kind) or ("v5 lite" in kind) or ("v5litepod" in kind)
    is_v7 = "v7" in kind
    onehot_dtype = jnp.float32 if is_v5e else jnp.bfloat16

    if is_v5e:
        prefer = (128,)
    elif is_v7:
        prefer = (256, 128) if batch >= 512 else (128, 256)
    else:                                   # v6e / newer
        prefer = (256, 128)
    tb = batch                              # fallback: whole batch in one tile
    for cand in prefer:
        if cand <= batch and batch % cand == 0:
            tb = cand
            break
    return tb, onehot_dtype


# ------------------------------- wrapper ----------------------------------
def backprop_wisard_forward(x, thresholds, input_order, hash_values, data, mask, bias,
                            *, bits_per_input, unit_inputs, tile_batch=None,
                            onehot_dtype=None):
    B, N = x.shape
    P, U = bits_per_input, unit_inputs
    C, F, E = data.shape
    H = hash_values.shape[0]
    n_real = N * P
    Cp = ((C + 7) // 8) * 8                                # sublane-align class dim

    # H3 XOR of coefficients drawn from [0, E) stays < E only if E is a power of two.
    assert E > 0 and (E & (E - 1)) == 0, "unit_entries must be a power of two"

    # --- glue: fold pad + input_order permutation into static gathers of x / thresholds,
    #     and put the batch on the last (lane) axis ---
    order = input_order.astype(jnp.int32)                  # (F*U,), slot s = f*U + u
    valid = order < n_real
    src_input = jnp.where(valid, order // P, 0)
    src_bit = jnp.where(valid, order % P, 0)
    # padded slots: value 0 vs threshold 1 -> bit always 0 (robust even to +/-inf inputs)
    thr_slot = jnp.where(valid, thresholds[src_input, src_bit], 1.0).astype(jnp.float32)
    xg_slot = jnp.where(valid[None, :], x.astype(jnp.float32)[:, src_input], 0.0)
    thr_ufb = thr_slot.reshape(F, U).T[:, :, None]         # (U, F, 1)
    xg = xg_slot.reshape(B, F, U).transpose(2, 1, 0)       # (U, F, B)

    # Block-diagonal binarized LUT: sign_bd[f*Cp + c, f*E + e] = (data[c, f, e] >= 0).
    # One big matmul (M = F*Cp, K = F*E) instead of F tiny batched ones.
    sign = (data >= 0).astype(jnp.float32)                                 # (C, F, E)
    sign = jnp.pad(sign, ((0, Cp - C), (0, 0), (0, 0)))                    # (Cp, F, E)
    sign_bd = jnp.einsum('cfe,fg->fcge', sign, jnp.eye(F, dtype=jnp.float32))
    sign_bd = sign_bd.reshape(F * Cp, F * E).astype(jnp.bfloat16)

    mask_f = jnp.pad(mask.astype(jnp.float32).T,
                     ((0, 0), (0, Cp - C)))[:, :, None]                    # (F, Cp, 1)
    bias_p = jnp.pad(bias.astype(jnp.float32), (0, Cp - C)).reshape(Cp, 1)
    hv_flat = hash_values.astype(jnp.int32).reshape(-1)                    # (H*U,)

    auto_tb, auto_dt = _device_defaults(B)
    TB = auto_tb if tile_batch is None else tile_batch
    onehot_dtype = auto_dt if onehot_dtype is None else onehot_dtype
    assert B % TB == 0 and (TB % 128 == 0 or TB == B), \
        "batch tile must divide the batch and be a multiple of 128 (or the whole batch)"
    NT = B // TB

    kernel = functools.partial(wisard_kernel, onehot_dtype=onehot_dtype)

    def build(resident_mode):
        res = {} if resident_mode is None else {"pipeline_mode": resident_mode}
        grid_spec = pltpu.PrefetchScalarGridSpec(
            num_scalar_prefetch=1,                         # hv -> SMEM, scalar reads
            grid=(NT,),
            in_specs=[
                pl.BlockSpec((U, F, TB), lambda i, hv: (0, 0, i)),           # batch-tiled
                pl.BlockSpec((U, F, 1), lambda i, hv: (0, 0, 0), **res),     # resident
                pl.BlockSpec((F * Cp, F * E), lambda i, hv: (0, 0), **res),  # resident LUT
                pl.BlockSpec((F, Cp, 1), lambda i, hv: (0, 0, 0), **res),    # resident
                pl.BlockSpec((Cp, 1), lambda i, hv: (0, 0), **res),          # resident
            ],
            out_specs=pl.BlockSpec((Cp, TB), lambda i, hv: (0, i)),          # lane-dense
        )
        return pl.pallas_call(
            kernel,
            out_shape=jax.ShapeDtypeStruct((Cp, B), jnp.float32),
            grid_spec=grid_spec,
            compiler_params=pltpu.CompilerParams(
                dimension_semantics=("parallel",),          # shard tiles across v7x's 2 TCs
                vmem_limit_bytes=32 * 1024 * 1024,          # explicit, safe on v5e/v6e/v7x
            ),
        )

    args = (hv_flat, xg, thr_ufb, sign_bd, mask_f, bias_p)
    try:
        # Single-buffer the grid-invariant operands (their block index never changes):
        # halves their VMEM footprint, which matters for large LUTs on v7x (64 MiB VMEM).
        out = build(pl.Buffered(1))(*args)
    except Exception:
        out = build(None)(*args)            # fallback: default double-buffering

    return out[:C].T                        # (B, C)


# ------------------------- pure-JAX reference ------------------------------
def reference_forward(x, thresholds, input_order, hash_values, data, mask, bias,
                      *, bits_per_input, unit_inputs):
    B, N = x.shape
    P, U = bits_per_input, unit_inputs
    C, F, E = data.shape
    H = hash_values.shape[0]
    input_bits = F * U
    null_bits = input_bits - N * P

    dup = jnp.broadcast_to(x[:, :, None], (B, N, P))
    binarized = (dup >= thresholds[None, :, :]).astype(jnp.int32).reshape(B, -1)
    padded = jnp.pad(binarized, ((0, 0), (0, null_bits)))
    mapped = padded[:, input_order]
    bits = mapped.reshape(B * F, U)

    terms = bits[:, None, :] * hash_values.astype(jnp.int32)[None, :, :]   # (B*F, H, U)
    hash_out = terms[:, :, 0]
    for u in range(1, U):
        hash_out = hash_out ^ terms[:, :, u]

    idx = hash_out.reshape(B, F, H)
    data_b = jnp.broadcast_to(data[None], (B, C, F, E))
    idx_b = jnp.broadcast_to(idx[:, None, :, :], (B, C, F, H))
    lookup = jnp.take_along_axis(data_b, idx_b, axis=3)                    # (B, C, F, H)
    bin_lookup = (lookup >= 0).astype(jnp.float32)
    responses = bin_lookup.min(axis=-1)                                    # (B, C, F)
    return (responses * mask[None]).sum(axis=-1) + bias[None, :]


# --------------------------------- main ------------------------------------
if __name__ == "__main__":
    key = jax.random.PRNGKey(0)

    # small hyperparameters consistent with the module's __init__
    num_inputs = 15            # 15*4 = 60 bits -> 4 null (padded) bits exercised
    num_classes = 4
    unit_inputs = 8
    unit_entries = 64
    unit_hashes = 2
    bits_per_input = 4
    batch = 256                # batch on the lane axis

    k_train, k_data, k_hash, k_order, k_x = jax.random.split(key, 5)

    # deterministic "train_data" used only to set thresholds (as in __init__)
    num_train = 64
    train_data = jax.random.normal(k_train, (num_train, num_inputs), dtype=jnp.float32)

    train_mean = train_data.mean(axis=0)
    train_std = train_data.std(axis=0, ddof=1)          # torch.std default: unbiased
    std_skews = ndtri((jnp.arange(bits_per_input, dtype=jnp.float32) + 1.0)
                      / (bits_per_input + 1.0))
    thresholds = (std_skews[:, None] * train_std[None, :] + train_mean[None, :]).T  # (N, P)
    second_smallest = jnp.sort(train_data, axis=0)[1]   # kthvalue(2, axis=0)
    thresholds = jnp.maximum(thresholds.T, second_smallest[None, :]).T
    thresholds = jnp.minimum(thresholds.T, train_data.max(axis=0)[None, :]).T
    thresholds = thresholds.astype(jnp.float32)

    input_bits = int(np.ceil(num_inputs * bits_per_input / unit_inputs)) * unit_inputs
    filters_per_discrim = input_bits // unit_inputs

    data = jax.random.uniform(k_data, (num_classes, filters_per_discrim, unit_entries),
                              minval=-1.0, maxval=1.0, dtype=jnp.float32)
    hash_values = jax.random.randint(k_hash, (unit_hashes, unit_inputs),
                                     0, unit_entries, dtype=jnp.int32)
    input_order = jax.random.permutation(k_order, input_bits).astype(jnp.int32)
    mask = jnp.ones((num_classes, filters_per_discrim), dtype=jnp.float32)
    bias = jnp.zeros((num_classes,), dtype=jnp.float32)

    x = jax.random.normal(k_x, (batch, num_inputs), dtype=jnp.float32)

    out = backprop_wisard_forward(
        x, thresholds, input_order, hash_values, data, mask, bias,
        bits_per_input=bits_per_input, unit_inputs=unit_inputs)
    out = jax.block_until_ready(out)

    ref = reference_forward(
        x, thresholds, input_order, hash_values, data, mask, bias,
        bits_per_input=bits_per_input, unit_inputs=unit_inputs)
    np.testing.assert_allclose(np.asarray(out), np.asarray(ref), atol=1e-6)

    print("KERNEL_OK")
</pallas_src>

<mosaic_0001>
module attributes {stable_mosaic.version = 11 : i64} {
  func.func @wisard_kernel(%arg0: i32, %arg1: memref<16xi32, #tpu.memory_space<smem>>, %arg2: memref<8x8x256xf32, #tpu.memory_space<vmem>>, %arg3: memref<8x8x1xf32, #tpu.memory_space<vmem>>, %arg4: memref<64x512xbf16, #tpu.memory_space<vmem>>, %arg5: memref<8x8x1xf32, #tpu.memory_space<vmem>>, %arg6: memref<8x1xf32, #tpu.memory_space<vmem>>, %arg7: memref<8x256xf32, #tpu.memory_space<vmem>>) attributes {dimension_semantics = [#tpu.dimension_semantics<parallel>], iteration_bounds = array<i64: 1>, scalar_prefetch = 1 : i64, scratch_operands = 0 : i64, tpu.core_type = #tpu.core_type<tc>, window_params = [{transform_indices = @transform_0, window_bounds = array<i64: 8, 8, 256>}, {pipeline_mode = #tpu.pipeline_mode<synchronous>, transform_indices = @transform_1, window_bounds = array<i64: 8, 8, 1>}, {pipeline_mode = #tpu.pipeline_mode<synchronous>, transform_indices = @transform_2, window_bounds = array<i64: 64, 512>}, {pipeline_mode = #tpu.pipeline_mode<synchronous>, transform_indices = @transform_3, window_bounds = array<i64: 8, 8, 1>}, {pipeline_mode = #tpu.pipeline_mode<synchronous>, transform_indices = @transform_4, window_bounds = array<i64: 8, 1>}, {transform_indices = @transform_5, window_bounds = array<i64: 8, 256>}]} {
    %c0_i32 = arith.constant 0 : i32
    %0 = vector.broadcast %c0_i32 : i32 to vector<8x256xi32>
    %c0_i32_0 = arith.constant 0 : i32
    %1 = vector.broadcast %c0_i32_0 : i32 to vector<8x256xi32>
    %c0_i32_1 = arith.constant 0 : i32
    %2 = vector.broadcast %c0_i32_1 : i32 to vector<8x256xi32>
    %c0_i32_2 = arith.constant 0 : i32
    %3 = vector.broadcast %c0_i32_2 : i32 to vector<8x256xi32>
    %c0 = arith.constant 0 : index
    %c0_3 = arith.constant 0 : index
    %c0_4 = arith.constant 0 : index
    %4 = vector.load %arg2[%c0, %c0_3, %c0_4] : memref<8x8x256xf32, #tpu.memory_space<vmem>>, vector<1x8x256xf32>
    %5 = vector.shape_cast %4 : vector<1x8x256xf32> to vector<8x256xf32>
    %c0_5 = arith.constant 0 : index
    %c0_6 = arith.constant 0 : index
    %c0_7 = arith.constant 0 : index
    %6 = vector.load %arg3[%c0_5, %c0_6, %c0_7] : memref<8x8x1xf32, #tpu.memory_space<vmem>>, vector<1x8x1xf32>
    %7 = vector.shape_cast %6 : vector<1x8x1xf32> to vector<8x1xf32>
    %8 = vector.broadcast %7 : vector<8x1xf32> to vector<8x256xf32>
    %9 = arith.cmpf oge, %5, %8 : vector<8x256xf32>
    %c0_8 = arith.constant 0 : index
    %10 = memref.load %arg1[%c0_8] : memref<16xi32, #tpu.memory_space<smem>>
    %c0_i32_9 = arith.constant 0 : i32
    %11 = vector.broadcast %10 : i32 to vector<8x256xi32>
    %12 = vector.broadcast %c0_i32_9 : i32 to vector<8x256xi32>
    %13 = arith.select %9, %11, %12 : vector<8x256xi1>, vector<8x256xi32>
    %14 = arith.xori %0, %13 : vector<8x256xi32>
    %c8 = arith.constant 8 : index
    %15 = memref.load %arg1[%c8] : memref<16xi32, #tpu.memory_space<smem>>
    %c0_i32_10 = arith.constant 0 : i32
    %16 = vector.broadcast %15 : i32 to vector<8x256xi32>
    %17 = vector.broadcast %c0_i32_10 : i32 to vector<8x256xi32>
    %18 = arith.select %9, %16, %17 : vector<8x256xi1>, vector<8x256xi32>
    %19 = arith.xori %2, %18 : vector<8x256xi32>
    %c1 = arith.constant 1 : index
    %c0_11 = arith.constant 0 : index
    %c0_12 = arith.constant 0 : index
    %20 = vector.load %arg2[%c1, %c0_11, %c0_12] : memref<8x8x256xf32, #tpu.memory_space<vmem>>, vector<1x8x256xf32>
    %21 = vector.shape_cast %20 : vector<1x8x256xf32> to vector<8x256xf32>
    %c1_13 = arith.constant 1 : index
    %c0_14 = arith.constant 0 : index
    %c0_15 = arith.constant 0 : index
    %22 = vector.load %arg3[%c1_13, %c0_14, %c0_15] : memref<8x8x1xf32, #tpu.memory_space<vmem>>, vector<1x8x1xf32>
    %23 = vector.shape_cast %22 : vector<1x8x1xf32> to vector<8x1xf32>
    %24 = vector.broadcast %23 : vector<8x1xf32> to vector<8x256xf32>
    %25 = arith.cmpf oge, %21, %24 : vector<8x256xf32>
    %c1_16 = arith.constant 1 : index
    %26 = memref.load %arg1[%c1_16] : memref<16xi32, #tpu.memory_space<smem>>
    %c0_i32_17 = arith.constant 0 : i32
    %27 = vector.broadcast %26 : i32 to vector<8x256xi32>
    %28 = vector.broadcast %c0_i32_17 : i32 to vector<8x256xi32>
    %29 = arith.select %25, %27, %28 : vector<8x256xi1>, vector<8x256xi32>
    %30 = arith.xori %1, %29 : vector<8x256xi32>
    %c9 = arith.constant 9 : index
    %31 = memref.load %arg1[%c9] : memref<16xi32, #tpu.memory_space<smem>>
    %c0_i32_18 = arith.constant 0 : i32
    %32 = vector.broadcast %31 : i32 to vector<8x256xi32>
    %33 = vector.broadcast %c0_i32_18 : i32 to vector<8x256xi32>
    %34 = arith.select %25, %32, %33 : vector<8x256xi1>, vector<8x256xi32>
    %35 = arith.xori %3, %34 : vector<8x256xi32>
    %c2 = arith.constant 2 : index
    %c0_19 = arith.constant 0 : index
    %c0_20 = arith.constant 0 : index
    %36 = vector.load %arg2[%c2, %c0_19, %c0_20] : memref<8x8x256xf32, #tpu.memory_space<vmem>>, vector<1x8x256xf32>
    %37 = vector.shape_cast %36 : vector<1x8x256xf32> to vector<8x256xf32>
    %c2_21 = arith.constant 2 : index
    %c0_22 = arith.constant 0 : index
    %c0_23 = arith.constant 0 : index
    %38 = vector.load %arg3[%c2_21, %c0_22, %c0_23] : memref<8x8x1xf32, #tpu.memory_space<vmem>>, vector<1x8x1xf32>
    %39 = vector.shape_cast %38 : vector<1x8x1xf32> to vector<8x1xf32>
    %40 = vector.broadcast %39 : vector<8x1xf32> to vector<8x256xf32>
    %41 = arith.cmpf oge, %37, %40 : vector<8x256xf32>
    %c2_24 = arith.constant 2 : index
    %42 = memref.load %arg1[%c2_24] : memref<16xi32, #tpu.memory_space<smem>>
    %c0_i32_25 = arith.constant 0 : i32
    %43 = vector.broadcast %42 : i32 to vector<8x256xi32>
    %44 = vector.broadcast %c0_i32_25 : i32 to vector<8x256xi32>
    %45 = arith.select %41, %43, %44 : vector<8x256xi1>, vector<8x256xi32>
    %46 = arith.xori %14, %45 : vector<8x256xi32>
    %c10 = arith.constant 10 : index
    %47 = memref.load %arg1[%c10] : memref<16xi32, #tpu.memory_space<smem>>
    %c0_i32_26 = arith.constant 0 : i32
    %48 = vector.broadcast %47 : i32 to vector<8x256xi32>
    %49 = vector.broadcast %c0_i32_26 : i32 to vector<8x256xi32>
    %50 = arith.select %41, %48, %49 : vector<8x256xi1>, vector<8x256xi32>
    %51 = arith.xori %19, %50 : vector<8x256xi32>
    %c3 = arith.constant 3 : index
    %c0_27 = arith.constant 0 : index
    %c0_28 = arith.constant 0 : index
    %52 = vector.load %arg2[%c3, %c0_27, %c0_28] : memref<8x8x256xf32, #tpu.memory_space<vmem>>, vector<1x8x256xf32>
    %53 = vector.shape_cast %52 : vector<1x8x256xf32> to vector<8x256xf32>
    %c3_29 = arith.constant 3 : index
    %c0_30 = arith.constant 0 : index
    %c0_31 = arith.constant 0 : index
    %54 = vector.load %arg3[%c3_29, %c0_30, %c0_31] : memref<8x8x1xf32, #tpu.memory_space<vmem>>, vector<1x8x1xf32>
    %55 = vector.shape_cast %54 : vector<1x8x1xf32> to vector<8x1xf32>
    %56 = vector.broadcast %55 : vector<8x1xf32> to vector<8x256xf32>
    %57 = arith.cmpf oge, %53, %56 : vector<8x256xf32>
    %c3_32 = arith.constant 3 : index
    %58 = memref.load %arg1[%c3_32] : memref<16xi32, #tpu.memory_space<smem>>
    %c0_i32_33 = arith.constant 0 : i32
    %59 = vector.broadcast %58 : i32 to vector<8x256xi32>
    %60 = vector.broadcast %c0_i32_33 : i32 to vector<8x256xi32>
    %61 = arith.select %57, %59, %60 : vector<8x256xi1>, vector<8x256xi32>
    %62 = arith.xori %30, %61 : vector<8x256xi32>
    %c11 = arith.constant 11 : index
    %63 = memref.load %arg1[%c11] : memref<16xi32, #tpu.memory_space<smem>>
    %c0_i32_34 = arith.constant 0 : i32
    %64 = vector.broadcast %63 : i32 to vector<8x256xi32>
    %65 = vector.broadcast %c0_i32_34 : i32 to vector<8x256xi32>
    %66 = arith.select %57, %64, %65 : vector<8x256xi1>, vector<8x256xi32>
    %67 = arith.xori %35, %66 : vector<8x256xi32>
    %c4 = arith.constant 4 : index
    %c0_35 = arith.constant 0 : index
    %c0_36 = arith.constant 0 : index
    %68 = vector.load %arg2[%c4, %c0_35, %c0_36] : memref<8x8x256xf32, #tpu.memory_space<vmem>>, vector<1x8x256xf32>
    %69 = vector.shape_cast %68 : vector<1x8x256xf32> to vector<8x256xf32>
    %c4_37 = arith.constant 4 : index
    %c0_38 = arith.constant 0 : index
    %c0_39 = arith.constant 0 : index
    %70 = vector.load %arg3[%c4_37, %c0_38, %c0_39] : memref<8x8x1xf32, #tpu.memory_space<vmem>>, vector<1x8x1xf32>
    %71 = vector.shape_cast %70 : vector<1x8x1xf32> to vector<8x1xf32>
    %72 = vector.broadcast %71 : vector<8x1xf32> to vector<8x256xf32>
    %73 = arith.cmpf oge, %69, %72 : vector<8x256xf32>
    %c4_40 = arith.constant 4 : index
    %74 = memref.load %arg1[%c4_40] : memref<16xi32, #tpu.memory_space<smem>>
    %c0_i32_41 = arith.constant 0 : i32
    %75 = vector.broadcast %74 : i32 to vector<8x256xi32>
    %76 = vector.broadcast %c0_i32_41 : i32 to vector<8x256xi32>
    %77 = arith.select %73, %75, %76 : vector<8x256xi1>, vector<8x256xi32>
    %78 = arith.xori %46, %77 : vector<8x256xi32>
    %c12 = arith.constant 12 : index
    %79 = memref.load %arg1[%c12] : memref<16xi32, #tpu.memory_space<smem>>
    %c0_i32_42 = arith.constant 0 : i32
    %80 = vector.broadcast %79 : i32 to vector<8x256xi32>
    %81 = vector.broadcast %c0_i32_42 : i32 to vector<8x256xi32>
    %82 = arith.select %73, %80, %81 : vector<8x256xi1>, vector<8x256xi32>
    %83 = arith.xori %51, %82 : vector<8x256xi32>
    %c5 = arith.constant 5 : index
    %c0_43 = arith.constant 0 : index
    %c0_44 = arith.constant 0 : index
    %84 = vector.load %arg2[%c5, %c0_43, %c0_44] : memref<8x8x256xf32, #tpu.memory_space<vmem>>, vector<1x8x256xf32>
    %85 = vector.shape_cast %84 : vector<1x8x256xf32> to vector<8x256xf32>
    %c5_45 = arith.constant 5 : index
    %c0_46 = arith.constant 0 : index
    %c0_47 = arith.constant 0 : index
    %86 = vector.load %arg3[%c5_45, %c0_46, %c0_47] : memref<8x8x1xf32, #tpu.memory_space<vmem>>, vector<1x8x1xf32>
    %87 = vector.shape_cast %86 : vector<1x8x1xf32> to vector<8x1xf32>
    %88 = vector.broadcast %87 : vector<8x1xf32> to vector<8x256xf32>
    %89 = arith.cmpf oge, %85, %88 : vector<8x256xf32>
    %c5_48 = arith.constant 5 : index
    %90 = memref.load %arg1[%c5_48] : memref<16xi32, #tpu.memory_space<smem>>
    %c0_i32_49 = arith.constant 0 : i32
    %91 = vector.broadcast %90 : i32 to vector<8x256xi32>
    %92 = vector.broadcast %c0_i32_49 : i32 to vector<8x256xi32>
    %93 = arith.select %89, %91, %92 : vector<8x256xi1>, vector<8x256xi32>
    %94 = arith.xori %62, %93 : vector<8x256xi32>
    %c13 = arith.constant 13 : index
    %95 = memref.load %arg1[%c13] : memref<16xi32, #tpu.memory_space<smem>>
    %c0_i32_50 = arith.constant 0 : i32
    %96 = vector.broadcast %95 : i32 to vector<8x256xi32>
    %97 = vector.broadcast %c0_i32_50 : i32 to vector<8x256xi32>
    %98 = arith.select %89, %96, %97 : vector<8x256xi1>, vector<8x256xi32>
    %99 = arith.xori %67, %98 : vector<8x256xi32>
    %c6 = arith.constant 6 : index
    %c0_51 = arith.constant 0 : index
    %c0_52 = arith.constant 0 : index
    %100 = vector.load %arg2[%c6, %c0_51, %c0_52] : memref<8x8x256xf32, #tpu.memory_space<vmem>>, vector<1x8x256xf32>
    %101 = vector.shape_cast %100 : vector<1x8x256xf32> to vector<8x256xf32>
    %c6_53 = arith.constant 6 : index
    %c0_54 = arith.constant 0 : index
    %c0_55 = arith.constant 0 : index
    %102 = vector.load %arg3[%c6_53, %c0_54, %c0_55] : memref<8x8x1xf32, #tpu.memory_space<vmem>>, vector<1x8x1xf32>
    %103 = vector.shape_cast %102 : vector<1x8x1xf32> to vector<8x1xf32>
    %104 = vector.broadcast %103 : vector<8x1xf32> to vector<8x256xf32>
    %105 = arith.cmpf oge, %101, %104 : vector<8x256xf32>
    %c6_56 = arith.constant 6 : index
    %106 = memref.load %arg1[%c6_56] : memref<16xi32, #tpu.memory_space<smem>>
    %c0_i32_57 = arith.constant 0 : i32
    %107 = vector.broadcast %106 : i32 to vector<8x256xi32>
    %108 = vector.broadcast %c0_i32_57 : i32 to vector<8x256xi32>
    %109 = arith.select %105, %107, %108 : vector<8x256xi1>, vector<8x256xi32>
    %110 = arith.xori %78, %109 : vector<8x256xi32>
    %c14 = arith.constant 14 : index
    %111 = memref.load %arg1[%c14] : memref<16xi32, #tpu.memory_space<smem>>
    %c0_i32_58 = arith.constant 0 : i32
    %112 = vector.broadcast %111 : i32 to vector<8x256xi32>
    %113 = vector.broadcast %c0_i32_58 : i32 to vector<8x256xi32>
    %114 = arith.select %105, %112, %113 : vector<8x256xi1>, vector<8x256xi32>
    %115 = arith.xori %83, %114 : vector<8x256xi32>
    %c7 = arith.constant 7 : index
    %c0_59 = arith.constant 0 : index
    %c0_60 = arith.constant 0 : index
    %116 = vector.load %arg2[%c7, %c0_59, %c0_60] : memref<8x8x256xf32, #tpu.memory_space<vmem>>, vector<1x8x256xf32>
    %117 = vector.shape_cast %116 : vector<1x8x256xf32> to vector<8x256xf32>
    %c7_61 = arith.constant 7 : index
    %c0_62 = arith.constant 0 : index
    %c0_63 = arith.constant 0 : index
    %118 = vector.load %arg3[%c7_61, %c0_62, %c0_63] : memref<8x8x1xf32, #tpu.memory_space<vmem>>, vector<1x8x1xf32>
    %119 = vector.shape_cast %118 : vector<1x8x1xf32> to vector<8x1xf32>
    %120 = vector.broadcast %119 : vector<8x1xf32> to vector<8x256xf32>
    %121 = arith.cmpf oge, %117, %120 : vector<8x256xf32>
    %c7_64 = arith.constant 7 : index
    %122 = memref.load %arg1[%c7_64] : memref<16xi32, #tpu.memory_space<smem>>
    %c0_i32_65 = arith.constant 0 : i32
    %123 = vector.broadcast %122 : i32 to vector<8x256xi32>
    %124 = vector.broadcast %c0_i32_65 : i32 to vector<8x256xi32>
    %125 = arith.select %121, %123, %124 : vector<8x256xi1>, vector<8x256xi32>
    %126 = arith.xori %94, %125 : vector<8x256xi32>
    %c15 = arith.constant 15 : index
    %127 = memref.load %arg1[%c15] : memref<16xi32, #tpu.memory_space<smem>>
    %c0_i32_66 = arith.constant 0 : i32
    %128 = vector.broadcast %127 : i32 to vector<8x256xi32>
    %129 = vector.broadcast %c0_i32_66 : i32 to vector<8x256xi32>
    %130 = arith.select %121, %128, %129 : vector<8x256xi1>, vector<8x256xi32>
    %131 = arith.xori %99, %130 : vector<8x256xi32>
    %132 = arith.xori %110, %126 : vector<8x256xi32>
    %133 = arith.xori %115, %131 : vector<8x256xi32>
    %134 = tpu.iota {dimensions = array<i32: 1>} : vector<8x64x256xi32>
    %135 = vector.shape_cast %132 : vector<8x256xi32> to vector<8x1x256xi32>
    %136 = vector.broadcast %135 : vector<8x1x256xi32> to vector<8x64x256xi32>
    %137 = arith.cmpi eq, %136, %134 : vector<8x64x256xi32>
    %138 = arith.extui %137 : vector<8x64x256xi1> to vector<8x64x256xi32>
    %139 = arith.sitofp %138 : vector<8x64x256xi32> to vector<8x64x256xf32>
    %140 = arith.truncf %139 : vector<8x64x256xf32> to vector<8x64x256xbf16>
    %141 = vector.shape_cast %140 : vector<8x64x256xbf16> to vector<512x256xbf16>
    %c0_67 = arith.constant 0 : index
    %c0_68 = arith.constant 0 : index
    %142 = vector.load %arg4[%c0_67, %c0_68] : memref<64x512xbf16, #tpu.memory_space<vmem>>, vector<64x512xbf16>
    %cst = arith.constant dense<0.000000e+00> : vector<64x256xf32>
    %143 = tpu.matmul %142, %141, %cst {dimension_numbers = #tpu.dot_dimension_numbers<[1], [0], [0], [1], [0, 0, 1, 1], [], []>} : vector<64x512xbf16>, vector<512x256xbf16>, vector<64x256xf32> -> vector<64x256xf32>
    %144 = tpu.iota {dimensions = array<i32: 1>} : vector<8x64x256xi32>
    %145 = vector.shape_cast %133 : vector<8x256xi32> to vector<8x1x256xi32>
    %146 = vector.broadcast %145 : vector<8x1x256xi32> to vector<8x64x256xi32>
    %147 = arith.cmpi eq, %146, %144 : vector<8x64x256xi32>
    %148 = arith.extui %147 : vector<8x64x256xi1> to vector<8x64x256xi32>
    %149 = arith.sitofp %148 : vector<8x64x256xi32> to vector<8x64x256xf32>
    %150 = arith.truncf %149 : vector<8x64x256xf32> to vector<8x64x256xbf16>
    %151 = vector.shape_cast %150 : vector<8x64x256xbf16> to vector<512x256xbf16>
    %c0_69 = arith.constant 0 : index
    %c0_70 = arith.constant 0 : index
    %152 = vector.load %arg4[%c0_69, %c0_70] : memref<64x512xbf16, #tpu.memory_space<vmem>>, vector<64x512xbf16>
    %cst_71 = arith.constant dense<0.000000e+00> : vector<64x256xf32>
    %153 = tpu.matmul %152, %151, %cst_71 {dimension_numbers = #tpu.dot_dimension_numbers<[1], [0], [0], [1], [0, 0, 1, 1], [], []>} : vector<64x512xbf16>, vector<512x256xbf16>, vector<64x256xf32> -> vector<64x256xf32>
    %154 = arith.addf %143, %153 : vector<64x256xf32>
    %cst_72 = arith.constant 1.500000e+00 : f32
    %155 = vector.broadcast %cst_72 : f32 to vector<64x256xf32>
    %156 = arith.cmpf ogt, %154, %155 : vector<64x256xf32>
    %157 = arith.extui %156 : vector<64x256xi1> to vector<64x256xi32>
    %158 = arith.sitofp %157 : vector<64x256xi32> to vector<64x256xf32>
    %159 = vector.shape_cast %158 : vector<64x256xf32> to vector<8x8x256xf32>
    %c0_73 = arith.constant 0 : index
    %c0_74 = arith.constant 0 : index
    %c0_75 = arith.constant 0 : index
    %160 = vector.load %arg5[%c0_73, %c0_74, %c0_75] : memref<8x8x1xf32, #tpu.memory_space<vmem>>, vector<8x8x1xf32>
    %161 = vector.broadcast %160 : vector<8x8x1xf32> to vector<8x8x256xf32>
    %162 = arith.mulf %159, %161 : vector<8x8x256xf32>
    %cst_76 = arith.constant dense<0.000000e+00> : vector<8x256xf32>
    %163 = vector.multi_reduction <add>, %162, %cst_76 [0] : vector<8x8x256xf32> to vector<8x256xf32>
    %c0_77 = arith.constant 0 : index
    %c0_78 = arith.constant 0 : index
    %164 = vector.load %arg6[%c0_77, %c0_78] : memref<8x1xf32, #tpu.memory_space<vmem>>, vector<8x1xf32>
    %165 = vector.broadcast %164 : vector<8x1xf32> to vector<8x256xf32>
    %166 = arith.addf %163, %165 : vector<8x256xf32>
    %c0_79 = arith.constant 0 : index
    %c0_80 = arith.constant 0 : index
    %167 = vector.load %arg7[%c0_79, %c0_80] : memref<8x256xf32, #tpu.memory_space<vmem>>, vector<8x256xf32>
    tpu.vector_store %arg7[%c0_79, %c0_80], %166 {strides = array<i32>} : memref<8x256xf32, #tpu.memory_space<vmem>>, vector<8x256xf32>,
    return
  }
  func.func @transform_0(%arg0: i32, %arg1: memref<16xi32, #tpu.memory_space<smem>>) -> (i32, i32, i32) {
    %c0_i32 = arith.constant 0 : i32
    %c0_i32_0 = arith.constant 0 : i32
    %c0_i32_1 = arith.constant 0 : i32
    return %c0_i32, %c0_i32_0, %arg0 : i32, i32, i32
  }
  func.func @transform_1(%arg0: i32, %arg1: memref<16xi32, #tpu.memory_space<smem>>) -> (i32, i32, i32) {
    %c0_i32 = arith.constant 0 : i32
    %c0_i32_0 = arith.constant 0 : i32
    %c0_i32_1 = arith.constant 0 : i32
    %c0_i32_2 = arith.constant 0 : i32
    return %c0_i32, %c0_i32_0, %c0_i32_1 : i32, i32, i32
  }
  func.func @transform_2(%arg0: i32, %arg1: memref<16xi32, #tpu.memory_space<smem>>) -> (i32, i32) {
    %c0_i32 = arith.constant 0 : i32
    %c0_i32_0 = arith.constant 0 : i32
    %c0_i32_1 = arith.constant 0 : i32
    return %c0_i32, %c0_i32_0 : i32, i32
  }
  func.func @transform_3(%arg0: i32, %arg1: memref<16xi32, #tpu.memory_space<smem>>) -> (i32, i32, i32) {
    %c0_i32 = arith.constant 0 : i32
    %c0_i32_0 = arith.constant 0 : i32
    %c0_i32_1 = arith.constant 0 : i32
    %c0_i32_2 = arith.constant 0 : i32
    return %c0_i32, %c0_i32_0, %c0_i32_1 : i32, i32, i32
  }
  func.func @transform_4(%arg0: i32, %arg1: memref<16xi32, #tpu.memory_space<smem>>) -> (i32, i32) {
    %c0_i32 = arith.constant 0 : i32
    %c0_i32_0 = arith.constant 0 : i32
    %c0_i32_1 = arith.constant 0 : i32
    return %c0_i32, %c0_i32_0 : i32, i32
  }
  func.func @transform_5(%arg0: i32, %arg1: memref<16xi32, #tpu.memory_space<smem>>) -> (i32, i32) {
    %c0_i32 = arith.constant 0 : i32
    %c0_i32_0 = arith.constant 0 : i32
    return %c0_i32, %arg0 : i32, i32
  }
}

module attributes {stable_mosaic.version = 11 : i64} {
  func.func @wisard_kernel(%arg0: i32, %arg1: memref<16xi32, #tpu.memory_space<smem>>, %arg2: memref<8x8x256xf32, #tpu.memory_space<vmem>>, %arg3: memref<8x8x1xf32, #tpu.memory_space<vmem>>, %arg4: memref<64x512xbf16, #tpu.memory_space<vmem>>, %arg5: memref<8x8x1xf32, #tpu.memory_space<vmem>>, %arg6: memref<8x1xf32, #tpu.memory_space<vmem>>, %arg7: memref<8x256xf32, #tpu.memory_space<vmem>>) attributes {dimension_semantics = [#tpu.dimension_semantics<parallel>], iteration_bounds = array<i64: 1>, scalar_prefetch = 1 : i64, scratch_operands = 0 : i64, tpu.core_type = #tpu.core_type<tc>, window_params = [{transform_indices = @transform_0, window_bounds = array<i64: 8, 8, 256>}, {pipeline_mode = #tpu.pipeline_mode<synchronous>, transform_indices = @transform_1, window_bounds = array<i64: 8, 8, 1>}, {pipeline_mode = #tpu.pipeline_mode<synchronous>, transform_indices = @transform_2, window_bounds = array<i64: 64, 512>}, {pipeline_mode = #tpu.pipeline_mode<synchronous>, transform_indices = @transform_3, window_bounds = array<i64: 8, 8, 1>}, {pipeline_mode = #tpu.pipeline_mode<synchronous>, transform_indices = @transform_4, window_bounds = array<i64: 8, 1>}, {transform_indices = @transform_5, window_bounds = array<i64: 8, 256>}]} {
    %c0_i32 = arith.constant 0 : i32
    %0 = vector.broadcast %c0_i32 : i32 to vector<8x256xi32>
    %c0_i32_0 = arith.constant 0 : i32
    %1 = vector.broadcast %c0_i32_0 : i32 to vector<8x256xi32>
    %c0_i32_1 = arith.constant 0 : i32
    %2 = vector.broadcast %c0_i32_1 : i32 to vector<8x256xi32>
    %c0_i32_2 = arith.constant 0 : i32
    %3 = vector.broadcast %c0_i32_2 : i32 to vector<8x256xi32>
    %c0 = arith.constant 0 : index
    %c0_3 = arith.constant 0 : index
    %c0_4 = arith.constant 0 : index
    %4 = vector.load %arg2[%c0, %c0_3, %c0_4] : memref<8x8x256xf32, #tpu.memory_space<vmem>>, vector<1x8x256xf32>
    %5 = vector.shape_cast %4 : vector<1x8x256xf32> to vector<8x256xf32>
    %c0_5 = arith.constant 0 : index
    %c0_6 = arith.constant 0 : index
    %c0_7 = arith.constant 0 : index
    %6 = vector.load %arg3[%c0_5, %c0_6, %c0_7] : memref<8x8x1xf32, #tpu.memory_space<vmem>>, vector<1x8x1xf32>
    %7 = vector.shape_cast %6 : vector<1x8x1xf32> to vector<8x1xf32>
    %8 = vector.broadcast %7 : vector<8x1xf32> to vector<8x256xf32>
    %9 = arith.cmpf oge, %5, %8 : vector<8x256xf32>
    %c0_8 = arith.constant 0 : index
    %10 = memref.load %arg1[%c0_8] : memref<16xi32, #tpu.memory_space<smem>>
    %c0_i32_9 = arith.constant 0 : i32
    %11 = vector.broadcast %10 : i32 to vector<8x256xi32>
    %12 = vector.broadcast %c0_i32_9 : i32 to vector<8x256xi32>
    %13 = arith.select %9, %11, %12 : vector<8x256xi1>, vector<8x256xi32>
    %14 = arith.xori %0, %13 : vector<8x256xi32>
    %c8 = arith.constant 8 : index
    %15 = memref.load %arg1[%c8] : memref<16xi32, #tpu.memory_space<smem>>
    %c0_i32_10 = arith.constant 0 : i32
    %16 = vector.broadcast %15 : i32 to vector<8x256xi32>
    %17 = vector.broadcast %c0_i32_10 : i32 to vector<8x256xi32>
    %18 = arith.select %9, %16, %17 : vector<8x256xi1>, vector<8x256xi32>
    %19 = arith.xori %2, %18 : vector<8x256xi32>
    %c1 = arith.constant 1 : index
    %c0_11 = arith.constant 0 : index
    %c0_12 = arith.constant 0 : index
    %20 = vector.load %arg2[%c1, %c0_11, %c0_12] : memref<8x8x256xf32, #tpu.memory_space<vmem>>, vector<1x8x256xf32>
    %21 = vector.shape_cast %20 : vector<1x8x256xf32> to vector<8x256xf32>
    %c1_13 = arith.constant 1 : index
    %c0_14 = arith.constant 0 : index
    %c0_15 = arith.constant 0 : index
    %22 = vector.load %arg3[%c1_13, %c0_14, %c0_15] : memref<8x8x1xf32, #tpu.memory_space<vmem>>, vector<1x8x1xf32>
    %23 = vector.shape_cast %22 : vector<1x8x1xf32> to vector<8x1xf32>
    %24 = vector.broadcast %23 : vector<8x1xf32> to vector<8x256xf32>
    %25 = arith.cmpf oge, %21, %24 : vector<8x256xf32>
    %c1_16 = arith.constant 1 : index
    %26 = memref.load %arg1[%c1_16] : memref<16xi32, #tpu.memory_space<smem>>
    %c0_i32_17 = arith.constant 0 : i32
    %27 = vector.broadcast %26 : i32 to vector<8x256xi32>
    %28 = vector.broadcast %c0_i32_17 : i32 to vector<8x256xi32>
    %29 = arith.select %25, %27, %28 : vector<8x256xi1>, vector<8x256xi32>
    %30 = arith.xori %1, %29 : vector<8x256xi32>
    %c9 = arith.constant 9 : index
    %31 = memref.load %arg1[%c9] : memref<16xi32, #tpu.memory_space<smem>>
    %c0_i32_18 = arith.constant 0 : i32
    %32 = vector.broadcast %31 : i32 to vector<8x256xi32>
    %33 = vector.broadcast %c0_i32_18 : i32 to vector<8x256xi32>
    %34 = arith.select %25, %32, %33 : vector<8x256xi1>, vector<8x256xi32>
    %35 = arith.xori %3, %34 : vector<8x256xi32>
    %c2 = arith.constant 2 : index
    %c0_19 = arith.constant 0 : index
    %c0_20 = arith.constant 0 : index
    %36 = vector.load %arg2[%c2, %c0_19, %c0_20] : memref<8x8x256xf32, #tpu.memory_space<vmem>>, vector<1x8x256xf32>
    %37 = vector.shape_cast %36 : vector<1x8x256xf32> to vector<8x256xf32>
    %c2_21 = arith.constant 2 : index
    %c0_22 = arith.constant 0 : index
    %c0_23 = arith.constant 0 : index
    %38 = vector.load %arg3[%c2_21, %c0_22, %c0_23] : memref<8x8x1xf32, #tpu.memory_space<vmem>>, vector<1x8x1xf32>
    %39 = vector.shape_cast %38 : vector<1x8x1xf32> to vector<8x1xf32>
    %40 = vector.broadcast %39 : vector<8x1xf32> to vector<8x256xf32>
    %41 = arith.cmpf oge, %37, %40 : vector<8x256xf32>
    %c2_24 = arith.constant 2 : index
    %42 = memref.load %arg1[%c2_24] : memref<16xi32, #tpu.memory_space<smem>>
    %c0_i32_25 = arith.constant 0 : i32
    %43 = vector.broadcast %42 : i32 to vector<8x256xi32>
    %44 = vector.broadcast %c0_i32_25 : i32 to vector<8x256xi32>
    %45 = arith.select %41, %43, %44 : vector<8x256xi1>, vector<8x256xi32>
    %46 = arith.xori %14, %45 : vector<8x256xi32>
    %c10 = arith.constant 10 : index
    %47 = memref.load %arg1[%c10] : memref<16xi32, #tpu.memory_space<smem>>
    %c0_i32_26 = arith.constant 0 : i32
    %48 = vector.broadcast %47 : i32 to vector<8x256xi32>
    %49 = vector.broadcast %c0_i32_26 : i32 to vector<8x256xi32>
    %50 = arith.select %41, %48, %49 : vector<8x256xi1>, vector<8x256xi32>
    %51 = arith.xori %19, %50 : vector<8x256xi32>
    %c3 = arith.constant 3 : index
    %c0_27 = arith.constant 0 : index
    %c0_28 = arith.constant 0 : index
    %52 = vector.load %arg2[%c3, %c0_27, %c0_28] : memref<8x8x256xf32, #tpu.memory_space<vmem>>, vector<1x8x256xf32>
    %53 = vector.shape_cast %52 : vector<1x8x256xf32> to vector<8x256xf32>
    %c3_29 = arith.constant 3 : index
    %c0_30 = arith.constant 0 : index
    %c0_31 = arith.constant 0 : index
    %54 = vector.load %arg3[%c3_29, %c0_30, %c0_31] : memref<8x8x1xf32, #tpu.memory_space<vmem>>, vector<1x8x1xf32>
    %55 = vector.shape_cast %54 : vector<1x8x1xf32> to vector<8x1xf32>
    %56 = vector.broadcast %55 : vector<8x1xf32> to vector<8x256xf32>
    %57 = arith.cmpf oge, %53, %56 : vector<8x256xf32>
    %c3_32 = arith.constant 3 : index
    %58 = memref.load %arg1[%c3_32] : memref<16xi32, #tpu.memory_space<smem>>
    %c0_i32_33 = arith.constant 0 : i32
    %59 = vector.broadcast %58 : i32 to vector<8x256xi32>
    %60 = vector.broadcast %c0_i32_33 : i32 to vector<8x256xi32>
    %61 = arith.select %57, %59, %60 : vector<8x256xi1>, vector<8x256xi32>
    %62 = arith.xori %30, %61 : vector<8x256xi32>
    %c11 = arith.constant 11 : index
    %63 = memref.load %arg1[%c11] : memref<16xi32, #tpu.memory_space<smem>>
    %c0_i32_34 = arith.constant 0 : i32
    %64 = vector.broadcast %63 : i32 to vector<8x256xi32>
    %65 = vector.broadcast %c0_i32_34 : i32 to vector<8x256xi32>
    %66 = arith.select %57, %64, %65 : vector<8x256xi1>, vector<8x256xi32>
    %67 = arith.xori %35, %66 : vector<8x256xi32>
    %c4 = arith.constant 4 : index
    %c0_35 = arith.constant 0 : index
    %c0_36 = arith.constant 0 : index
    %68 = vector.load %arg2[%c4, %c0_35, %c0_36] : memref<8x8x256xf32, #tpu.memory_space<vmem>>, vector<1x8x256xf32>
    %69 = vector.shape_cast %68 : vector<1x8x256xf32> to vector<8x256xf32>
    %c4_37 = arith.constant 4 : index
    %c0_38 = arith.constant 0 : index
    %c0_39 = arith.constant 0 : index
    %70 = vector.load %arg3[%c4_37, %c0_38, %c0_39] : memref<8x8x1xf32, #tpu.memory_space<vmem>>, vector<1x8x1xf32>
    %71 = vector.shape_cast %70 : vector<1x8x1xf32> to vector<8x1xf32>
    %72 = vector.broadcast %71 : vector<8x1xf32> to vector<8x256xf32>
    %73 = arith.cmpf oge, %69, %72 : vector<8x256xf32>
    %c4_40 = arith.constant 4 : index
    %74 = memref.load %arg1[%c4_40] : memref<16xi32, #tpu.memory_space<smem>>
    %c0_i32_41 = arith.constant 0 : i32
    %75 = vector.broadcast %74 : i32 to vector<8x256xi32>
    %76 = vector.broadcast %c0_i32_41 : i32 to vector<8x256xi32>
    %77 = arith.select %73, %75, %76 : vector<8x256xi1>, vector<8x256xi32>
    %78 = arith.xori %46, %77 : vector<8x256xi32>
    %c12 = arith.constant 12 : index
    %79 = memref.load %arg1[%c12] : memref<16xi32, #tpu.memory_space<smem>>
    %c0_i32_42 = arith.constant 0 : i32
    %80 = vector.broadcast %79 : i32 to vector<8x256xi32>
    %81 = vector.broadcast %c0_i32_42 : i32 to vector<8x256xi32>
    %82 = arith.select %73, %80, %81 : vector<8x256xi1>, vector<8x256xi32>
    %83 = arith.xori %51, %82 : vector<8x256xi32>
    %c5 = arith.constant 5 : index
    %c0_43 = arith.constant 0 : index
    %c0_44 = arith.constant 0 : index
    %84 = vector.load %arg2[%c5, %c0_43, %c0_44] : memref<8x8x256xf32, #tpu.memory_space<vmem>>, vector<1x8x256xf32>
    %85 = vector.shape_cast %84 : vector<1x8x256xf32> to vector<8x256xf32>
    %c5_45 = arith.constant 5 : index
    %c0_46 = arith.constant 0 : index
    %c0_47 = arith.constant 0 : index
    %86 = vector.load %arg3[%c5_45, %c0_46, %c0_47] : memref<8x8x1xf32, #tpu.memory_space<vmem>>, vector<1x8x1xf32>
    %87 = vector.shape_cast %86 : vector<1x8x1xf32> to vector<8x1xf32>
    %88 = vector.broadcast %87 : vector<8x1xf32> to vector<8x256xf32>
    %89 = arith.cmpf oge, %85, %88 : vector<8x256xf32>
    %c5_48 = arith.constant 5 : index
    %90 = memref.load %arg1[%c5_48] : memref<16xi32, #tpu.memory_space<smem>>
    %c0_i32_49 = arith.constant 0 : i32
    %91 = vector.broadcast %90 : i32 to vector<8x256xi32>
    %92 = vector.broadcast %c0_i32_49 : i32 to vector<8x256xi32>
    %93 = arith.select %89, %91, %92 : vector<8x256xi1>, vector<8x256xi32>
    %94 = arith.xori %62, %93 : vector<8x256xi32>
    %c13 = arith.constant 13 : index
    %95 = memref.load %arg1[%c13] : memref<16xi32, #tpu.memory_space<smem>>
    %c0_i32_50 = arith.constant 0 : i32
    %96 = vector.broadcast %95 : i32 to vector<8x256xi32>
    %97 = vector.broadcast %c0_i32_50 : i32 to vector<8x256xi32>
    %98 = arith.select %89, %96, %97 : vector<8x256xi1>, vector<8x256xi32>
    %99 = arith.xori %67, %98 : vector<8x256xi32>
    %c6 = arith.constant 6 : index
    %c0_51 = arith.constant 0 : index
    %c0_52 = arith.constant 0 : index
    %100 = vector.load %arg2[%c6, %c0_51, %c0_52] : memref<8x8x256xf32, #tpu.memory_space<vmem>>, vector<1x8x256xf32>
    %101 = vector.shape_cast %100 : vector<1x8x256xf32> to vector<8x256xf32>
    %c6_53 = arith.constant 6 : index
    %c0_54 = arith.constant 0 : index
    %c0_55 = arith.constant 0 : index
    %102 = vector.load %arg3[%c6_53, %c0_54, %c0_55] : memref<8x8x1xf32, #tpu.memory_space<vmem>>, vector<1x8x1xf32>
    %103 = vector.shape_cast %102 : vector<1x8x1xf32> to vector<8x1xf32>
    %104 = vector.broadcast %103 : vector<8x1xf32> to vector<8x256xf32>
    %105 = arith.cmpf oge, %101, %104 : vector<8x256xf32>
    %c6_56 = arith.constant 6 : index
    %106 = memref.load %arg1[%c6_56] : memref<16xi32, #tpu.memory_space<smem>>
    %c0_i32_57 = arith.constant 0 : i32
    %107 = vector.broadcast %106 : i32 to vector<8x256xi32>
    %108 = vector.broadcast %c0_i32_57 : i32 to vector<8x256xi32>
    %109 = arith.select %105, %107, %108 : vector<8x256xi1>, vector<8x256xi32>
    %110 = arith.xori %78, %109 : vector<8x256xi32>
    %c14 = arith.constant 14 : index
    %111 = memref.load %arg1[%c14] : memref<16xi32, #tpu.memory_space<smem>>
    %c0_i32_58 = arith.constant 0 : i32
    %112 = vector.broadcast %111 : i32 to vector<8x256xi32>
    %113 = vector.broadcast %c0_i32_58 : i32 to vector<8x256xi32>
    %114 = arith.select %105, %112, %113 : vector<8x256xi1>, vector<8x256xi32>
    %115 = arith.xori %83, %114 : vector<8x256xi32>
    %c7 = arith.constant 7 : index
    %c0_59 = arith.constant 0 : index
    %c0_60 = arith.constant 0 : index
    %116 = vector.load %arg2[%c7, %c0_59, %c0_60] : memref<8x8x256xf32, #tpu.memory_space<vmem>>, vector<1x8x256xf32>
    %117 = vector.shape_cast %116 : vector<1x8x256xf32> to vector<8x256xf32>
    %c7_61 = arith.constant 7 : index
    %c0_62 = arith.constant 0 : index
    %c0_63 = arith.constant 0 : index
    %118 = vector.load %arg3[%c7_61, %c0_62, %c0_63] : memref<8x8x1xf32, #tpu.memory_space<vmem>>, vector<1x8x1xf32>
    %119 = vector.shape_cast %118 : vector<1x8x1xf32> to vector<8x1xf32>
    %120 = vector.broadcast %119 : vector<8x1xf32> to vector<8x256xf32>
    %121 = arith.cmpf oge, %117, %120 : vector<8x256xf32>
    %c7_64 = arith.constant 7 : index
    %122 = memref.load %arg1[%c7_64] : memref<16xi32, #tpu.memory_space<smem>>
    %c0_i32_65 = arith.constant 0 : i32
    %123 = vector.broadcast %122 : i32 to vector<8x256xi32>
    %124 = vector.broadcast %c0_i32_65 : i32 to vector<8x256xi32>
    %125 = arith.select %121, %123, %124 : vector<8x256xi1>, vector<8x256xi32>
    %126 = arith.xori %94, %125 : vector<8x256xi32>
    %c15 = arith.constant 15 : index
    %127 = memref.load %arg1[%c15] : memref<16xi32, #tpu.memory_space<smem>>
    %c0_i32_66 = arith.constant 0 : i32
    %128 = vector.broadcast %127 : i32 to vector<8x256xi32>
    %129 = vector.broadcast %c0_i32_66 : i32 to vector<8x256xi32>
    %130 = arith.select %121, %128, %129 : vector<8x256xi1>, vector<8x256xi32>
    %131 = arith.xori %99, %130 : vector<8x256xi32>
    %132 = arith.xori %110, %126 : vector<8x256xi32>
    %133 = arith.xori %115, %131 : vector<8x256xi32>
    %134 = tpu.iota {dimensions = array<i32: 1>} : vector<8x64x256xi32>
    %135 = vector.shape_cast %132 : vector<8x256xi32> to vector<8x1x256xi32>
    %136 = vector.broadcast %135 : vector<8x1x256xi32> to vector<8x64x256xi32>
    %137 = arith.cmpi eq, %136, %134 : vector<8x64x256xi32>
    %138 = arith.extui %137 : vector<8x64x256xi1> to vector<8x64x256xi32>
    %139 = arith.sitofp %138 : vector<8x64x256xi32> to vector<8x64x256xf32>
    %140 = arith.truncf %139 : vector<8x64x256xf32> to vector<8x64x256xbf16>
    %141 = vector.shape_cast %140 : vector<8x64x256xbf16> to vector<512x256xbf16>
    %c0_67 = arith.constant 0 : index
    %c0_68 = arith.constant 0 : index
    %142 = vector.load %arg4[%c0_67, %c0_68] : memref<64x512xbf16, #tpu.memory_space<vmem>>, vector<64x512xbf16>
    %cst = arith.constant dense<0.000000e+00> : vector<64x256xf32>
    %143 = tpu.matmul %142, %141, %cst {dimension_numbers = #tpu.dot_dimension_numbers<[1], [0], [0], [1], [0, 0, 1, 1], [], []>} : vector<64x512xbf16>, vector<512x256xbf16>, vector<64x256xf32> -> vector<64x256xf32>
    %144 = tpu.iota {dimensions = array<i32: 1>} : vector<8x64x256xi32>
    %145 = vector.shape_cast %133 : vector<8x256xi32> to vector<8x1x256xi32>
    %146 = vector.broadcast %145 : vector<8x1x256xi32> to vector<8x64x256xi32>
    %147 = arith.cmpi eq, %146, %144 : vector<8x64x256xi32>
    %148 = arith.extui %147 : vector<8x64x256xi1> to vector<8x64x256xi32>
    %149 = arith.sitofp %148 : vector<8x64x256xi32> to vector<8x64x256xf32>
    %150 = arith.truncf %149 : vector<8x64x256xf32> to vector<8x64x256xbf16>
    %151 = vector.shape_cast %150 : vector<8x64x256xbf16> to vector<512x256xbf16>
    %c0_69 = arith.constant 0 : index
    %c0_70 = arith.constant 0 : index
    %152 = vector.load %arg4[%c0_69, %c0_70] : memref<64x512xbf16, #tpu.memory_space<vmem>>, vector<64x512xbf16>
    %cst_71 = arith.constant dense<0.000000e+00> : vector<64x256xf32>
    %153 = tpu.matmul %152, %151, %cst_71 {dimension_numbers = #tpu.dot_dimension_numbers<[1], [0], [0], [1], [0, 0, 1, 1], [], []>} : vector<64x512xbf16>, vector<512x256xbf16>, vector<64x256xf32> -> vector<64x256xf32>
    %154 = arith.addf %143, %153 : vector<64x256xf32>
    %cst_72 = arith.constant 1.500000e+00 : f32
    %155 = vector.broadcast %cst_72 : f32 to vector<64x256xf32>
    %156 = arith.cmpf ogt, %154, %155 : vector<64x256xf32>
    %157 = arith.extui %156 : vector<64x256xi1> to vector<64x256xi32>
    %158 = arith.sitofp %157 : vector<64x256xi32> to vector<64x256xf32>
    %159 = vector.shape_cast %158 : vector<64x256xf32> to vector<8x8x256xf32>
    %c0_73 = arith.constant 0 : index
    %c0_74 = arith.constant 0 : index
    %c0_75 = arith.constant 0 : index
    %160 = vector.load %arg5[%c0_73, %c0_74, %c0_75] : memref<8x8x1xf32, #tpu.memory_space<vmem>>, vector<8x8x1xf32>
    %161 = vector.broadcast %160 : vector<8x8x1xf32> to vector<8x8x256xf32>
    %162 = arith.mulf %159, %161 : vector<8x8x256xf32>
    %cst_76 = arith.constant dense<0.000000e+00> : vector<8x256xf32>
    %163 = vector.multi_reduction <add>, %162, %cst_76 [0] : vector<8x8x256xf32> to vector<8x256xf32>
    %c0_77 = arith.constant 0 : index
    %c0_78 = arith.constant 0 : index
    %164 = vector.load %arg6[%c0_77, %c0_78] : memref<8x1xf32, #tpu.memory_space<vmem>>, vector<8x1xf32>
    %165 = vector.broadcast %164 : vector<8x1xf32> to vector<8x256xf32>
    %166 = arith.addf %163, %165 : vector<8x256xf32>
    %c0_79 = arith.constant 0 : index
    %c0_80 = arith.constant 0 : index
    %167 = vector.load %arg7[%c0_79, %c0_80] : memref<8x256xf32, #tpu.memory_space<vmem>>, vector<8x256xf32>
    tpu.vector_store %arg7[%c0_79, %c0_80], %166 {strides = array<i32>} : memref<8x256xf32, #tpu.memory_space<vmem>>, vector<8x256xf32>,
    return
  }
  func.func @transform_0(%arg0: i32, %arg1: memref<16xi32, #tpu.memory_space<smem>>) -> (i32, i32, i32) {
    %c0_i32 = arith.constant 0 : i32
    %c0_i32_0 = arith.constant 0 : i32
    %c0_i32_1 = arith.constant 0 : i32
    return %c0_i32, %c0_i32_0, %arg0 : i32, i32, i32
  }
  func.func @transform_1(%arg0: i32, %arg1: memref<16xi32, #tpu.memory_space<smem>>) -> (i32, i32, i32) {
    %c0_i32 = arith.constant 0 : i32
    %c0_i32_0 = arith.constant 0 : i32
    %c0_i32_1 = arith.constant 0 : i32
    %c0_i32_2 = arith.constant 0 : i32
    return %c0_i32, %c0_i32_0, %c0_i32_1 : i32, i32, i32
  }
  func.func @transform_2(%arg0: i32, %arg1: memref<16xi32, #tpu.memory_space<smem>>) -> (i32, i32) {
    %c0_i32 = arith.constant 0 : i32
    %c0_i32_0 = arith.constant 0 : i32
    %c0_i32_1 = arith.constant 0 : i32
    return %c0_i32, %c0_i32_0 : i32, i32
  }
  func.func @transform_3(%arg0: i32, %arg1: memref<16xi32, #tpu.memory_space<smem>>) -> (i32, i32, i32) {
    %c0_i32 = arith.constant 0 : i32
    %c0_i32_0 = arith.constant 0 : i32
    %c0_i32_1 = arith.constant 0 : i32
    %c0_i32_2 = arith.constant 0 : i32
    return %c0_i32, %c0_i32_0, %c0_i32_1 : i32, i32, i32
  }
  func.func @transform_4(%arg0: i32, %arg1: memref<16xi32, #tpu.memory_space<smem>>) -> (i32, i32) {
    %c0_i32 = arith.constant 0 : i32
    %c0_i32_0 = arith.constant 0 : i32
    %c0_i32_1 = arith.constant 0 : i32
    return %c0_i32, %c0_i32_0 : i32, i32
  }
  func.func @transform_5(%arg0: i32, %arg1: memref<16xi32, #tpu.memory_space<smem>>) -> (i32, i32) {
    %c0_i32 = arith.constant 0 : i32
    %c0_i32_0 = arith.constant 0 : i32
    return %c0_i32, %arg0 : i32, i32
  }
}

</mosaic_0001>

<llo_original>
// kernel: tpu_custom_call.1
$region0: #{tpu_custom_call.1}
  #allocation0 [shape = 'u32[]', space=smem, size = 0x4, offset = 0x4, fixed_abs, tag = 'smem constant byte address 0x4 - core index']
  #allocation1 [shape = 'u32[144,128]{1,0:T(1,128)}', space=vmem, size = 0x12000, scoped, tag = 'internal scratch']
  #allocation2 [shape = 's32[1]{0}', space=sflag, size = 0x4, scoped, tag = 'scoped memory for tpu_custom_call.1']
  #allocation3 [shape = 'u8[512]{0}', space=smem, size = 0x200, scoped, tag = 'prefetched SMEM operand 0']
  %s0 = inlined_call_operand.vmem [shape: s32[16], index: 0, kind: input, shape index: {}]
  %s1 = inlined_call_operand.vmem [shape: f32[8,8,256], index: 1, kind: input, shape index: {}]
  %s2 = inlined_call_operand.vmem [shape: f32[8,8,1], index: 2, kind: input, shape index: {}]
  %s3 = inlined_call_operand.hbm [shape: bf16[64,512], index: 3, kind: input, shape index: {}]
  %s4 = inlined_call_operand.vmem [shape: f32[8,8,1], index: 4, kind: input, shape index: {}]
  %s5 = inlined_call_operand.vmem [shape: f32[8,1], index: 5, kind: input, shape index: {}]
  %s6 = inlined_call_operand.hbm [shape: f32[8,256], index: 6, kind: output, shape index: {}]
  %s7 = sld [smem:[#allocation0]]
  $region34: #{tpu_custom_call.1} parent=0
    _
  %s9 = ssub.s32 1, %s7
  %s10 = scalar_select 0, %s9, %s7
  %s11 = sshll.u32 %s0, 4
  %s12 = int_to_ptr.vmem [resolvable:$true] %s11
  %14 = dma.vmem_to_smem %s12, 16, [#allocation3], [#allocation2]
  %15 = dma.done [#allocation2], 16
  %16 = sfence
  $region1: #{tpu_custom_call.1} parent=0
    #allocation4 [shape = 'u8[65536]{0}', space=vmem, size = 0x10000, scoped, tag = 'input window, operand 3, single buffered']
    #allocation5 [shape = 's32[1]{0}', space=sflag, size = 0x4, scoped, tag = 'scoped memory for tpu_custom_call.1']
    #allocation6 [shape = 's32[1]{0}', space=sflag, size = 0x4, scoped, tag = 'scoped memory for tpu_custom_call.1']
    #allocation7 [shape = 'u8[8192]{0}', space=vmem, size = 0x2000, scoped, tag = 'output window, operand 0, single buffered']
    %17 = vsyncpa [#allocation5], 0
    %18 = vsyncpa [#allocation6], 0
    // Predicated region
    $region2: #{tpu_custom_call.1} parent=1 // pred_check
      _
    $region3: #{tpu_custom_call.1} parent=1 // pred_check_branch
      %20 = sbr.rel (0) target = $region5
    $region4: #{tpu_custom_call.1} parent=1 // pred_region
      _
    $region5: #{tpu_custom_call.1} parent=1 // pred_fallthru
      _
    // Predicated region
    $region6: #{tpu_custom_call.1} parent=1 // pred_check
      _
    $region7: #{tpu_custom_call.1} parent=1 // pred_check_branch
      %22 = sbr.rel (0) target = $region9
    $region8: #{tpu_custom_call.1} parent=1 // pred_region
      _
    $region9: #{tpu_custom_call.1} parent=1 // pred_fallthru
      _
    // Predicated region
    $region10: #{tpu_custom_call.1} parent=1 // pred_check
      _
    $region11: #{tpu_custom_call.1} parent=1 // pred_check_branch
      %24 = sbr.rel (0) target = $region13
    $region12: #{tpu_custom_call.1} parent=1 // pred_region
      %s26 = ssub.s32 2048, 2048
      %27 = vsyncadd [#allocation5], %s26
      %s28 = sshll.u32 [#allocation4], 4
      %s29 = int_to_ptr.vmem [resolvable:$true] %s28
      %34 = dma.hbm_to_vmem [thread:$0]  %s3, 2048, %s29, [#allocation5], 256, 256, 16
    $region13: #{tpu_custom_call.1} parent=1 // pred_fallthru
      _
    // Predicated region
    $region14: #{tpu_custom_call.1} parent=1 // pred_check
      _
    $region15: #{tpu_custom_call.1} parent=1 // pred_check_branch
      %36 = sbr.rel (0) target = $region17
    $region16: #{tpu_custom_call.1} parent=1 // pred_region
      _
    $region17: #{tpu_custom_call.1} parent=1 // pred_fallthru
      _
    // Predicated region
    $region18: #{tpu_custom_call.1} parent=1 // pred_check
      _
    $region19: #{tpu_custom_call.1} parent=1 // pred_check_branch
      %38 = sbr.rel (0) target = $region21
    $region20: #{tpu_custom_call.1} parent=1 // pred_region
      _
    $region21: #{tpu_custom_call.1} parent=1 // pred_fallthru
      _
    // Predicated region
    $region22: #{tpu_custom_call.1} parent=1 // pred_check
      _
    $region23: #{tpu_custom_call.1} parent=1 // pred_check_branch
      %40 = sbr.rel (0) target = $region25
    $region24: #{tpu_custom_call.1} parent=1 // pred_region
      %41 = dma.done [#allocation5], 2048
    $region25: #{tpu_custom_call.1} parent=1 // pred_fallthru
      _
    %v42 = vld [vmem:[%s1] sm:$0xff]
    %v43 = vld [vmem:[%s1 + $0x8] sm:$0xff]
    %v44 = vld [vmem:[%s2] sm:$0xff]
    %46 = vset.pattern.permute.xlu0 0
    %47 = vperm.xlu0 %46, %v44
    %v48 = vpop.permute.xlu0 %47
    %vm50 = vcmp.ge.f32.partialorder %v42, %v48
    %vm51 = vcmp.ge.f32.partialorder %v43, %v48
    %s52 = sld [smem:[#allocation3]]
    %v53 = vstv %s52
    %v54 = vsel %vm50, %v53, 0
    %v55 = vsel %vm51, %v53, 0
    %s56 = sld [smem:[#allocation3 + $0x8]]
    %v57 = vstv %s56
    %v58 = vsel %vm50, %v57, 0
    %v59 = vsel %vm51, %v57, 0
    %s60 = scalar_lea.vmem %s1, 16
    %v61 = vld [vmem:[%s60] sm:$0xff]
    %v62 = vld [vmem:[%s60 + $0x8] sm:$0xff]
    %s63 = scalar_lea.vmem %s2, 8
    %v64 = vld [vmem:[%s63] sm:$0xff]
    %66 = vset.pattern.permute.xlu0 0
    %67 = vperm.xlu0 %66, %v64
    %v68 = vpop.permute.xlu0 %67
    %vm70 = vcmp.ge.f32.partialorder %v61, %v68
    %vm71 = vcmp.ge.f32.partialorder %v62, %v68
    %s72 = sld [smem:[#allocation3 + $0x1]]
    %v73 = vstv %s72
    %v74 = vsel %vm70, %v73, 0
    %v75 = vsel %vm71, %v73, 0
    %s76 = sld [smem:[#allocation3 + $0x9]]
    %v77 = vstv %s76
    %v78 = vsel %vm70, %v77, 0
    %v79 = vsel %vm71, %v77, 0
    %s80 = scalar_lea.vmem %s1, 32
    %v81 = vld [vmem:[%s80] sm:$0xff]
    %v82 = vld [vmem:[%s80 + $0x8] sm:$0xff]
    %s83 = scalar_lea.vmem %s2, 16
    %v84 = vld [vmem:[%s83] sm:$0xff]
    %86 = vset.pattern.permute.xlu0 0
    %87 = vperm.xlu0 %86, %v84
    %v88 = vpop.permute.xlu0 %87
    %vm90 = vcmp.ge.f32.partialorder %v81, %v88
    %vm91 = vcmp.ge.f32.partialorder %v82, %v88
    %s92 = sld [smem:[#allocation3 + $0x2]]
    %v93 = vstv %s92
    %v94 = vsel %vm90, %v93, 0
    %v95 = vsel %vm91, %v93, 0
    %v96 = vxor.u32 %v54, %v94
    %v97 = vxor.u32 %v55, %v95
    %s98 = sld [smem:[#allocation3 + $0xa]]
    %v99 = vstv %s98
    %v100 = vsel %vm90, %v99, 0
    %v101 = vsel %vm91, %v99, 0
    %v102 = vxor.u32 %v58, %v100
    %v103 = vxor.u32 %v59, %v101
    %s104 = scalar_lea.vmem %s1, 48
    %v105 = vld [vmem:[%s104] sm:$0xff]
    %v106 = vld [vmem:[%s104 + $0x8] sm:$0xff]
    %s107 = scalar_lea.vmem %s2, 24
    %v108 = vld [vmem:[%s107] sm:$0xff]
    %110 = vset.pattern.permute.xlu0 0
    %111 = vperm.xlu0 %110, %v108
    %v112 = vpop.permute.xlu0 %111
    %vm114 = vcmp.ge.f32.partialorder %v105, %v112
    %vm115 = vcmp.ge.f32.partialorder %v106, %v112
    %s116 = sld [smem:[#allocation3 + $0x3]]
    %v117 = vstv %s116
    %v118 = vsel %vm114, %v117, 0
    %v119 = vsel %vm115, %v117, 0
    %v120 = vxor.u32 %v74, %v118
    %v121 = vxor.u32 %v75, %v119
    %s122 = sld [smem:[#allocation3 + $0xb]]
    %v123 = vstv %s122
    %v124 = vsel %vm114, %v123, 0
    %v125 = vsel %vm115, %v123, 0
    %v126 = vxor.u32 %v78, %v124
    %v127 = vxor.u32 %v79, %v125
    %s128 = scalar_lea.vmem %s1, 64
    %v129 = vld [vmem:[%s128] sm:$0xff]
    %v130 = vld [vmem:[%s128 + $0x8] sm:$0xff]
    %s131 = scalar_lea.vmem %s2, 32
    %v132 = vld [vmem:[%s131] sm:$0xff]
    %134 = vset.pattern.permute.xlu0 0
    %135 = vperm.xlu0 %134, %v132
    %v136 = vpop.permute.xlu0 %135
    %vm138 = vcmp.ge.f32.partialorder %v129, %v136
    %vm139 = vcmp.ge.f32.partialorder %v130, %v136
    %s140 = sld [smem:[#allocation3 + $0x4]]
    %v141 = vstv %s140
    %v142 = vsel %vm138, %v141, 0
    %v143 = vsel %vm139, %v141, 0
    %v144 = vxor.u32 %v96, %v142
    %v145 = vxor.u32 %v97, %v143
    %s146 = sld [smem:[#allocation3 + $0xc]]
    %v147 = vstv %s146
    %v148 = vsel %vm138, %v147, 0
    %v149 = vsel %vm139, %v147, 0
    %v150 = vxor.u32 %v102, %v148
    %v151 = vxor.u32 %v103, %v149
    %s152 = scalar_lea.vmem %s1, 80
    %v153 = vld [vmem:[%s152] sm:$0xff]
    %v154 = vld [vmem:[%s152 + $0x8] sm:$0xff]
    %s155 = scalar_lea.vmem %s2, 40
    %v156 = vld [vmem:[%s155] sm:$0xff]
    %158 = vset.pattern.permute.xlu0 0
    %159 = vperm.xlu0 %158, %v156
    %v160 = vpop.permute.xlu0 %159
    %vm162 = vcmp.ge.f32.partialorder %v153, %v160
    %vm163 = vcmp.ge.f32.partialorder %v154, %v160
    %s164 = sld [smem:[#allocation3 + $0x5]]
    %v165 = vstv %s164
    %v166 = vsel %vm162, %v165, 0
    %v167 = vsel %vm163, %v165, 0
    %v168 = vxor.u32 %v120, %v166
    %v169 = vxor.u32 %v121, %v167
    %s170 = sld [smem:[#allocation3 + $0xd]]
    %v171 = vstv %s170
    %v172 = vsel %vm162, %v171, 0
    %v173 = vsel %vm163, %v171, 0
    %v174 = vxor.u32 %v126, %v172
    %v175 = vxor.u32 %v127, %v173
    %s176 = scalar_lea.vmem %s1, 96
    %v177 = vld [vmem:[%s176] sm:$0xff]
    %v178 = vld [vmem:[%s176 + $0x8] sm:$0xff]
    %s179 = scalar_lea.vmem %s2, 48
    %v180 = vld [vmem:[%s179] sm:$0xff]
    %182 = vset.pattern.permute.xlu0 0
    %183 = vperm.xlu0 %182, %v180
    %v184 = vpop.permute.xlu0 %183
    %vm186 = vcmp.ge.f32.partialorder %v177, %v184
    %vm187 = vcmp.ge.f32.partialorder %v178, %v184
    %s188 = sld [smem:[#allocation3 + $0x6]]
    %v189 = vstv %s188
    %v190 = vsel %vm186, %v189, 0
    %v191 = vsel %vm187, %v189, 0
    %v192 = vxor.u32 %v144, %v190
    %v193 = vxor.u32 %v145, %v191
    %s194 = sld [smem:[#allocation3 + $0xe]]
    %v195 = vstv %s194
    %v196 = vsel %vm186, %v195, 0
    %v197 = vsel %vm187, %v195, 0
    %v198 = vxor.u32 %v150, %v196
    %v199 = vxor.u32 %v151, %v197
    %s200 = scalar_lea.vmem %s1, 112
    %v201 = vld [vmem:[%s200] sm:$0xff]
    %v202 = vld [vmem:[%s200 + $0x8] sm:$0xff]
    %s203 = scalar_lea.vmem %s2, 56
    %v204 = vld [vmem:[%s203] sm:$0xff]
    %206 = vset.pattern.permute.xlu0 0
    %207 = vperm.xlu0 %206, %v204
    %v208 = vpop.permute.xlu0 %207
    %vm210 = vcmp.ge.f32.partialorder %v201, %v208
    %vm211 = vcmp.ge.f32.partialorder %v202, %v208
    %s212 = sld [smem:[#allocation3 + $0x7]]
    %v213 = vstv %s212
    %v214 = vsel %vm210, %v213, 0
    %v215 = vsel %vm211, %v213, 0
    %v216 = vxor.u32 %v168, %v214
    %v217 = vxor.u32 %v169, %v215
    %s218 = sld [smem:[#allocation3 + $0xf]]
    %v219 = vstv %s218
    %v220 = vsel %vm210, %v219, 0
    %v221 = vsel %vm211, %v219, 0
    %v222 = vxor.u32 %v174, %v220
    %v223 = vxor.u32 %v175, %v221
    %v224 = vxor.u32 %v192, %v216
    %v225 = vxor.u32 %v193, %v217
    %v226 = vxor.u32 %v198, %v222
    %v227 = vxor.u32 %v199, %v223
    %v228 = vlaneseq
    %v229 = vshrl.u32 %v228, 7
    %v230 = vadd.s32 %v229, 8
    %v231 = vadd.s32 %v229, 16
    %v232 = vadd.s32 %v229, 24
    %v233 = vadd.s32 %v229, 32
    %v234 = vadd.s32 %v229, 40
    %v235 = vadd.s32 %v229, 48
    %v236 = vadd.s32 %v229, 56
    %v237 = vcombine.low %v224, %v225
    %v238 = vcombine.high %v224, %v225
    %v240 = vunpack.c.l.s4 1966171168
    %v241 = vunpack.c.0.s8 %v240
    %v242 = vlaneseq
    %v243 = vshrl.u32 %v242, 7
    %v244 = vsub.s32 %v241, %v243
    %v245 = vrot.slane %v237, %v244
    %v247 = vunpack.c.l.s4 1966171168
    %v248 = vunpack.c.0.s8 %v247
    %v249 = vlaneseq
    %v250 = vshrl.u32 %v249, 7
    %v251 = vsub.s32 %v248, %v250
    %v252 = vrot.slane %v238, %v251
    %v253 = vcombine.high %v245, %v245
    %v254 = vcombine.high %v252, %v252
    %v256 = vunpack.c.l.s4 1966171168
    %v257 = vunpack.c.0.s8 %v256
    %v258 = vlaneseq
    %v259 = vshrl.u32 %v258, 7
    %v260 = vsub.s32 %v257, %v259
    %v261 = vrot.slane %v245, %v260
    %v263 = vunpack.c.l.s4 1966171168
    %v264 = vunpack.c.0.s8 %v263
    %v265 = vlaneseq
    %v266 = vshrl.u32 %v265, 7
    %v267 = vsub.s32 %v264, %v266
    %v268 = vrot.slane %v252, %v267
    %v270 = vunpack.c.l.s4 1966171168
    %v271 = vunpack.c.0.s8 %v270
    %v272 = vlaneseq
    %v273 = vshrl.u32 %v272, 7
    %v274 = vsub.s32 %v271, %v273
    %v275 = vrot.slane %v253, %v274
    %v277 = vunpack.c.l.s4 1966171168
    %v278 = vunpack.c.0.s8 %v277
    %v279 = vlaneseq
    %v280 = vshrl.u32 %v279, 7
    %v281 = vsub.s32 %v278, %v280
    %v282 = vrot.slane %v254, %v281
    %v283 = vcombine.high %v261, %v261
    %v284 = vcombine.high %v268, %v268
    %v285 = vcombine.high %v275, %v275
    %v286 = vcombine.high %v282, %v282
    %v287 = vlaneseq
    %v288 = vshrl.u32 %v287, 7
    %v289 = vsub.s32 0, %v288
    %v290 = vrot.slane %v261, %v289
    %v291 = vlaneseq
    %v292 = vshrl.u32 %v291, 7
    %v293 = vsub.s32 1, %v292
    %v294 = vrot.slane %v261, %v293
    %v295 = vlaneseq
    %v296 = vshrl.u32 %v295, 7
    %v297 = vsub.s32 0, %v296
    %v298 = vrot.slane %v275, %v297
    %v299 = vlaneseq
    %v300 = vshrl.u32 %v299, 7
    %v301 = vsub.s32 1, %v300
    %v302 = vrot.slane %v275, %v301
    %v303 = vlaneseq
    %v304 = vshrl.u32 %v303, 7
    %v305 = vsub.s32 0, %v304
    %v306 = vrot.slane %v283, %v305
    %v307 = vlaneseq
    %v308 = vshrl.u32 %v307, 7
    %v309 = vsub.s32 1, %v308
    %v310 = vrot.slane %v283, %v309
    %v311 = vlaneseq
    %v312 = vshrl.u32 %v311, 7
    %v313 = vsub.s32 0, %v312
    %v314 = vrot.slane %v285, %v313
    %v315 = vlaneseq
    %v316 = vshrl.u32 %v315, 7
    %v317 = vsub.s32 1, %v316
    %v318 = vrot.slane %v285, %v317
    %v319 = vlaneseq
    %v320 = vshrl.u32 %v319, 7
    %v321 = vsub.s32 0, %v320
    %v322 = vrot.slane %v268, %v321
    %v323 = vlaneseq
    %v324 = vshrl.u32 %v323, 7
    %v325 = vsub.s32 1, %v324
    %v326 = vrot.slane %v268, %v325
    %v327 = vlaneseq
    %v328 = vshrl.u32 %v327, 7
    %v329 = vsub.s32 0, %v328
    %v330 = vrot.slane %v282, %v329
    %v331 = vlaneseq
    %v332 = vshrl.u32 %v331, 7
    %v333 = vsub.s32 1, %v332
    %v334 = vrot.slane %v282, %v333
    %v335 = vlaneseq
    %v336 = vshrl.u32 %v335, 7
    %v337 = vsub.s32 0, %v336
    %v338 = vrot.slane %v284, %v337
    %v339 = vlaneseq
    %v340 = vshrl.u32 %v339, 7
    %v341 = vsub.s32 1, %v340
    %v342 = vrot.slane %v284, %v341
    %v343 = vlaneseq
    %v344 = vshrl.u32 %v343, 7
    %v345 = vsub.s32 0, %v344
    %v346 = vrot.slane %v286, %v345
    %v347 = vlaneseq
    %v348 = vshrl.u32 %v347, 7
    %v349 = vsub.s32 1, %v348
    %v350 = vrot.slane %v286, %v349
    %vm351 = vcmp.eq.s32.totalorder %v290, %v229
    %vm352 = vcmp.eq.s32.totalorder %v294, %v229
    %vm353 = vcmp.eq.s32.totalorder %v290, %v230
    %vm354 = vcmp.eq.s32.totalorder %v294, %v230
    %vm355 = vcmp.eq.s32.totalorder %v290, %v231
    %vm356 = vcmp.eq.s32.totalorder %v294, %v231
    %vm357 = vcmp.eq.s32.totalorder %v290, %v232
    %vm358 = vcmp.eq.s32.totalorder %v294, %v232
    %vm359 = vcmp.eq.s32.totalorder %v290, %v233
    %vm360 = vcmp.eq.s32.totalorder %v294, %v233
    %vm361 = vcmp.eq.s32.totalorder %v290, %v234
    %vm362 = vcmp.eq.s32.totalorder %v294, %v234
    %vm363 = vcmp.eq.s32.totalorder %v290, %v235
    %vm364 = vcmp.eq.s32.totalorder %v294, %v235
    %vm365 = vcmp.eq.s32.totalorder %v290, %v236
    %vm366 = vcmp.eq.s32.totalorder %v294, %v236
    %vm367 = vcmp.eq.s32.totalorder %v298, %v229
    %vm368 = vcmp.eq.s32.totalorder %v302, %v229
    %vm369 = vcmp.eq.s32.totalorder %v298, %v230
    %vm370 = vcmp.eq.s32.totalorder %v302, %v230
    %vm371 = vcmp.eq.s32.totalorder %v298, %v231
    %vm372 = vcmp.eq.s32.totalorder %v302, %v231
    %vm373 = vcmp.eq.s32.totalorder %v298, %v232
    %vm374 = vcmp.eq.s32.totalorder %v302, %v232
    %vm375 = vcmp.eq.s32.totalorder %v298, %v233
    %vm376 = vcmp.eq.s32.totalorder %v302, %v233
    %vm377 = vcmp.eq.s32.totalorder %v298, %v234
    %vm378 = vcmp.eq.s32.totalorder %v302, %v234
    %vm379 = vcmp.eq.s32.totalorder %v298, %v235
    %vm380 = vcmp.eq.s32.totalorder %v302, %v235
    %vm381 = vcmp.eq.s32.totalorder %v298, %v236
    %vm382 = vcmp.eq.s32.totalorder %v302, %v236
    %vm383 = vcmp.eq.s32.totalorder %v306, %v229
    %vm384 = vcmp.eq.s32.totalorder %v310, %v229
    %vm385 = vcmp.eq.s32.totalorder %v306, %v230
    %vm386 = vcmp.eq.s32.totalorder %v310, %v230
    %vm387 = vcmp.eq.s32.totalorder %v306, %v231
    %vm388 = vcmp.eq.s32.totalorder %v310, %v231
    %vm389 = vcmp.eq.s32.totalorder %v306, %v232
    %vm390 = vcmp.eq.s32.totalorder %v310, %v232
    %vm391 = vcmp.eq.s32.totalorder %v306, %v233
    %vm392 = vcmp.eq.s32.totalorder %v310, %v233
    %vm393 = vcmp.eq.s32.totalorder %v306, %v234
    %vm394 = vcmp.eq.s32.totalorder %v310, %v234
    %vm395 = vcmp.eq.s32.totalorder %v306, %v235
    %vm396 = vcmp.eq.s32.totalorder %v310, %v235
    %vm397 = vcmp.eq.s32.totalorder %v306, %v236
    %vm398 = vcmp.eq.s32.totalorder %v310, %v236
    %vm399 = vcmp.eq.s32.totalorder %v314, %v229
    %vm400 = vcmp.eq.s32.totalorder %v318, %v229
    %vm401 = vcmp.eq.s32.totalorder %v314, %v230
    %vm402 = vcmp.eq.s32.totalorder %v318, %v230
    %vm403 = vcmp.eq.s32.totalorder %v314, %v231
    %vm404 = vcmp.eq.s32.totalorder %v318, %v231
    %vm405 = vcmp.eq.s32.totalorder %v314, %v232
    %vm406 = vcmp.eq.s32.totalorder %v318, %v232
    %vm407 = vcmp.eq.s32.totalorder %v314, %v233
    %vm408 = vcmp.eq.s32.totalorder %v318, %v233
    %vm409 = vcmp.eq.s32.totalorder %v314, %v234
    %vm410 = vcmp.eq.s32.totalorder %v318, %v234
    %vm411 = vcmp.eq.s32.totalorder %v314, %v235
    %vm412 = vcmp.eq.s32.totalorder %v318, %v235
    %vm413 = vcmp.eq.s32.totalorder %v314, %v236
    %vm414 = vcmp.eq.s32.totalorder %v318, %v236
    %vm415 = vcmp.eq.s32.totalorder %v322, %v229
    %vm416 = vcmp.eq.s32.totalorder %v326, %v229
    %vm417 = vcmp.eq.s32.totalorder %v322, %v230
    %vm418 = vcmp.eq.s32.totalorder %v326, %v230
    %vm419 = vcmp.eq.s32.totalorder %v322, %v231
    %vm420 = vcmp.eq.s32.totalorder %v326, %v231
    %vm421 = vcmp.eq.s32.totalorder %v322, %v232
    %vm422 = vcmp.eq.s32.totalorder %v326, %v232
    %vm423 = vcmp.eq.s32.totalorder %v322, %v233
    %vm424 = vcmp.eq.s32.totalorder %v326, %v233
    %vm425 = vcmp.eq.s32.totalorder %v322, %v234
    %vm426 = vcmp.eq.s32.totalorder %v326, %v234
    %vm427 = vcmp.eq.s32.totalorder %v322, %v235
    %vm428 = vcmp.eq.s32.totalorder %v326, %v235
    %vm429 = vcmp.eq.s32.totalorder %v322, %v236
    %vm430 = vcmp.eq.s32.totalorder %v326, %v236
    %vm431 = vcmp.eq.s32.totalorder %v330, %v229
    %vm432 = vcmp.eq.s32.totalorder %v334, %v229
    %vm433 = vcmp.eq.s32.totalorder %v330, %v230
    %vm434 = vcmp.eq.s32.totalorder %v334, %v230
    %vm435 = vcmp.eq.s32.totalorder %v330, %v231
    %vm436 = vcmp.eq.s32.totalorder %v334, %v231
    %vm437 = vcmp.eq.s32.totalorder %v330, %v232
    %vm438 = vcmp.eq.s32.totalorder %v334, %v232
    %vm439 = vcmp.eq.s32.totalorder %v330, %v233
    %vm440 = vcmp.eq.s32.totalorder %v334, %v233
    %vm441 = vcmp.eq.s32.totalorder %v330, %v234
    %vm442 = vcmp.eq.s32.totalorder %v334, %v234
    %vm443 = vcmp.eq.s32.totalorder %v330, %v235
    %vm444 = vcmp.eq.s32.totalorder %v334, %v235
    %vm445 = vcmp.eq.s32.totalorder %v330, %v236
    %vm446 = vcmp.eq.s32.totalorder %v334, %v236
    %vm447 = vcmp.eq.s32.totalorder %v338, %v229
    %vm448 = vcmp.eq.s32.totalorder %v342, %v229
    %vm449 = vcmp.eq.s32.totalorder %v338, %v230
    %vm450 = vcmp.eq.s32.totalorder %v342, %v230
    %vm451 = vcmp.eq.s32.totalorder %v338, %v231
    %vm452 = vcmp.eq.s32.totalorder %v342, %v231
    %vm453 = vcmp.eq.s32.totalorder %v338, %v232
    %vm454 = vcmp.eq.s32.totalorder %v342, %v232
    %vm455 = vcmp.eq.s32.totalorder %v338, %v233
    %vm456 = vcmp.eq.s32.totalorder %v342, %v233
    %vm457 = vcmp.eq.s32.totalorder %v338, %v234
    %vm458 = vcmp.eq.s32.totalorder %v342, %v234
    %vm459 = vcmp.eq.s32.totalorder %v338, %v235
    %vm460 = vcmp.eq.s32.totalorder %v342, %v235
    %vm461 = vcmp.eq.s32.totalorder %v338, %v236
    %vm462 = vcmp.eq.s32.totalorder %v342, %v236
    %vm463 = vcmp.eq.s32.totalorder %v346, %v229
    %vm464 = vcmp.eq.s32.totalorder %v350, %v229
    %vm465 = vcmp.eq.s32.totalorder %v346, %v230
    %vm466 = vcmp.eq.s32.totalorder %v350, %v230
    %vm467 = vcmp.eq.s32.totalorder %v346, %v231
    %vm468 = vcmp.eq.s32.totalorder %v350, %v231
    %vm469 = vcmp.eq.s32.totalorder %v346, %v232
    %vm470 = vcmp.eq.s32.totalorder %v350, %v232
    %vm471 = vcmp.eq.s32.totalorder %v346, %v233
    %vm472 = vcmp.eq.s32.totalorder %v350, %v233
    %vm473 = vcmp.eq.s32.totalorder %v346, %v234
    %vm474 = vcmp.eq.s32.totalorder %v350, %v234
    %vm475 = vcmp.eq.s32.totalorder %v346, %v235
    %vm476 = vcmp.eq.s32.totalorder %v350, %v235
    %vm477 = vcmp.eq.s32.totalorder %v346, %v236
    %vm478 = vcmp.eq.s32.totalorder %v350, %v236
    %v479 = vsel %vm351, 1, 0
    %v480 = vsel %vm352, 1, 0
    %v481 = vsel %vm353, 1, 0
    %v482 = vsel %vm354, 1, 0
    %v483 = vsel %vm355, 1, 0
    %v484 = vsel %vm356, 1, 0
    %v485 = vsel %vm357, 1, 0
    %v486 = vsel %vm358, 1, 0
    %v487 = vsel %vm359, 1, 0
    %v488 = vsel %vm360, 1, 0
    %v489 = vsel %vm361, 1, 0
    %v490 = vsel %vm362, 1, 0
    %v491 = vsel %vm363, 1, 0
    %v492 = vsel %vm364, 1, 0
    %v493 = vsel %vm365, 1, 0
    %v494 = vsel %vm366, 1, 0
    %v495 = vsel %vm367, 1, 0
    %v496 = vsel %vm368, 1, 0
    %v497 = vsel %vm369, 1, 0
    %v498 = vsel %vm370, 1, 0
    %v499 = vsel %vm371, 1, 0
    %v500 = vsel %vm372, 1, 0
    %v501 = vsel %vm373, 1, 0
    %v502 = vsel %vm374, 1, 0
    %v503 = vsel %vm375, 1, 0
    %v504 = vsel %vm376, 1, 0
    %v505 = vsel %vm377, 1, 0
    %v506 = vsel %vm378, 1, 0
    %v507 = vsel %vm379, 1, 0
    %v508 = vsel %vm380, 1, 0
    %v509 = vsel %vm381, 1, 0
    %v510 = vsel %vm382, 1, 0
    %v511 = vsel %vm383, 1, 0
    %v512 = vsel %vm384, 1, 0
    %v513 = vsel %vm385, 1, 0
    %v514 = vsel %vm386, 1, 0
    %v515 = vsel %vm387, 1, 0
    %v516 = vsel %vm388, 1, 0
    %v517 = vsel %vm389, 1, 0
    %v518 = vsel %vm390, 1, 0
    %v519 = vsel %vm391, 1, 0
    %v520 = vsel %vm392, 1, 0
    %v521 = vsel %vm393, 1, 0
    %v522 = vsel %vm394, 1, 0
    %v523 = vsel %vm395, 1, 0
    %v524 = vsel %vm396, 1, 0
    %v525 = vsel %vm397, 1, 0
    %v526 = vsel %vm398, 1, 0
    %v527 = vsel %vm399, 1, 0
    %v528 = vsel %vm400, 1, 0
    %v529 = vsel %vm401, 1, 0
    %v530 = vsel %vm402, 1, 0
    %v531 = vsel %vm403, 1, 0
    %v532 = vsel %vm404, 1, 0
    %v533 = vsel %vm405, 1, 0
    %v534 = vsel %vm406, 1, 0
    %v535 = vsel %vm407, 1, 0
    %v536 = vsel %vm408, 1, 0
    %v537 = vsel %vm409, 1, 0
    %v538 = vsel %vm410, 1, 0
    %v539 = vsel %vm411, 1, 0
    %v540 = vsel %vm412, 1, 0
    %v541 = vsel %vm413, 1, 0
    %v542 = vsel %vm414, 1, 0
    %v543 = vsel %vm415, 1, 0
    %v544 = vsel %vm416, 1, 0
    %v545 = vsel %vm417, 1, 0
    %v546 = vsel %vm418, 1, 0
    %v547 = vsel %vm419, 1, 0
    %v548 = vsel %vm420, 1, 0
    %v549 = vsel %vm421, 1, 0
    %v550 = vsel %vm422, 1, 0
    %v551 = vsel %vm423, 1, 0
    %v552 = vsel %vm424, 1, 0
    %v553 = vsel %vm425, 1, 0
    %v554 = vsel %vm426, 1, 0
    %v555 = vsel %vm427, 1, 0
    %v556 = vsel %vm428, 1, 0
    %v557 = vsel %vm429, 1, 0
    %v558 = vsel %vm430, 1, 0
    %v559 = vsel %vm431, 1, 0
    %v560 = vsel %vm432, 1, 0
    %v561 = vsel %vm433, 1, 0
    %v562 = vsel %vm434, 1, 0
    %v563 = vsel %vm435, 1, 0
    %v564 = vsel %vm436, 1, 0
    %v565 = vsel %vm437, 1, 0
    %v566 = vsel %vm438, 1, 0
    %v567 = vsel %vm439, 1, 0
    %v568 = vsel %vm440, 1, 0
    %v569 = vsel %vm441, 1, 0
    %v570 = vsel %vm442, 1, 0
    %v571 = vsel %vm443, 1, 0
    %v572 = vsel %vm444, 1, 0
    %v573 = vsel %vm445, 1, 0
    %v574 = vsel %vm446, 1, 0
    %v575 = vsel %vm447, 1, 0
    %v576 = vsel %vm448, 1, 0
    %v577 = vsel %vm449, 1, 0
    %v578 = vsel %vm450, 1, 0
    %v579 = vsel %vm451, 1, 0
    %v580 = vsel %vm452, 1, 0
    %v581 = vsel %vm453, 1, 0
    %v582 = vsel %vm454, 1, 0
    %v583 = vsel %vm455, 1, 0
    %v584 = vsel %vm456, 1, 0
    %v585 = vsel %vm457, 1, 0
    %v586 = vsel %vm458, 1, 0
    %v587 = vsel %vm459, 1, 0
    %v588 = vsel %vm460, 1, 0
    %v589 = vsel %vm461, 1, 0
    %v590 = vsel %vm462, 1, 0
    %v591 = vsel %vm463, 1, 0
    %v592 = vsel %vm464, 1, 0
    %v593 = vsel %vm465, 1, 0
    %v594 = vsel %vm466, 1, 0
    %v595 = vsel %vm467, 1, 0
    %v596 = vsel %vm468, 1, 0
    %v597 = vsel %vm469, 1, 0
    %v598 = vsel %vm470, 1, 0
    %v599 = vsel %vm471, 1, 0
    %v600 = vsel %vm472, 1, 0
    %v601 = vsel %vm473, 1, 0
    %v602 = vsel %vm474, 1, 0
    %v603 = vsel %vm475, 1, 0
    %v604 = vsel %vm476, 1, 0
    %v605 = vsel %vm477, 1, 0
    %v606 = vsel %vm478, 1, 0
    %v607 = vcvt.s32.f32 %v479
    %v608 = vcvt.s32.f32 %v480
    %v609 = vcvt.s32.f32 %v481
    %v610 = vcvt.s32.f32 %v482
    %v611 = vcvt.s32.f32 %v483
    %v612 = vcvt.s32.f32 %v484
    %v613 = vcvt.s32.f32 %v485
    %v614 = vcvt.s32.f32 %v486
    %v615 = vcvt.s32.f32 %v487
    %v616 = vcvt.s32.f32 %v488
    %v617 = vcvt.s32.f32 %v489
    %v618 = vcvt.s32.f32 %v490
    %v619 = vcvt.s32.f32 %v491
    %v620 = vcvt.s32.f32 %v492
    %v621 = vcvt.s32.f32 %v493
    %v622 = vcvt.s32.f32 %v494
    %v623 = vcvt.s32.f32 %v495
    %v624 = vcvt.s32.f32 %v496
    %v625 = vcvt.s32.f32 %v497
    %v626 = vcvt.s32.f32 %v498
    %v627 = vcvt.s32.f32 %v499
    %v628 = vcvt.s32.f32 %v500
    %v629 = vcvt.s32.f32 %v501
    %v630 = vcvt.s32.f32 %v502
    %v631 = vcvt.s32.f32 %v503
    %v632 = vcvt.s32.f32 %v504
    %v633 = vcvt.s32.f32 %v505
    %v634 = vcvt.s32.f32 %v506
    %v635 = vcvt.s32.f32 %v507
    %v636 = vcvt.s32.f32 %v508
    %v637 = vcvt.s32.f32 %v509
    %v638 = vcvt.s32.f32 %v510
    %v639 = vcvt.s32.f32 %v511
    %v640 = vcvt.s32.f32 %v512
    %v641 = vcvt.s32.f32 %v513
    %v642 = vcvt.s32.f32 %v514
    %v643 = vcvt.s32.f32 %v515
    %v644 = vcvt.s32.f32 %v516
    %v645 = vcvt.s32.f32 %v517
    %v646 = vcvt.s32.f32 %v518
    %v647 = vcvt.s32.f32 %v519
    %v648 = vcvt.s32.f32 %v520
    %v649 = vcvt.s32.f32 %v521
    %v650 = vcvt.s32.f32 %v522
    %v651 = vcvt.s32.f32 %v523
    %v652 = vcvt.s32.f32 %v524
    %v653 = vcvt.s32.f32 %v525
    %v654 = vcvt.s32.f32 %v526
    %v655 = vcvt.s32.f32 %v527
    %v656 = vcvt.s32.f32 %v528
    %v657 = vcvt.s32.f32 %v529
    %v658 = vcvt.s32.f32 %v530
    %v659 = vcvt.s32.f32 %v531
    %v660 = vcvt.s32.f32 %v532
    %v661 = vcvt.s32.f32 %v533
    %v662 = vcvt.s32.f32 %v534
    %v663 = vcvt.s32.f32 %v535
    %v664 = vcvt.s32.f32 %v536
    %v665 = vcvt.s32.f32 %v537
    %v666 = vcvt.s32.f32 %v538
    %v667 = vcvt.s32.f32 %v539
    %v668 = vcvt.s32.f32 %v540
    %v669 = vcvt.s32.f32 %v541
    %v670 = vcvt.s32.f32 %v542
    %v671 = vcvt.s32.f32 %v543
    %v672 = vcvt.s32.f32 %v544
    %v673 = vcvt.s32.f32 %v545
    %v674 = vcvt.s32.f32 %v546
    %v675 = vcvt.s32.f32 %v547
    %v676 = vcvt.s32.f32 %v548
    %v677 = vcvt.s32.f32 %v549
    %v678 = vcvt.s32.f32 %v550
    %v679 = vcvt.s32.f32 %v551
    %v680 = vcvt.s32.f32 %v552
    %v681 = vcvt.s32.f32 %v553
    %v682 = vcvt.s32.f32 %v554
    %v683 = vcvt.s32.f32 %v555
    %v684 = vcvt.s32.f32 %v556
    %v685 = vcvt.s32.f32 %v557
    %v686 = vcvt.s32.f32 %v558
    %v687 = vcvt.s32.f32 %v559
    %v688 = vcvt.s32.f32 %v560
    %v689 = vcvt.s32.f32 %v561
    %v690 = vcvt.s32.f32 %v562
    %v691 = vcvt.s32.f32 %v563
    %v692 = vcvt.s32.f32 %v564
    %v693 = vcvt.s32.f32 %v565
    %v694 = vcvt.s32.f32 %v566
    %v695 = vcvt.s32.f32 %v567
    %v696 = vcvt.s32.f32 %v568
    %v697 = vcvt.s32.f32 %v569
    %v698 = vcvt.s32.f32 %v570
    %v699 = vcvt.s32.f32 %v571
    %v700 = vcvt.s32.f32 %v572
    %v701 = vcvt.s32.f32 %v573
    %v702 = vcvt.s32.f32 %v574
    %v703 = vcvt.s32.f32 %v575
    %v704 = vcvt.s32.f32 %v576
    %v705 = vcvt.s32.f32 %v577
    %v706 = vcvt.s32.f32 %v578
    %v707 = vcvt.s32.f32 %v579
    %v708 = vcvt.s32.f32 %v580
    %v709 = vcvt.s32.f32 %v581
    %v710 = vcvt.s32.f32 %v582
    %v711 = vcvt.s32.f32 %v583
    %v712 = vcvt.s32.f32 %v584
    %v713 = vcvt.s32.f32 %v585
    %v714 = vcvt.s32.f32 %v586
    %v715 = vcvt.s32.f32 %v587
    %v716 = vcvt.s32.f32 %v588
    %v717 = vcvt.s32.f32 %v589
    %v718 = vcvt.s32.f32 %v590
    %v719 = vcvt.s32.f32 %v591
    %v720 = vcvt.s32.f32 %v592
    %v721 = vcvt.s32.f32 %v593
    %v722 = vcvt.s32.f32 %v594
    %v723 = vcvt.s32.f32 %v595
    %v724 = vcvt.s32.f32 %v596
    %v725 = vcvt.s32.f32 %v597
    %v726 = vcvt.s32.f32 %v598
    %v727 = vcvt.s32.f32 %v599
    %v728 = vcvt.s32.f32 %v600
    %v729 = vcvt.s32.f32 %v601
    %v730 = vcvt.s32.f32 %v602
    %v731 = vcvt.s32.f32 %v603
    %v732 = vcvt.s32.f32 %v604
    %v733 = vcvt.s32.f32 %v605
    %v734 = vcvt.s32.f32 %v606
    %v735 = vpack.c.bf16 %v609, %v607
    %v736 = vpack.c.bf16 %v610, %v608
    %v737 = vpack.c.bf16 %v613, %v611
    %v738 = vpack.c.bf16 %v614, %v612
    %v739 = vpack.c.bf16 %v617, %v615
    %v740 = vpack.c.bf16 %v618, %v616
    %v741 = vpack.c.bf16 %v621, %v619
    %v742 = vpack.c.bf16 %v622, %v620
    %v743 = vpack.c.bf16 %v625, %v623
    %v744 = vpack.c.bf16 %v626, %v624
    %v745 = vpack.c.bf16 %v629, %v627
    %v746 = vpack.c.bf16 %v630, %v628
    %v747 = vpack.c.bf16 %v633, %v631
    %v748 = vpack.c.bf16 %v634, %v632
    %v749 = vpack.c.bf16 %v637, %v635
    %v750 = vpack.c.bf16 %v638, %v636
    %v751 = vpack.c.bf16 %v641, %v639
    %v752 = vpack.c.bf16 %v642, %v640
    %v753 = vpack.c.bf16 %v645, %v643
    %v754 = vpack.c.bf16 %v646, %v644
    %v755 = vpack.c.bf16 %v649, %v647
    %v756 = vpack.c.bf16 %v650, %v648
    %v757 = vpack.c.bf16 %v653, %v651
    %v758 = vpack.c.bf16 %v654, %v652
    %v759 = vpack.c.bf16 %v657, %v655
    %v760 = vpack.c.bf16 %v658, %v656
    %v761 = vpack.c.bf16 %v661, %v659
    %v762 = vpack.c.bf16 %v662, %v660
    %v763 = vpack.c.bf16 %v665, %v663
    %v764 = vpack.c.bf16 %v666, %v664
    %v765 = vpack.c.bf16 %v669, %v667
    %v766 = vpack.c.bf16 %v670, %v668
    %v767 = vpack.c.bf16 %v673, %v671
    %v768 = vpack.c.bf16 %v674, %v672
    %v769 = vpack.c.bf16 %v677, %v675
    %v770 = vpack.c.bf16 %v678, %v676
    %v771 = vpack.c.bf16 %v681, %v679
    %v772 = vpack.c.bf16 %v682, %v680
    %v773 = vpack.c.bf16 %v685, %v683
    %v774 = vpack.c.bf16 %v686, %v684
    %v775 = vpack.c.bf16 %v689, %v687
    %v776 = vpack.c.bf16 %v690, %v688
    %v777 = vpack.c.bf16 %v693, %v691
    %v778 = vpack.c.bf16 %v694, %v692
    %v779 = vpack.c.bf16 %v697, %v695
    %v780 = vpack.c.bf16 %v698, %v696
    %v781 = vpack.c.bf16 %v701, %v699
    %v782 = vpack.c.bf16 %v702, %v700
    %v783 = vpack.c.bf16 %v705, %v703
    %v784 = vpack.c.bf16 %v706, %v704
    %v785 = vpack.c.bf16 %v709, %v707
    %v786 = vpack.c.bf16 %v710, %v708
    %v787 = vpack.c.bf16 %v713, %v711
    %v788 = vpack.c.bf16 %v714, %v712
    %v789 = vpack.c.bf16 %v717, %v715
    %v790 = vpack.c.bf16 %v718, %v716
    %v791 = vpack.c.bf16 %v721, %v719
    %v792 = vpack.c.bf16 %v722, %v720
    %v793 = vpack.c.bf16 %v725, %v723
    %v794 = vpack.c.bf16 %v726, %v724
    %v795 = vpack.c.bf16 %v729, %v727
    %v796 = vpack.c.bf16 %v730, %v728
    %v797 = vpack.c.bf16 %v733, %v731
    %v798 = vpack.c.bf16 %v734, %v732
    %v799 = vld [vmem:[#allocation4] sm:$0xff]
    %v800 = vld [vmem:[#allocation4 + $0x8] sm:$0xff]
    %v801 = vld [vmem:[#allocation4 + $0x10] sm:$0xff]
    %v802 = vld [vmem:[#allocation4 + $0x18] sm:$0xff]
    %v803 = vld [vmem:[#allocation4 + $0x20] sm:$0xff]
    %v804 = vld [vmem:[#allocation4 + $0x28] sm:$0xff]
    %v805 = vld [vmem:[#allocation4 + $0x30] sm:$0xff]
    %v806 = vld [vmem:[#allocation4 + $0x38] sm:$0xff]
    %v807 = vld [vmem:[#allocation4 + $0x40] sm:$0xff]
    %v808 = vld [vmem:[#allocation4 + $0x48] sm:$0xff]
    %v809 = vld [vmem:[#allocation4 + $0x50] sm:$0xff]
    %v810 = vld [vmem:[#allocation4 + $0x58] sm:$0xff]
    %v811 = vld [vmem:[#allocation4 + $0x60] sm:$0xff]
    %v812 = vld [vmem:[#allocation4 + $0x68] sm:$0xff]
    %v813 = vld [vmem:[#allocation4 + $0x70] sm:$0xff]
    %v814 = vld [vmem:[#allocation4 + $0x78] sm:$0xff]
    %v815 = vcombine.low %v226, %v227
    %v816 = vcombine.high %v226, %v227
    %v818 = vunpack.c.l.s4 1966171168
    %v819 = vunpack.c.0.s8 %v818
    %v820 = vlaneseq
    %v821 = vshrl.u32 %v820, 7
    %v822 = vsub.s32 %v819, %v821
    %v823 = vrot.slane %v815, %v822
    %v825 = vunpack.c.l.s4 1966171168
    %v826 = vunpack.c.0.s8 %v825
    %v827 = vlaneseq
    %v828 = vshrl.u32 %v827, 7
    %v829 = vsub.s32 %v826, %v828
    %v830 = vrot.slane %v816, %v829
    %v831 = vcombine.high %v823, %v823
    %v832 = vcombine.high %v830, %v830
    %v834 = vunpack.c.l.s4 1966171168
    %v835 = vunpack.c.0.s8 %v834
    %v836 = vlaneseq
    %v837 = vshrl.u32 %v836, 7
    %v838 = vsub.s32 %v835, %v837
    %v839 = vrot.slane %v823, %v838
    %v841 = vunpack.c.l.s4 1966171168
    %v842 = vunpack.c.0.s8 %v841
    %v843 = vlaneseq
    %v844 = vshrl.u32 %v843, 7
    %v845 = vsub.s32 %v842, %v844
    %v846 = vrot.slane %v830, %v845
    %v848 = vunpack.c.l.s4 1966171168
    %v849 = vunpack.c.0.s8 %v848
    %v850 = vlaneseq
    %v851 = vshrl.u32 %v850, 7
    %v852 = vsub.s32 %v849, %v851
    %v853 = vrot.slane %v831, %v852
    %v855 = vunpack.c.l.s4 1966171168
    %v856 = vunpack.c.0.s8 %v855
    %v857 = vlaneseq
    %v858 = vshrl.u32 %v857, 7
    %v859 = vsub.s32 %v856, %v858
    %v860 = vrot.slane %v832, %v859
    %v861 = vcombine.high %v839, %v839
    %v862 = vcombine.high %v846, %v846
    %v863 = vcombine.high %v853, %v853
    %v864 = vcombine.high %v860, %v860
    %v865 = vlaneseq
    %v866 = vshrl.u32 %v865, 7
    %v867 = vsub.s32 0, %v866
    %v868 = vrot.slane %v839, %v867
    %v869 = vlaneseq
    %v870 = vshrl.u32 %v869, 7
    %v871 = vsub.s32 1, %v870
    %v872 = vrot.slane %v839, %v871
    %v873 = vlaneseq
    %v874 = vshrl.u32 %v873, 7
    %v875 = vsub.s32 0, %v874
    %v876 = vrot.slane %v853, %v875
    %v877 = vlaneseq
    %v878 = vshrl.u32 %v877, 7
    %v879 = vsub.s32 1, %v878
    %v880 = vrot.slane %v853, %v879
    %v881 = vlaneseq
    %v882 = vshrl.u32 %v881, 7
    %v883 = vsub.s32 0, %v882
    %v884 = vrot.slane %v861, %v883
    %v885 = vlaneseq
    %v886 = vshrl.u32 %v885, 7
    %v887 = vsub.s32 1, %v886
    %v888 = vrot.slane %v861, %v887
    %v889 = vlaneseq
    %v890 = vshrl.u32 %v889, 7
    %v891 = vsub.s32 0, %v890
    %v892 = vrot.slane %v863, %v891
    %v893 = vlaneseq
    %v894 = vshrl.u32 %v893, 7
    %v895 = vsub.s32 1, %v894
    %v896 = vrot.slane %v863, %v895
    %v897 = vlaneseq
    %v898 = vshrl.u32 %v897, 7
    %v899 = vsub.s32 0, %v898
    %v900 = vrot.slane %v846, %v899
    %v901 = vlaneseq
    %v902 = vshrl.u32 %v901, 7
    %v903 = vsub.s32 1, %v902
    %v904 = vrot.slane %v846, %v903
    %v905 = vlaneseq
    %v906 = vshrl.u32 %v905, 7
    %v907 = vsub.s32 0, %v906
    %v908 = vrot.slane %v860, %v907
    %v909 = vlaneseq
    %v910 = vshrl.u32 %v909, 7
    %v911 = vsub.s32 1, %v910
    %v912 = vrot.slane %v860, %v911
    %v913 = vlaneseq
    %v914 = vshrl.u32 %v913, 7
    %v915 = vsub.s32 0, %v914
    %v916 = vrot.slane %v862, %v915
    %v917 = vlaneseq
    %v918 = vshrl.u32 %v917, 7
    %v919 = vsub.s32 1, %v918
    %v920 = vrot.slane %v862, %v919
    %v921 = vlaneseq
    %v922 = vshrl.u32 %v921, 7
    %v923 = vsub.s32 0, %v922
    %v924 = vrot.slane %v864, %v923
    %v925 = vlaneseq
    %v926 = vshrl.u32 %v925, 7
    %v927 = vsub.s32 1, %v926
    %v928 = vrot.slane %v864, %v927
    %vm929 = vcmp.eq.s32.totalorder %v868, %v229
    %vm930 = vcmp.eq.s32.totalorder %v872, %v229
    %vm931 = vcmp.eq.s32.totalorder %v868, %v230
    %vm932 = vcmp.eq.s32.totalorder %v872, %v230
    %vm933 = vcmp.eq.s32.totalorder %v868, %v231
    %vm934 = vcmp.eq.s32.totalorder %v872, %v231
    %vm935 = vcmp.eq.s32.totalorder %v868, %v232
    %vm936 = vcmp.eq.s32.totalorder %v872, %v232
    %vm937 = vcmp.eq.s32.totalorder %v868, %v233
    %vm938 = vcmp.eq.s32.totalorder %v872, %v233
    %vm939 = vcmp.eq.s32.totalorder %v868, %v234
    %vm940 = vcmp.eq.s32.totalorder %v872, %v234
    %vm941 = vcmp.eq.s32.totalorder %v868, %v235
    %vm942 = vcmp.eq.s32.totalorder %v872, %v235
    %vm943 = vcmp.eq.s32.totalorder %v868, %v236
    %vm944 = vcmp.eq.s32.totalorder %v872, %v236
    %vm945 = vcmp.eq.s32.totalorder %v876, %v229
    %vm946 = vcmp.eq.s32.totalorder %v880, %v229
    %vm947 = vcmp.eq.s32.totalorder %v876, %v230
    %vm948 = vcmp.eq.s32.totalorder %v880, %v230
    %vm949 = vcmp.eq.s32.totalorder %v876, %v231
    %vm950 = vcmp.eq.s32.totalorder %v880, %v231
    %vm951 = vcmp.eq.s32.totalorder %v876, %v232
    %vm952 = vcmp.eq.s32.totalorder %v880, %v232
    %vm953 = vcmp.eq.s32.totalorder %v876, %v233
    %vm954 = vcmp.eq.s32.totalorder %v880, %v233
    %vm955 = vcmp.eq.s32.totalorder %v876, %v234
    %vm956 = vcmp.eq.s32.totalorder %v880, %v234
    %vm957 = vcmp.eq.s32.totalorder %v876, %v235
    %vm958 = vcmp.eq.s32.totalorder %v880, %v235
    %vm959 = vcmp.eq.s32.totalorder %v876, %v236
    %vm960 = vcmp.eq.s32.totalorder %v880, %v236
    %vm961 = vcmp.eq.s32.totalorder %v884, %v229
    %vm962 = vcmp.eq.s32.totalorder %v888, %v229
    %vm963 = vcmp.eq.s32.totalorder %v884, %v230
    %vm964 = vcmp.eq.s32.totalorder %v888, %v230
    %vm965 = vcmp.eq.s32.totalorder %v884, %v231
    %vm966 = vcmp.eq.s32.totalorder %v888, %v231
    %vm967 = vcmp.eq.s32.totalorder %v884, %v232
    %vm968 = vcmp.eq.s32.totalorder %v888, %v232
    %vm969 = vcmp.eq.s32.totalorder %v884, %v233
    %vm970 = vcmp.eq.s32.totalorder %v888, %v233
    %vm971 = vcmp.eq.s32.totalorder %v884, %v234
    %vm972 = vcmp.eq.s32.totalorder %v888, %v234
    %vm973 = vcmp.eq.s32.totalorder %v884, %v235
    %vm974 = vcmp.eq.s32.totalorder %v888, %v235
    %vm975 = vcmp.eq.s32.totalorder %v884, %v236
    %vm976 = vcmp.eq.s32.totalorder %v888, %v236
    %vm977 = vcmp.eq.s32.totalorder %v892, %v229
    %vm978 = vcmp.eq.s32.totalorder %v896, %v229
    %vm979 = vcmp.eq.s32.totalorder %v892, %v230
    %vm980 = vcmp.eq.s32.totalorder %v896, %v230
    %vm981 = vcmp.eq.s32.totalorder %v892, %v231
    %vm982 = vcmp.eq.s32.totalorder %v896, %v231
    %vm983 = vcmp.eq.s32.totalorder %v892, %v232
    %vm984 = vcmp.eq.s32.totalorder %v896, %v232
    %vm985 = vcmp.eq.s32.totalorder %v892, %v233
    %vm986 = vcmp.eq.s32.totalorder %v896, %v233
    %vm987 = vcmp.eq.s32.totalorder %v892, %v234
    %vm988 = vcmp.eq.s32.totalorder %v896, %v234
    %vm989 = vcmp.eq.s32.totalorder %v892, %v235
    %vm990 = vcmp.eq.s32.totalorder %v896, %v235
    %vm991 = vcmp.eq.s32.totalorder %v892, %v236
    %vm992 = vcmp.eq.s32.totalorder %v896, %v236
    %vm993 = vcmp.eq.s32.totalorder %v900, %v229
    %vm994 = vcmp.eq.s32.totalorder %v904, %v229
    %vm995 = vcmp.eq.s32.totalorder %v900, %v230
    %vm996 = vcmp.eq.s32.totalorder %v904, %v230
    %vm997 = vcmp.eq.s32.totalorder %v900, %v231
    %vm998 = vcmp.eq.s32.totalorder %v904, %v231
    %vm999 = vcmp.eq.s32.totalorder %v900, %v232
    %vm1000 = vcmp.eq.s32.totalorder %v904, %v232
    %vm1001 = vcmp.eq.s32.totalorder %v900, %v233
    %vm1002 = vcmp.eq.s32.totalorder %v904, %v233
    %vm1003 = vcmp.eq.s32.totalorder %v900, %v234
    %vm1004 = vcmp.eq.s32.totalorder %v904, %v234
    %vm1005 = vcmp.eq.s32.totalorder %v900, %v235
    %vm1006 = vcmp.eq.s32.totalorder %v904, %v235
    %vm1007 = vcmp.eq.s32.totalorder %v900, %v236
    %vm1008 = vcmp.eq.s32.totalorder %v904, %v236
    %vm1009 = vcmp.eq.s32.totalorder %v908, %v229
    %vm1010 = vcmp.eq.s32.totalorder %v912, %v229
    %vm1011 = vcmp.eq.s32.totalorder %v908, %v230
    %vm1012 = vcmp.eq.s32.totalorder %v912, %v230
    %vm1013 = vcmp.eq.s32.totalorder %v908, %v231
    %vm1014 = vcmp.eq.s32.totalorder %v912, %v231
    %vm1015 = vcmp.eq.s32.totalorder %v908, %v232
    %vm1016 = vcmp.eq.s32.totalorder %v912, %v232
    %vm1017 = vcmp.eq.s32.totalorder %v908, %v233
    %vm1018 = vcmp.eq.s32.totalorder %v912, %v233
    %vm1019 = vcmp.eq.s32.totalorder %v908, %v234
    %vm1020 = vcmp.eq.s32.totalorder %v912, %v234
    %vm1021 = vcmp.eq.s32.totalorder %v908, %v235
    %vm1022 = vcmp.eq.s32.totalorder %v912, %v235
    %vm1023 = vcmp.eq.s32.totalorder %v908, %v236
    %vm1024 = vcmp.eq.s32.totalorder %v912, %v236
    %vm1025 = vcmp.eq.s32.totalorder %v916, %v229
    %vm1026 = vcmp.eq.s32.totalorder %v920, %v229
    %vm1027 = vcmp.eq.s32.totalorder %v916, %v230
    %vm1028 = vcmp.eq.s32.totalorder %v920, %v230
    %vm1029 = vcmp.eq.s32.totalorder %v916, %v231
    %vm1030 = vcmp.eq.s32.totalorder %v920, %v231
    %vm1031 = vcmp.eq.s32.totalorder %v916, %v232
    %vm1032 = vcmp.eq.s32.totalorder %v920, %v232
    %vm1033 = vcmp.eq.s32.totalorder %v916, %v233
    %vm1034 = vcmp.eq.s32.totalorder %v920, %v233
    %vm1035 = vcmp.eq.s32.totalorder %v916, %v234
    %vm1036 = vcmp.eq.s32.totalorder %v920, %v234
    %vm1037 = vcmp.eq.s32.totalorder %v916, %v235
    %vm1038 = vcmp.eq.s32.totalorder %v920, %v235
    %vm1039 = vcmp.eq.s32.totalorder %v916, %v236
    %vm1040 = vcmp.eq.s32.totalorder %v920, %v236
    %vm1041 = vcmp.eq.s32.totalorder %v924, %v229
    %vm1042 = vcmp.eq.s32.totalorder %v928, %v229
    %vm1043 = vcmp.eq.s32.totalorder %v924, %v230
    %vm1044 = vcmp.eq.s32.totalorder %v928, %v230
    %vm1045 = vcmp.eq.s32.totalorder %v924, %v231
    %vm1046 = vcmp.eq.s32.totalorder %v928, %v231
    %vm1047 = vcmp.eq.s32.totalorder %v924, %v232
    %vm1048 = vcmp.eq.s32.totalorder %v928, %v232
    %vm1049 = vcmp.eq.s32.totalorder %v924, %v233
    %vm1050 = vcmp.eq.s32.totalorder %v928, %v233
    %vm1051 = vcmp.eq.s32.totalorder %v924, %v234
    %vm1052 = vcmp.eq.s32.totalorder %v928, %v234
    %vm1053 = vcmp.eq.s32.totalorder %v924, %v235
    %vm1054 = vcmp.eq.s32.totalorder %v928, %v235
    %vm1055 = vcmp.eq.s32.totalorder %v924, %v236
    %vm1056 = vcmp.eq.s32.totalorder %v928, %v236
    %v1057 = vsel %vm929, 1, 0
    %v1058 = vsel %vm930, 1, 0
    %v1059 = vsel %vm931, 1, 0
    %v1060 = vsel %vm932, 1, 0
    %v1061 = vsel %vm933, 1, 0
    %v1062 = vsel %vm934, 1, 0
    %v1063 = vsel %vm935, 1, 0
    %v1064 = vsel %vm936, 1, 0
    %v1065 = vsel %vm937, 1, 0
    %v1066 = vsel %vm938, 1, 0
    %v1067 = vsel %vm939, 1, 0
    %v1068 = vsel %vm940, 1, 0
    %v1069 = vsel %vm941, 1, 0
    %v1070 = vsel %vm942, 1, 0
    %v1071 = vsel %vm943, 1, 0
    %v1072 = vsel %vm944, 1, 0
    %v1073 = vsel %vm945, 1, 0
    %v1074 = vsel %vm946, 1, 0
    %v1075 = vsel %vm947, 1, 0
    %v1076 = vsel %vm948, 1, 0
    %v1077 = vsel %vm949, 1, 0
    %v1078 = vsel %vm950, 1, 0
    %v1079 = vsel %vm951, 1, 0
    %v1080 = vsel %vm952, 1, 0
    %v1081 = vsel %vm953, 1, 0
    %v1082 = vsel %vm954, 1, 0
    %v1083 = vsel %vm955, 1, 0
    %v1084 = vsel %vm956, 1, 0
    %v1085 = vsel %vm957, 1, 0
    %v1086 = vsel %vm958, 1, 0
    %v1087 = vsel %vm959, 1, 0
    %v1088 = vsel %vm960, 1, 0
    %v1089 = vsel %vm961, 1, 0
    %v1090 = vsel %vm962, 1, 0
    %v1091 = vsel %vm963, 1, 0
    %v1092 = vsel %vm964, 1, 0
    %v1093 = vsel %vm965, 1, 0
    %v1094 = vsel %vm966, 1, 0
    %v1095 = vsel %vm967, 1, 0
    %v1096 = vsel %vm968, 1, 0
    %v1097 = vsel %vm969, 1, 0
    %v1098 = vsel %vm970, 1, 0
    %v1099 = vsel %vm971, 1, 0
    %v1100 = vsel %vm972, 1, 0
    %v1101 = vsel %vm973, 1, 0
    %v1102 = vsel %vm974, 1, 0
    %v1103 = vsel %vm975, 1, 0
    %v1104 = vsel %vm976, 1, 0
    %v1105 = vsel %vm977, 1, 0
    %v1106 = vsel %vm978, 1, 0
    %v1107 = vsel %vm979, 1, 0
    %v1108 = vsel %vm980, 1, 0
    %v1109 = vsel %vm981, 1, 0
    %v1110 = vsel %vm982, 1, 0
    %v1111 = vsel %vm983, 1, 0
    %v1112 = vsel %vm984, 1, 0
    %v1113 = vsel %vm985, 1, 0
    %v1114 = vsel %vm986, 1, 0
    %v1115 = vsel %vm987, 1, 0
    %v1116 = vsel %vm988, 1, 0
    %v1117 = vsel %vm989, 1, 0
    %v1118 = vsel %vm990, 1, 0
    %v1119 = vsel %vm991, 1, 0
    %v1120 = vsel %vm992, 1, 0
    %v1121 = vsel %vm993, 1, 0
    %v1122 = vsel %vm994, 1, 0
    %v1123 = vsel %vm995, 1, 0
    %v1124 = vsel %vm996, 1, 0
    %v1125 = vsel %vm997, 1, 0
    %v1126 = vsel %vm998, 1, 0
    %v1127 = vsel %vm999, 1, 0
    %v1128 = vsel %vm1000, 1, 0
    %v1129 = vsel %vm1001, 1, 0
    %v1130 = vsel %vm1002, 1, 0
    %v1131 = vsel %vm1003, 1, 0
    %v1132 = vsel %vm1004, 1, 0
    %v1133 = vsel %vm1005, 1, 0
    %v1134 = vsel %vm1006, 1, 0
    %v1135 = vsel %vm1007, 1, 0
    %v1136 = vsel %vm1008, 1, 0
    %v1137 = vsel %vm1009, 1, 0
    %v1138 = vsel %vm1010, 1, 0
    %v1139 = vsel %vm1011, 1, 0
    %v1140 = vsel %vm1012, 1, 0
    %v1141 = vsel %vm1013, 1, 0
    %v1142 = vsel %vm1014, 1, 0
    %v1143 = vsel %vm1015, 1, 0
    %v1144 = vsel %vm1016, 1, 0
    %v1145 = vsel %vm1017, 1, 0
    %v1146 = vsel %vm1018, 1, 0
    %v1147 = vsel %vm1019, 1, 0
    %v1148 = vsel %vm1020, 1, 0
    %v1149 = vsel %vm1021, 1, 0
    %v1150 = vsel %vm1022, 1, 0
    %v1151 = vsel %vm1023, 1, 0
    %v1152 = vsel %vm1024, 1, 0
    %v1153 = vsel %vm1025, 1, 0
    %v1154 = vsel %vm1026, 1, 0
    %v1155 = vsel %vm1027, 1, 0
    %v1156 = vsel %vm1028, 1, 0
    %v1157 = vsel %vm1029, 1, 0
    %v1158 = vsel %vm1030, 1, 0
    %v1159 = vsel %vm1031, 1, 0
    %v1160 = vsel %vm1032, 1, 0
    %v1161 = vsel %vm1033, 1, 0
    %v1162 = vsel %vm1034, 1, 0
    %v1163 = vsel %vm1035, 1, 0
    %v1164 = vsel %vm1036, 1, 0
    %v1165 = vsel %vm1037, 1, 0
    %v1166 = vsel %vm1038, 1, 0
    %v1167 = vsel %vm1039, 1, 0
    %v1168 = vsel %vm1040, 1, 0
    %v1169 = vsel %vm1041, 1, 0
    %v1170 = vsel %vm1042, 1, 0
    %v1171 = vsel %vm1043, 1, 0
    %v1172 = vsel %vm1044, 1, 0
    %v1173 = vsel %vm1045, 1, 0
    %v1174 = vsel %vm1046, 1, 0
    %v1175 = vsel %vm1047, 1, 0
    %v1176 = vsel %vm1048, 1, 0
    %v1177 = vsel %vm1049, 1, 0
    %v1178 = vsel %vm1050, 1, 0
    %v1179 = vsel %vm1051, 1, 0
    %v1180 = vsel %vm1052, 1, 0
    %v1181 = vsel %vm1053, 1, 0
    %v1182 = vsel %vm1054, 1, 0
    %v1183 = vsel %vm1055, 1, 0
    %v1184 = vsel %vm1056, 1, 0
    %v1185 = vcvt.s32.f32 %v1057
    %v1186 = vcvt.s32.f32 %v1058
    %v1187 = vcvt.s32.f32 %v1059
    %v1188 = vcvt.s32.f32 %v1060
    %v1189 = vcvt.s32.f32 %v1061
    %v1190 = vcvt.s32.f32 %v1062
    %v1191 = vcvt.s32.f32 %v1063
    %v1192 = vcvt.s32.f32 %v1064
    %v1193 = vcvt.s32.f32 %v1065
    %v1194 = vcvt.s32.f32 %v1066
    %v1195 = vcvt.s32.f32 %v1067
    %v1196 = vcvt.s32.f32 %v1068
    %v1197 = vcvt.s32.f32 %v1069
    %v1198 = vcvt.s32.f32 %v1070
    %v1199 = vcvt.s32.f32 %v1071
    %v1200 = vcvt.s32.f32 %v1072
    %v1201 = vcvt.s32.f32 %v1073
    %v1202 = vcvt.s32.f32 %v1074
    %v1203 = vcvt.s32.f32 %v1075
    %v1204 = vcvt.s32.f32 %v1076
    %v1205 = vcvt.s32.f32 %v1077
    %v1206 = vcvt.s32.f32 %v1078
    %v1207 = vcvt.s32.f32 %v1079
    %v1208 = vcvt.s32.f32 %v1080
    %v1209 = vcvt.s32.f32 %v1081
    %v1210 = vcvt.s32.f32 %v1082
    %v1211 = vcvt.s32.f32 %v1083
    %v1212 = vcvt.s32.f32 %v1084
    %v1213 = vcvt.s32.f32 %v1085
    %v1214 = vcvt.s32.f32 %v1086
    %v1215 = vcvt.s32.f32 %v1087
    %v1216 = vcvt.s32.f32 %v1088
    %v1217 = vcvt.s32.f32 %v1089
    %v1218 = vcvt.s32.f32 %v1090
    %v1219 = vcvt.s32.f32 %v1091
    %v1220 = vcvt.s32.f32 %v1092
    %v1221 = vcvt.s32.f32 %v1093
    %v1222 = vcvt.s32.f32 %v1094
    %v1223 = vcvt.s32.f32 %v1095
    %v1224 = vcvt.s32.f32 %v1096
    %v1225 = vcvt.s32.f32 %v1097
    %v1226 = vcvt.s32.f32 %v1098
    %v1227 = vcvt.s32.f32 %v1099
    %v1228 = vcvt.s32.f32 %v1100
    %v1229 = vcvt.s32.f32 %v1101
    %v1230 = vcvt.s32.f32 %v1102
    %v1231 = vcvt.s32.f32 %v1103
    %v1232 = vcvt.s32.f32 %v1104
    %v1233 = vcvt.s32.f32 %v1105
    %v1234 = vcvt.s32.f32 %v1106
    %v1235 = vcvt.s32.f32 %v1107
    %v1236 = vcvt.s32.f32 %v1108
    %v1237 = vcvt.s32.f32 %v1109
    %v1238 = vcvt.s32.f32 %v1110
    %v1239 = vcvt.s32.f32 %v1111
    %v1240 = vcvt.s32.f32 %v1112
    %v1241 = vcvt.s32.f32 %v1113
    %v1242 = vcvt.s32.f32 %v1114
    %v1243 = vcvt.s32.f32 %v1115
    %v1244 = vcvt.s32.f32 %v1116
    %v1245 = vcvt.s32.f32 %v1117
    %v1246 = vcvt.s32.f32 %v1118
    %v1247 = vcvt.s32.f32 %v1119
    %v1248 = vcvt.s32.f32 %v1120
    %v1249 = vcvt.s32.f32 %v1121
    %v1250 = vcvt.s32.f32 %v1122
    %v1251 = vcvt.s32.f32 %v1123
    %v1252 = vcvt.s32.f32 %v1124
    %v1253 = vcvt.s32.f32 %v1125
    %v1254 = vcvt.s32.f32 %v1126
    %v1255 = vcvt.s32.f32 %v1127
    %v1256 = vcvt.s32.f32 %v1128
    %v1257 = vcvt.s32.f32 %v1129
    %v1258 = vcvt.s32.f32 %v1130
    %v1259 = vcvt.s32.f32 %v1131
    %v1260 = vcvt.s32.f32 %v1132
    %v1261 = vcvt.s32.f32 %v1133
    %v1262 = vcvt.s32.f32 %v1134
    %v1263 = vcvt.s32.f32 %v1135
    %v1264 = vcvt.s32.f32 %v1136
    %v1265 = vcvt.s32.f32 %v1137
    %v1266 = vcvt.s32.f32 %v1138
    %v1267 = vcvt.s32.f32 %v1139
    %v1268 = vcvt.s32.f32 %v1140
    %v1269 = vcvt.s32.f32 %v1141
    %v1270 = vcvt.s32.f32 %v1142
    %v1271 = vcvt.s32.f32 %v1143
    %v1272 = vcvt.s32.f32 %v1144
    %v1273 = vcvt.s32.f32 %v1145
    %v1274 = vcvt.s32.f32 %v1146
    %v1275 = vcvt.s32.f32 %v1147
    %v1276 = vcvt.s32.f32 %v1148
    %v1277 = vcvt.s32.f32 %v1149
    %v1278 = vcvt.s32.f32 %v1150
    %v1279 = vcvt.s32.f32 %v1151
    %v1280 = vcvt.s32.f32 %v1152
    %v1281 = vcvt.s32.f32 %v1153
    %v1282 = vcvt.s32.f32 %v1154
    %v1283 = vcvt.s32.f32 %v1155
    %v1284 = vcvt.s32.f32 %v1156
    %v1285 = vcvt.s32.f32 %v1157
    %v1286 = vcvt.s32.f32 %v1158
    %v1287 = vcvt.s32.f32 %v1159
    %v1288 = vcvt.s32.f32 %v1160
    %v1289 = vcvt.s32.f32 %v1161
    %v1290 = vcvt.s32.f32 %v1162
    %v1291 = vcvt.s32.f32 %v1163
    %v1292 = vcvt.s32.f32 %v1164
    %v1293 = vcvt.s32.f32 %v1165
    %v1294 = vcvt.s32.f32 %v1166
    %v1295 = vcvt.s32.f32 %v1167
    %v1296 = vcvt.s32.f32 %v1168
    %v1297 = vcvt.s32.f32 %v1169
    %v1298 = vcvt.s32.f32 %v1170
    %v1299 = vcvt.s32.f32 %v1171
    %v1300 = vcvt.s32.f32 %v1172
    %v1301 = vcvt.s32.f32 %v1173
    %v1302 = vcvt.s32.f32 %v1174
    %v1303 = vcvt.s32.f32 %v1175
    %v1304 = vcvt.s32.f32 %v1176
    %v1305 = vcvt.s32.f32 %v1177
    %v1306 = vcvt.s32.f32 %v1178
    %v1307 = vcvt.s32.f32 %v1179
    %v1308 = vcvt.s32.f32 %v1180
    %v1309 = vcvt.s32.f32 %v1181
    %v1310 = vcvt.s32.f32 %v1182
    %v1311 = vcvt.s32.f32 %v1183
    %v1312 = vcvt.s32.f32 %v1184
    %v1313 = vpack.c.bf16 %v1187, %v1185
    %v1314 = vpack.c.bf16 %v1188, %v1186
    %v1315 = vpack.c.bf16 %v1191, %v1189
    %v1316 = vpack.c.bf16 %v1192, %v1190
    %v1317 = vpack.c.bf16 %v1195, %v1193
    %v1318 = vpack.c.bf16 %v1196, %v1194
    %v1319 = vpack.c.bf16 %v1199, %v1197
    %v1320 = vpack.c.bf16 %v1200, %v1198
    %v1321 = vpack.c.bf16 %v1203, %v1201
    %v1322 = vpack.c.bf16 %v1204, %v1202
    %v1323 = vpack.c.bf16 %v1207, %v1205
    %v1324 = vpack.c.bf16 %v1208, %v1206
    %v1325 = vpack.c.bf16 %v1211, %v1209
    %v1326 = vpack.c.bf16 %v1212, %v1210
    %v1327 = vpack.c.bf16 %v1215, %v1213
    %v1328 = vpack.c.bf16 %v1216, %v1214
    %v1329 = vpack.c.bf16 %v1219, %v1217
    %v1330 = vpack.c.bf16 %v1220, %v1218
    %v1331 = vpack.c.bf16 %v1223, %v1221
    %v1332 = vpack.c.bf16 %v1224, %v1222
    %v1333 = vpack.c.bf16 %v1227, %v1225
    %v1334 = vpack.c.bf16 %v1228, %v1226
    %v1335 = vpack.c.bf16 %v1231, %v1229
    %v1336 = vpack.c.bf16 %v1232, %v1230
    %v1337 = vpack.c.bf16 %v1235, %v1233
    %v1338 = vpack.c.bf16 %v1236, %v1234
    %v1339 = vpack.c.bf16 %v1239, %v1237
    %v1340 = vpack.c.bf16 %v1240, %v1238
    %v1341 = vpack.c.bf16 %v1243, %v1241
    %v1342 = vpack.c.bf16 %v1244, %v1242
    %v1343 = vpack.c.bf16 %v1247, %v1245
    %v1344 = vpack.c.bf16 %v1248, %v1246
    %v1345 = vpack.c.bf16 %v1251, %v1249
    %v1346 = vpack.c.bf16 %v1252, %v1250
    %v1347 = vpack.c.bf16 %v1255, %v1253
    %v1348 = vpack.c.bf16 %v1256, %v1254
    %v1349 = vpack.c.bf16 %v1259, %v1257
    %v1350 = vpack.c.bf16 %v1260, %v1258
    %v1351 = vpack.c.bf16 %v1263, %v1261
    %v1352 = vpack.c.bf16 %v1264, %v1262
    %v1353 = vpack.c.bf16 %v1267, %v1265
    %v1354 = vpack.c.bf16 %v1268, %v1266
    %v1355 = vpack.c.bf16 %v1271, %v1269
    %v1356 = vpack.c.bf16 %v1272, %v1270
    %v1357 = vpack.c.bf16 %v1275, %v1273
    %v1358 = vpack.c.bf16 %v1276, %v1274
    %v1359 = vpack.c.bf16 %v1279, %v1277
    %v1360 = vpack.c.bf16 %v1280, %v1278
    %v1361 = vpack.c.bf16 %v1283, %v1281
    %v1362 = vpack.c.bf16 %v1284, %v1282
    %v1363 = vpack.c.bf16 %v1287, %v1285
    %v1364 = vpack.c.bf16 %v1288, %v1286
    %v1365 = vpack.c.bf16 %v1291, %v1289
    %v1366 = vpack.c.bf16 %v1292, %v1290
    %v1367 = vpack.c.bf16 %v1295, %v1293
    %v1368 = vpack.c.bf16 %v1296, %v1294
    %v1369 = vpack.c.bf16 %v1299, %v1297
    %v1370 = vpack.c.bf16 %v1300, %v1298
    %v1371 = vpack.c.bf16 %v1303, %v1301
    %v1372 = vpack.c.bf16 %v1304, %v1302
    %v1373 = vpack.c.bf16 %v1307, %v1305
    %v1374 = vpack.c.bf16 %v1308, %v1306
    %v1375 = vpack.c.bf16 %v1311, %v1309
    %v1376 = vpack.c.bf16 %v1312, %v1310
    %v1393 = vunpack.c.l.b16 %v799
    %v1394 = vunpack.c.h.b16 %v799
    %v1395 = vunpack.c.l.b16 %v800
    %v1396 = vunpack.c.h.b16 %v800
    %v1397 = vunpack.c.l.b16 %v801
    %v1398 = vunpack.c.h.b16 %v801
    %v1399 = vunpack.c.l.b16 %v802
    %v1400 = vunpack.c.h.b16 %v802
    %v1401 = vunpack.c.l.b16 %v803
    %v1402 = vunpack.c.h.b16 %v803
    %v1403 = vunpack.c.l.b16 %v804
    %v1404 = vunpack.c.h.b16 %v804
    %v1405 = vunpack.c.l.b16 %v805
    %v1406 = vunpack.c.h.b16 %v805
    %v1407 = vunpack.c.l.b16 %v806
    %v1408 = vunpack.c.h.b16 %v806
    %v1409 = vunpack.c.l.b16 %v807
    %v1410 = vunpack.c.h.b16 %v807
    %v1411 = vunpack.c.l.b16 %v808
    %v1412 = vunpack.c.h.b16 %v808
    %v1413 = vunpack.c.l.b16 %v809
    %v1414 = vunpack.c.h.b16 %v809
    %v1415 = vunpack.c.l.b16 %v810
    %v1416 = vunpack.c.h.b16 %v810
    %v1417 = vunpack.c.l.b16 %v811
    %v1418 = vunpack.c.h.b16 %v811
    %v1419 = vunpack.c.l.b16 %v812
    %v1420 = vunpack.c.h.b16 %v812
    %v1421 = vunpack.c.l.b16 %v813
    %v1422 = vunpack.c.h.b16 %v813
    %v1423 = vunpack.c.l.b16 %v814
    %v1424 = vunpack.c.h.b16 %v814
    %v1425 = vpack.c.b16 %v1397, %v1393
    %v1426 = vpack.c.b16 %v1398, %v1394
    %v1427 = vpack.c.b16 %v1399, %v1395
    %v1428 = vpack.c.b16 %v1400, %v1396
    %v1429 = vpack.c.b16 %v1405, %v1401
    %v1430 = vpack.c.b16 %v1406, %v1402
    %v1431 = vpack.c.b16 %v1407, %v1403
    %v1432 = vpack.c.b16 %v1408, %v1404
    %v1433 = vpack.c.b16 %v1413, %v1409
    %v1434 = vpack.c.b16 %v1414, %v1410
    %v1435 = vpack.c.b16 %v1415, %v1411
    %v1436 = vpack.c.b16 %v1416, %v1412
    %v1437 = vpack.c.b16 %v1421, %v1417
    %v1438 = vpack.c.b16 %v1422, %v1418
    %v1439 = vpack.c.b16 %v1423, %v1419
    %v1440 = vpack.c.b16 %v1424, %v1420
    %1457 = vmatprep.subr.bf16.mxu0 %v1314
    %1458 = vmatpush1.bf16.msra.mxu0 %v1313
    %1459 = vmatprep.subr.bf16.mxu0 %v1316
    %1460 = vmatpush1.bf16.msra.mxu0 %v1315
    %1461 = vmatprep.subr.bf16.mxu0 %v1318
    %1462 = vmatpush1.bf16.msra.mxu0 %v1317
    %1463 = vmatprep.subr.bf16.mxu0 %v1320
    %1464 = vmatpush1.bf16.msra.mxu0 %v1319
    %1465 = vmatprep.subr.bf16.mxu0 %v1322
    %1466 = vmatpush1.bf16.msra.mxu0 %v1321
    %1467 = vmatprep.subr.bf16.mxu0 %v1324
    %1468 = vmatpush1.bf16.msra.mxu0 %v1323
    %1469 = vmatprep.subr.bf16.mxu0 %v1326
    %1470 = vmatpush1.bf16.msra.mxu0 %v1325
    %1471 = vmatprep.subr.bf16.mxu0 %v1328
    %1472 = vmatpush1.bf16.msra.mxu0 %v1327
    %1473 = vmatprep.subr.bf16.mxu0 %v1330
    %1474 = vmatpush1.bf16.msra.mxu0 %v1329
    %1475 = vmatprep.subr.bf16.mxu0 %v1332
    %1476 = vmatpush1.bf16.msra.mxu0 %v1331
    %1477 = vmatprep.subr.bf16.mxu0 %v1334
    %1478 = vmatpush1.bf16.msra.mxu0 %v1333
    %1479 = vmatprep.subr.bf16.mxu0 %v1336
    %1480 = vmatpush1.bf16.msra.mxu0 %v1335
    %1481 = vmatprep.subr.bf16.mxu0 %v1338
    %1482 = vmatpush1.bf16.msra.mxu0 %v1337
    %1483 = vmatprep.subr.bf16.mxu0 %v1340
    %1484 = vmatpush1.bf16.msra.mxu0 %v1339
    %1485 = vmatprep.subr.bf16.mxu0 %v1342
    %1486 = vmatpush1.bf16.msra.mxu0 %v1341
    %1487 = vmatprep.subr.bf16.mxu0 %v1344
    %1488 = vmatpush1.bf16.msra.mxu0 %v1343
    %1489 = vmatprep.mubr.bf16.mxu0 %v1426
    %1490 = vmatmul.mubr.bf16.gmra.mrb[0].mxu0 %v1425
    %v1491 = vpop.f32.mrb[0].mxu0
    %v1492 = vadd.f32 0.0, %v1491
    %v1493 = vpop.f32.mrb[0].mxu0
    %v1494 = vadd.f32 0.0, %v1493
    %v1495 = vpop.f32.mrb[0].mxu0
    %v1496 = vadd.f32 0.0, %v1495
    %v1497 = vpop.f32.mrb[0].mxu0
    %v1498 = vadd.f32 0.0, %v1497
    %1499 = vmatprep.mubr.bf16.mxu0 %v1430
    %1500 = vmatmul.mubr.bf16.gmra.mrb[0].mxu0 %v1429
    %v1501 = vpop.f32.mrb[0].mxu0
    %v1502 = vadd.f32 0.0, %v1501
    %v1503 = vpop.f32.mrb[0].mxu0
    %v1504 = vadd.f32 0.0, %v1503
    %v1505 = vpop.f32.mrb[0].mxu0
    %v1506 = vadd.f32 0.0, %v1505
    %v1507 = vpop.f32.mrb[0].mxu0
    %v1508 = vadd.f32 0.0, %v1507
    %1509 = vmatprep.mubr.bf16.mxu0 %v1434
    %1510 = vmatmul.mubr.bf16.gmra.mrb[0].mxu0 %v1433
    %v1511 = vpop.f32.mrb[0].mxu0
    %v1512 = vadd.f32 0.0, %v1511
    %v1513 = vpop.f32.mrb[0].mxu0
    %v1514 = vadd.f32 0.0, %v1513
    %v1515 = vpop.f32.mrb[0].mxu0
    %v1516 = vadd.f32 0.0, %v1515
    %v1517 = vpop.f32.mrb[0].mxu0
    %v1518 = vadd.f32 0.0, %v1517
    %1519 = vmatprep.mubr.bf16.mxu0 %v1438
    %1520 = vmatmul.mubr.bf16.gmra.mrb[0].mxu0 %v1437
    %v1521 = vpop.f32.mrb[0].mxu0
    %v1522 = vadd.f32 0.0, %v1521
    %v1523 = vpop.f32.mrb[0].mxu0
    %v1524 = vadd.f32 0.0, %v1523
    %v1525 = vpop.f32.mrb[0].mxu0
    %v1526 = vadd.f32 0.0, %v1525
    %v1527 = vpop.f32.mrb[0].mxu0
    %v1528 = vadd.f32 0.0, %v1527
    %1529 = vdwg.mxu0
    %1530 = vmatprep.subr.bf16.mxu0 %v1346
    %1531 = vmatpush1.bf16.msra.mxu0 %v1345
    %1532 = vmatprep.subr.bf16.mxu0 %v1348
    %1533 = vmatpush1.bf16.msra.mxu0 %v1347
    %1534 = vmatprep.subr.bf16.mxu0 %v1350
    %1535 = vmatpush1.bf16.msra.mxu0 %v1349
    %1536 = vmatprep.subr.bf16.mxu0 %v1352
    %1537 = vmatpush1.bf16.msra.mxu0 %v1351
    %1538 = vmatprep.subr.bf16.mxu0 %v1354
    %1539 = vmatpush1.bf16.msra.mxu0 %v1353
    %1540 = vmatprep.subr.bf16.mxu0 %v1356
    %1541 = vmatpush1.bf16.msra.mxu0 %v1355
    %1542 = vmatprep.subr.bf16.mxu0 %v1358
    %1543 = vmatpush1.bf16.msra.mxu0 %v1357
    %1544 = vmatprep.subr.bf16.mxu0 %v1360
    %1545 = vmatpush1.bf16.msra.mxu0 %v1359
    %1546 = vmatprep.subr.bf16.mxu0 %v1362
    %1547 = vmatpush1.bf16.msra.mxu0 %v1361
    %1548 = vmatprep.subr.bf16.mxu0 %v1364
    %1549 = vmatpush1.bf16.msra.mxu0 %v1363
    %1550 = vmatprep.subr.bf16.mxu0 %v1366
    %1551 = vmatpush1.bf16.msra.mxu0 %v1365
    %1552 = vmatprep.subr.bf16.mxu0 %v1368
    %1553 = vmatpush1.bf16.msra.mxu0 %v1367
    %1554 = vmatprep.subr.bf16.mxu0 %v1370
    %1555 = vmatpush1.bf16.msra.mxu0 %v1369
    %1556 = vmatprep.subr.bf16.mxu0 %v1372
    %1557 = vmatpush1.bf16.msra.mxu0 %v1371
    %1558 = vmatprep.subr.bf16.mxu0 %v1374
    %1559 = vmatpush1.bf16.msra.mxu0 %v1373
    %1560 = vmatprep.subr.bf16.mxu0 %v1376
    %1561 = vmatpush1.bf16.msra.mxu0 %v1375
    %1562 = vmatprep.mubr.bf16.mxu0 %v1428
    %1563 = vmatmul.mubr.bf16.gmra.mrb[0].mxu0 %v1427
    %v1564 = vpop.f32.mrb[0].mxu0
    %v1565 = vadd.f32 %v1492, %v1564
    %v1566 = vpop.f32.mrb[0].mxu0
    %v1567 = vadd.f32 %v1494, %v1566
    %v1568 = vpop.f32.mrb[0].mxu0
    %v1569 = vadd.f32 %v1496, %v1568
    %v1570 = vpop.f32.mrb[0].mxu0
    %v1571 = vadd.f32 %v1498, %v1570
    %1572 = vmatprep.mubr.bf16.mxu0 %v1432
    %1573 = vmatmul.mubr.bf16.gmra.mrb[0].mxu0 %v1431
    %v1574 = vpop.f32.mrb[0].mxu0
    %v1575 = vadd.f32 %v1502, %v1574
    %v1576 = vpop.f32.mrb[0].mxu0
    %v1577 = vadd.f32 %v1504, %v1576
    %v1578 = vpop.f32.mrb[0].mxu0
    %v1579 = vadd.f32 %v1506, %v1578
    %v1580 = vpop.f32.mrb[0].mxu0
    %v1581 = vadd.f32 %v1508, %v1580
    %1582 = vmatprep.mubr.bf16.mxu0 %v1436
    %1583 = vmatmul.mubr.bf16.gmra.mrb[0].mxu0 %v1435
    %v1584 = vpop.f32.mrb[0].mxu0
    %v1585 = vadd.f32 %v1512, %v1584
    %v1586 = vpop.f32.mrb[0].mxu0
    %v1587 = vadd.f32 %v1514, %v1586
    %v1588 = vpop.f32.mrb[0].mxu0
    %v1589 = vadd.f32 %v1516, %v1588
    %v1590 = vpop.f32.mrb[0].mxu0
    %v1591 = vadd.f32 %v1518, %v1590
    %1592 = vmatprep.mubr.bf16.mxu0 %v1440
    %1593 = vmatmul.mubr.bf16.gmra.mrb[0].mxu0 %v1439
    %v1594 = vpop.f32.mrb[0].mxu0
    %v1595 = vadd.f32 %v1522, %v1594
    %v1596 = vpop.f32.mrb[0].mxu0
    %v1597 = vadd.f32 %v1524, %v1596
    %v1598 = vpop.f32.mrb[0].mxu0
    %v1599 = vadd.f32 %v1526, %v1598
    %v1600 = vpop.f32.mrb[0].mxu0
    %v1601 = vadd.f32 %v1528, %v1600
    %1602 = vdwg.mxu0
    %1603 = vmatprep.subr.bf16.mxu0 %v736
    %1604 = vmatpush1.bf16.msra.mxu0 %v735
    %1605 = vmatprep.subr.bf16.mxu0 %v738
    %1606 = vmatpush1.bf16.msra.mxu0 %v737
    %1607 = vmatprep.subr.bf16.mxu0 %v740
    %1608 = vmatpush1.bf16.msra.mxu0 %v739
    %1609 = vmatprep.subr.bf16.mxu0 %v742
    %1610 = vmatpush1.bf16.msra.mxu0 %v741
    %1611 = vmatprep.subr.bf16.mxu0 %v744
    %1612 = vmatpush1.bf16.msra.mxu0 %v743
    %1613 = vmatprep.subr.bf16.mxu0 %v746
    %1614 = vmatpush1.bf16.msra.mxu0 %v745
    %1615 = vmatprep.subr.bf16.mxu0 %v748
    %1616 = vmatpush1.bf16.msra.mxu0 %v747
    %1617 = vmatprep.subr.bf16.mxu0 %v750
    %1618 = vmatpush1.bf16.msra.mxu0 %v749
    %1619 = vmatprep.subr.bf16.mxu0 %v752
    %1620 = vmatpush1.bf16.msra.mxu0 %v751
    %1621 = vmatprep.subr.bf16.mxu0 %v754
    %1622 = vmatpush1.bf16.msra.mxu0 %v753
    %1623 = vmatprep.subr.bf16.mxu0 %v756
    %1624 = vmatpush1.bf16.msra.mxu0 %v755
    %1625 = vmatprep.subr.bf16.mxu0 %v758
    %1626 = vmatpush1.bf16.msra.mxu0 %v757
    %1627 = vmatprep.subr.bf16.mxu0 %v760
    %1628 = vmatpush1.bf16.msra.mxu0 %v759
    %1629 = vmatprep.subr.bf16.mxu0 %v762
    %1630 = vmatpush1.bf16.msra.mxu0 %v761
    %1631 = vmatprep.subr.bf16.mxu0 %v764
    %1632 = vmatpush1.bf16.msra.mxu0 %v763
    %1633 = vmatprep.subr.bf16.mxu0 %v766
    %1634 = vmatpush1.bf16.msra.mxu0 %v765
    %1635 = vmatprep.mubr.bf16.mxu0 %v1426
    %1636 = vmatmul.mubr.bf16.gmra.mrb[0].mxu0 %v1425
    %v1637 = vpop.f32.mrb[0].mxu0
    %v1638 = vadd.f32 %v1565, %v1637
    %v1639 = vpop.f32.mrb[0].mxu0
    %v1640 = vadd.f32 %v1567, %v1639
    %v1641 = vpop.f32.mrb[0].mxu0
    %v1642 = vadd.f32 %v1569, %v1641
    %v1643 = vpop.f32.mrb[0].mxu0
    %v1644 = vadd.f32 %v1571, %v1643
    %1645 = vmatprep.mubr.bf16.mxu0 %v1430
    %1646 = vmatmul.mubr.bf16.gmra.mrb[0].mxu0 %v1429
    %v1647 = vpop.f32.mrb[0].mxu0
    %v1648 = vadd.f32 %v1575, %v1647
    %v1649 = vpop.f32.mrb[0].mxu0
    %v1650 = vadd.f32 %v1577, %v1649
    %v1651 = vpop.f32.mrb[0].mxu0
    %v1652 = vadd.f32 %v1579, %v1651
    %v1653 = vpop.f32.mrb[0].mxu0
    %v1654 = vadd.f32 %v1581, %v1653
    %1655 = vmatprep.mubr.bf16.mxu0 %v1434
    %1656 = vmatmul.mubr.bf16.gmra.mrb[0].mxu0 %v1433
    %v1657 = vpop.f32.mrb[0].mxu0
    %v1658 = vadd.f32 %v1585, %v1657
    %v1659 = vpop.f32.mrb[0].mxu0
    %v1660 = vadd.f32 %v1587, %v1659
    %v1661 = vpop.f32.mrb[0].mxu0
    %v1662 = vadd.f32 %v1589, %v1661
    %v1663 = vpop.f32.mrb[0].mxu0
    %v1664 = vadd.f32 %v1591, %v1663
    %1665 = vmatprep.mubr.bf16.mxu0 %v1438
    %1666 = vmatmul.mubr.bf16.gmra.mrb[0].mxu0 %v1437
    %v1667 = vpop.f32.mrb[0].mxu0
    %v1668 = vadd.f32 %v1595, %v1667
    %v1669 = vpop.f32.mrb[0].mxu0
    %v1670 = vadd.f32 %v1597, %v1669
    %v1671 = vpop.f32.mrb[0].mxu0
    %v1672 = vadd.f32 %v1599, %v1671
    %v1673 = vpop.f32.mrb[0].mxu0
    %v1674 = vadd.f32 %v1601, %v1673
    %1675 = vdwg.mxu0
    %1676 = vmatprep.subr.bf16.mxu0 %v768
    %1677 = vmatpush1.bf16.msra.mxu0 %v767
    %1678 = vmatprep.subr.bf16.mxu0 %v770
    %1679 = vmatpush1.bf16.msra.mxu0 %v769
    %1680 = vmatprep.subr.bf16.mxu0 %v772
    %1681 = vmatpush1.bf16.msra.mxu0 %v771
    %1682 = vmatprep.subr.bf16.mxu0 %v774
    %1683 = vmatpush1.bf16.msra.mxu0 %v773
    %1684 = vmatprep.subr.bf16.mxu0 %v776
    %1685 = vmatpush1.bf16.msra.mxu0 %v775
    %1686 = vmatprep.subr.bf16.mxu0 %v778
    %1687 = vmatpush1.bf16.msra.mxu0 %v777
    %1688 = vmatprep.subr.bf16.mxu0 %v780
    %1689 = vmatpush1.bf16.msra.mxu0 %v779
    %1690 = vmatprep.subr.bf16.mxu0 %v782
    %1691 = vmatpush1.bf16.msra.mxu0 %v781
    %1692 = vmatprep.subr.bf16.mxu0 %v784
    %1693 = vmatpush1.bf16.msra.mxu0 %v783
    %1694 = vmatprep.subr.bf16.mxu0 %v786
    %1695 = vmatpush1.bf16.msra.mxu0 %v785
    %1696 = vmatprep.subr.bf16.mxu0 %v788
    %1697 = vmatpush1.bf16.msra.mxu0 %v787
    %1698 = vmatprep.subr.bf16.mxu0 %v790
    %1699 = vmatpush1.bf16.msra.mxu0 %v789
    %1700 = vmatprep.subr.bf16.mxu0 %v792
    %1701 = vmatpush1.bf16.msra.mxu0 %v791
    %1702 = vmatprep.subr.bf16.mxu0 %v794
    %1703 = vmatpush1.bf16.msra.mxu0 %v793
    %1704 = vmatprep.subr.bf16.mxu0 %v796
    %1705 = vmatpush1.bf16.msra.mxu0 %v795
    %1706 = vmatprep.subr.bf16.mxu0 %v798
    %1707 = vmatpush1.bf16.msra.mxu0 %v797
    %1708 = vmatprep.mubr.bf16.mxu0 %v1428
    %1709 = vmatmul.mubr.bf16.gmra.mrb[0].mxu0 %v1427
    %v1710 = vpop.f32.mrb[0].mxu0
    %v1711 = vadd.f32 %v1638, %v1710
    %v1712 = vpop.f32.mrb[0].mxu0
    %v1713 = vadd.f32 %v1640, %v1712
    %v1714 = vpop.f32.mrb[0].mxu0
    %v1715 = vadd.f32 %v1642, %v1714
    %v1716 = vpop.f32.mrb[0].mxu0
    %v1717 = vadd.f32 %v1644, %v1716
    %1718 = vmatprep.mubr.bf16.mxu0 %v1432
    %1719 = vmatmul.mubr.bf16.gmra.mrb[0].mxu0 %v1431
    %v1720 = vpop.f32.mrb[0].mxu0
    %v1721 = vadd.f32 %v1648, %v1720
    %v1722 = vpop.f32.mrb[0].mxu0
    %v1723 = vadd.f32 %v1650, %v1722
    %v1724 = vpop.f32.mrb[0].mxu0
    %v1725 = vadd.f32 %v1652, %v1724
    %v1726 = vpop.f32.mrb[0].mxu0
    %v1727 = vadd.f32 %v1654, %v1726
    %1728 = vmatprep.mubr.bf16.mxu0 %v1436
    %1729 = vmatmul.mubr.bf16.gmra.mrb[0].mxu0 %v1435
    %v1730 = vpop.f32.mrb[0].mxu0
    %v1731 = vadd.f32 %v1658, %v1730
    %v1732 = vpop.f32.mrb[0].mxu0
    %v1733 = vadd.f32 %v1660, %v1732
    %v1734 = vpop.f32.mrb[0].mxu0
    %v1735 = vadd.f32 %v1662, %v1734
    %v1736 = vpop.f32.mrb[0].mxu0
    %v1737 = vadd.f32 %v1664, %v1736
    %1738 = vmatprep.mubr.bf16.mxu0 %v1440
    %1739 = vmatmul.mubr.bf16.gmra.mrb[0].mxu0 %v1439
    %v1740 = vpop.f32.mrb[0].mxu0
    %v1741 = vadd.f32 %v1668, %v1740
    %v1742 = vpop.f32.mrb[0].mxu0
    %v1743 = vadd.f32 %v1670, %v1742
    %v1744 = vpop.f32.mrb[0].mxu0
    %v1745 = vadd.f32 %v1672, %v1744
    %v1746 = vpop.f32.mrb[0].mxu0
    %v1747 = vadd.f32 %v1674, %v1746
    %1748 = vdwg.mxu0
    %vm1749 = vcmp.gt.f32.partialorder %v1711, 1.5
    %vm1750 = vcmp.gt.f32.partialorder %v1713, 1.5
    %vm1751 = vcmp.gt.f32.partialorder %v1715, 1.5
    %vm1752 = vcmp.gt.f32.partialorder %v1717, 1.5
    %vm1753 = vcmp.gt.f32.partialorder %v1721, 1.5
    %vm1754 = vcmp.gt.f32.partialorder %v1723, 1.5
    %vm1755 = vcmp.gt.f32.partialorder %v1725, 1.5
    %vm1756 = vcmp.gt.f32.partialorder %v1727, 1.5
    %vm1757 = vcmp.gt.f32.partialorder %v1731, 1.5
    %vm1758 = vcmp.gt.f32.partialorder %v1733, 1.5
    %vm1759 = vcmp.gt.f32.partialorder %v1735, 1.5
    %vm1760 = vcmp.gt.f32.partialorder %v1737, 1.5
    %vm1761 = vcmp.gt.f32.partialorder %v1741, 1.5
    %vm1762 = vcmp.gt.f32.partialorder %v1743, 1.5
    %vm1763 = vcmp.gt.f32.partialorder %v1745, 1.5
    %vm1764 = vcmp.gt.f32.partialorder %v1747, 1.5
    %v1765 = vsel %vm1749, 1, 0
    %v1766 = vsel %vm1750, 1, 0
    %v1767 = vsel %vm1751, 1, 0
    %v1768 = vsel %vm1752, 1, 0
    %v1769 = vsel %vm1753, 1, 0
    %v1770 = vsel %vm1754, 1, 0
    %v1771 = vsel %vm1755, 1, 0
    %v1772 = vsel %vm1756, 1, 0
    %v1773 = vsel %vm1757, 1, 0
    %v1774 = vsel %vm1758, 1, 0
    %v1775 = vsel %vm1759, 1, 0
    %v1776 = vsel %vm1760, 1, 0
    %v1777 = vsel %vm1761, 1, 0
    %v1778 = vsel %vm1762, 1, 0
    %v1779 = vsel %vm1763, 1, 0
    %v1780 = vsel %vm1764, 1, 0
    %v1781 = vcvt.s32.f32 %v1765
    %v1782 = vcvt.s32.f32 %v1766
    %v1783 = vcvt.s32.f32 %v1767
    %v1784 = vcvt.s32.f32 %v1768
    %v1785 = vcvt.s32.f32 %v1769
    %v1786 = vcvt.s32.f32 %v1770
    %v1787 = vcvt.s32.f32 %v1771
    %v1788 = vcvt.s32.f32 %v1772
    %v1789 = vcvt.s32.f32 %v1773
    %v1790 = vcvt.s32.f32 %v1774
    %v1791 = vcvt.s32.f32 %v1775
    %v1792 = vcvt.s32.f32 %v1776
    %v1793 = vcvt.s32.f32 %v1777
    %v1794 = vcvt.s32.f32 %v1778
    %v1795 = vcvt.s32.f32 %v1779
    %v1796 = vcvt.s32.f32 %v1780
    %v1797 = vld [vmem:[%s4] sm:$0xff]
    %v1798 = vld [vmem:[%s4 + $0x8] sm:$0xff]
    %v1799 = vld [vmem:[%s4 + $0x10] sm:$0xff]
    %v1800 = vld [vmem:[%s4 + $0x18] sm:$0xff]
    %v1801 = vld [vmem:[%s4 + $0x20] sm:$0xff]
    %v1802 = vld [vmem:[%s4 + $0x28] sm:$0xff]
    %v1803 = vld [vmem:[%s4 + $0x30] sm:$0xff]
    %v1804 = vld [vmem:[%s4 + $0x38] sm:$0xff]
    %1806 = vset.pattern.permute.xlu0 0
    %1807 = vperm.xlu0 %1806, %v1797
    %v1808 = vpop.permute.xlu0 %1807
    %1811 = vset.pattern.permute.xlu0 0
    %1812 = vperm.xlu0 %1811, %v1798
    %v1813 = vpop.permute.xlu0 %1812
    %1816 = vset.pattern.permute.xlu0 0
    %1817 = vperm.xlu0 %1816, %v1799
    %v1818 = vpop.permute.xlu0 %1817
    %1821 = vset.pattern.permute.xlu0 0
    %1822 = vperm.xlu0 %1821, %v1800
    %v1823 = vpop.permute.xlu0 %1822
    %1826 = vset.pattern.permute.xlu0 0
    %1827 = vperm.xlu0 %1826, %v1801
    %v1828 = vpop.permute.xlu0 %1827
    %1831 = vset.pattern.permute.xlu0 0
    %1832 = vperm.xlu0 %1831, %v1802
    %v1833 = vpop.permute.xlu0 %1832
    %1836 = vset.pattern.permute.xlu0 0
    %1837 = vperm.xlu0 %1836, %v1803
    %v1838 = vpop.permute.xlu0 %1837
    %1841 = vset.pattern.permute.xlu0 0
    %1842 = vperm.xlu0 %1841, %v1804
    %v1843 = vpop.permute.xlu0 %1842
    %v1845 = vmul.f32 %v1781, %v1808
    %v1846 = vmul.f32 %v1782, %v1808
    %v1847 = vmul.f32 %v1783, %v1813
    %v1848 = vmul.f32 %v1784, %v1813
    %v1849 = vmul.f32 %v1785, %v1818
    %v1850 = vmul.f32 %v1786, %v1818
    %v1851 = vmul.f32 %v1787, %v1823
    %v1852 = vmul.f32 %v1788, %v1823
    %v1853 = vmul.f32 %v1789, %v1828
    %v1854 = vmul.f32 %v1790, %v1828
    %v1855 = vmul.f32 %v1791, %v1833
    %v1856 = vmul.f32 %v1792, %v1833
    %v1857 = vmul.f32 %v1793, %v1838
    %v1858 = vmul.f32 %v1794, %v1838
    %v1859 = vmul.f32 %v1795, %v1843
    %v1860 = vmul.f32 %v1796, %v1843
    %v1861 = vadd.f32 %v1845, %v1847
    %v1862 = vadd.f32 %v1861, %v1849
    %v1863 = vadd.f32 %v1862, %v1851
    %v1864 = vadd.f32 %v1863, %v1853
    %v1865 = vadd.f32 %v1864, %v1855
    %v1866 = vadd.f32 %v1865, %v1857
    %v1867 = vadd.f32 %v1866, %v1859
    %v1868 = vadd.f32 %v1846, %v1848
    %v1869 = vadd.f32 %v1868, %v1850
    %v1870 = vadd.f32 %v1869, %v1852
    %v1871 = vadd.f32 %v1870, %v1854
    %v1872 = vadd.f32 %v1871, %v1856
    %v1873 = vadd.f32 %v1872, %v1858
    %v1874 = vadd.f32 %v1873, %v1860
    %v1875 = vld [vmem:[%s5] sm:$0xff]
    %1877 = vset.pattern.permute.xlu0 0
    %1878 = vperm.xlu0 %1877, %v1875
    %v1879 = vpop.permute.xlu0 %1878
    %v1881 = vadd.f32 %v1867, %v1879
    %v1882 = vadd.f32 %v1874, %v1879
    %1883 = vst [vmem:[#allocation7] sm:$0xff] %v1881
    %1884 = vst [vmem:[#allocation7 + $0x8] sm:$0xff] %v1882
    // Predicated region
    $region26: #{tpu_custom_call.1} parent=1 // pred_check
      _
    $region27: #{tpu_custom_call.1} parent=1 // pred_check_branch
      %1886 = sbr.rel (0) target = $region29
    $region28: #{tpu_custom_call.1} parent=1 // pred_region
      %s1888 = ssub.s32 256, 256
      %1889 = vsyncadd [#allocation6], %s1888
      %s1891 = sshll.u32 [#allocation7], 4
      %s1892 = int_to_ptr.vmem [resolvable:$true] %s1891
      %1894 = dma.vmem_to_hbm [thread:$0]  %s1892, 256, %s6, [#allocation6]
    $region29: #{tpu_custom_call.1} parent=1 // pred_fallthru
      _
    // Predicated region
    $region30: #{tpu_custom_call.1} parent=1 // pred_check
      _
    $region31: #{tpu_custom_call.1} parent=1 // pred_check_branch
      %1896 = sbr.rel (0) target = $region33
    $region32: #{tpu_custom_call.1} parent=1 // pred_region
      %1897 = dma.done [#allocation6], 256
    $region33: #{tpu_custom_call.1} parent=1 // pred_fallthru
      _
    %1898 = vsyncpa [#allocation5], 1
    %1899 = vsyncpa [#allocation6], 1

// kernel: tpu_custom_call.1
$region0: #{tpu_custom_call.1}
  #allocation0 [shape = 'u32[]', space=smem, size = 0x4, offset = 0x4, fixed_abs, tag = 'smem constant byte address 0x4 - core index']
  #allocation1 [shape = 'u32[144,128]{1,0:T(1,128)}', space=vmem, size = 0x12000, scoped, tag = 'internal scratch']
  #allocation2 [shape = 's32[1]{0}', space=sflag, size = 0x4, scoped, tag = 'scoped memory for tpu_custom_call.1']
  #allocation3 [shape = 'u8[512]{0}', space=smem, size = 0x200, scoped, tag = 'prefetched SMEM operand 0']
  %s0 = inlined_call_operand.vmem [shape: s32[16], index: 0, kind: input, shape index: {}]
  %s1 = inlined_call_operand.vmem [shape: f32[8,8,256], index: 1, kind: input, shape index: {}]
  %s2 = inlined_call_operand.vmem [shape: f32[8,8,1], index: 2, kind: input, shape index: {}]
  %s3 = inlined_call_operand.hbm [shape: bf16[64,512], index: 3, kind: input, shape index: {}]
  %s4 = inlined_call_operand.vmem [shape: f32[8,8,1], index: 4, kind: input, shape index: {}]
  %s5 = inlined_call_operand.vmem [shape: f32[8,1], index: 5, kind: input, shape index: {}]
  %s6 = inlined_call_operand.hbm [shape: f32[8,256], index: 6, kind: output, shape index: {}]
  %s7 = sld [smem:[#allocation0]]
  $region34: #{tpu_custom_call.1} parent=0
    _
  %s9 = ssub.s32 1, %s7
  %s10 = scalar_select 0, %s9, %s7
  %s11 = sshll.u32 %s0, 4
  %s12 = int_to_ptr.vmem [resolvable:$true] %s11
  %14 = dma.vmem_to_smem %s12, 16, [#allocation3], [#allocation2]
  %15 = dma.done [#allocation2], 16
  %16 = sfence
  $region1: #{tpu_custom_call.1} parent=0
    #allocation4 [shape = 'u8[65536]{0}', space=vmem, size = 0x10000, scoped, tag = 'input window, operand 3, single buffered']
    #allocation5 [shape = 's32[1]{0}', space=sflag, size = 0x4, scoped, tag = 'scoped memory for tpu_custom_call.1']
    #allocation6 [shape = 's32[1]{0}', space=sflag, size = 0x4, scoped, tag = 'scoped memory for tpu_custom_call.1']
    #allocation7 [shape = 'u8[8192]{0}', space=vmem, size = 0x2000, scoped, tag = 'output window, operand 0, single buffered']
    %17 = vsyncpa [#allocation5], 0
    %18 = vsyncpa [#allocation6], 0
    // Predicated region
    $region2: #{tpu_custom_call.1} parent=1 // pred_check
      _
    $region3: #{tpu_custom_call.1} parent=1 // pred_check_branch
      %20 = sbr.rel (0) target = $region5
    $region4: #{tpu_custom_call.1} parent=1 // pred_region
      _
    $region5: #{tpu_custom_call.1} parent=1 // pred_fallthru
      _
    // Predicated region
    $region6: #{tpu_custom_call.1} parent=1 // pred_check
      _
    $region7: #{tpu_custom_call.1} parent=1 // pred_check_branch
      %22 = sbr.rel (0) target = $region9
    $region8: #{tpu_custom_call.1} parent=1 // pred_region
      _
    $region9: #{tpu_custom_call.1} parent=1 // pred_fallthru
      _
    // Predicated region
    $region10: #{tpu_custom_call.1} parent=1 // pred_check
      _
    $region11: #{tpu_custom_call.1} parent=1 // pred_check_branch
      %24 = sbr.rel (0) target = $region13
    $region12: #{tpu_custom_call.1} parent=1 // pred_region
      %s26 = ssub.s32 2048, 2048
      %27 = vsyncadd [#allocation5], %s26
      %s28 = sshll.u32 [#allocation4], 4
      %s29 = int_to_ptr.vmem [resolvable:$true] %s28
      %34 = dma.hbm_to_vmem [thread:$0]  %s3, 2048, %s29, [#allocation5], 256, 256, 16
    $region13: #{tpu_custom_call.1} parent=1 // pred_fallthru
      _
    // Predicated region
    $region14: #{tpu_custom_call.1} parent=1 // pred_check
      _
    $region15: #{tpu_custom_call.1} parent=1 // pred_check_branch
      %36 = sbr.rel (0) target = $region17
    $region16: #{tpu_custom_call.1} parent=1 // pred_region
      _
    $region17: #{tpu_custom_call.1} parent=1 // pred_fallthru
      _
    // Predicated region
    $region18: #{tpu_custom_call.1} parent=1 // pred_check
      _
    $region19: #{tpu_custom_call.1} parent=1 // pred_check_branch
      %38 = sbr.rel (0) target = $region21
    $region20: #{tpu_custom_call.1} parent=1 // pred_region
      _
    $region21: #{tpu_custom_call.1} parent=1 // pred_fallthru
      _
    // Predicated region
    $region22: #{tpu_custom_call.1} parent=1 // pred_check
      _
    $region23: #{tpu_custom_call.1} parent=1 // pred_check_branch
      %40 = sbr.rel (0) target = $region25
    $region24: #{tpu_custom_call.1} parent=1 // pred_region
      %41 = dma.done [#allocation5], 2048
    $region25: #{tpu_custom_call.1} parent=1 // pred_fallthru
      _
    %v42 = vld [vmem:[%s1] sm:$0xff]
    %v43 = vld [vmem:[%s1 + $0x8] sm:$0xff]
    %v44 = vld [vmem:[%s2] sm:$0xff]
    %46 = vset.pattern.permute.xlu0 0
    %47 = vperm.xlu0 %46, %v44
    %v48 = vpop.permute.xlu0 %47
    %vm50 = vcmp.ge.f32.partialorder %v42, %v48
    %vm51 = vcmp.ge.f32.partialorder %v43, %v48
    %s52 = sld [smem:[#allocation3]]
    %v53 = vstv %s52
    %v54 = vsel %vm50, %v53, 0
    %v55 = vsel %vm51, %v53, 0
    %s56 = sld [smem:[#allocation3 + $0x8]]
    %v57 = vstv %s56
    %v58 = vsel %vm50, %v57, 0
    %v59 = vsel %vm51, %v57, 0
    %s60 = scalar_lea.vmem %s1, 16
    %v61 = vld [vmem:[%s60] sm:$0xff]
    %v62 = vld [vmem:[%s60 + $0x8] sm:$0xff]
    %s63 = scalar_lea.vmem %s2, 8
    %v64 = vld [vmem:[%s63] sm:$0xff]
    %66 = vset.pattern.permute.xlu0 0
    %67 = vperm.xlu0 %66, %v64
    %v68 = vpop.permute.xlu0 %67
    %vm70 = vcmp.ge.f32.partialorder %v61, %v68
    %vm71 = vcmp.ge.f32.partialorder %v62, %v68
    %s72 = sld [smem:[#allocation3 + $0x1]]
    %v73 = vstv %s72
    %v74 = vsel %vm70, %v73, 0
    %v75 = vsel %vm71, %v73, 0
    %s76 = sld [smem:[#allocation3 + $0x9]]
    %v77 = vstv %s76
    %v78 = vsel %vm70, %v77, 0
    %v79 = vsel %vm71, %v77, 0
    %s80 = scalar_lea.vmem %s1, 32
    %v81 = vld [vmem:[%s80] sm:$0xff]
    %v82 = vld [vmem:[%s80 + $0x8] sm:$0xff]
    %s83 = scalar_lea.vmem %s2, 16
    %v84 = vld [vmem:[%s83] sm:$0xff]
    %86 = vset.pattern.permute.xlu0 0
    %87 = vperm.xlu0 %86, %v84
    %v88 = vpop.permute.xlu0 %87
    %vm90 = vcmp.ge.f32.partialorder %v81, %v88
    %vm91 = vcmp.ge.f32.partialorder %v82, %v88
    %s92 = sld [smem:[#allocation3 + $0x2]]
    %v93 = vstv %s92
    %v94 = vsel %vm90, %v93, 0
    %v95 = vsel %vm91, %v93, 0
    %v96 = vxor.u32 %v54, %v94
    %v97 = vxor.u32 %v55, %v95
    %s98 = sld [smem:[#allocation3 + $0xa]]
    %v99 = vstv %s98
    %v100 = vsel %vm90, %v99, 0
    %v101 = vsel %vm91, %v99, 0
    %v102 = vxor.u32 %v58, %v100
    %v103 = vxor.u32 %v59, %v101
    %s104 = scalar_lea.vmem %s1, 48
    %v105 = vld [vmem:[%s104] sm:$0xff]
    %v106 = vld [vmem:[%s104 + $0x8] sm:$0xff]
    %s107 = scalar_lea.vmem %s2, 24
    %v108 = vld [vmem:[%s107] sm:$0xff]
    %110 = vset.pattern.permute.xlu0 0
    %111 = vperm.xlu0 %110, %v108
    %v112 = vpop.permute.xlu0 %111
    %vm114 = vcmp.ge.f32.partialorder %v105, %v112
    %vm115 = vcmp.ge.f32.partialorder %v106, %v112
    %s116 = sld [smem:[#allocation3 + $0x3]]
    %v117 = vstv %s116
    %v118 = vsel %vm114, %v117, 0
    %v119 = vsel %vm115, %v117, 0
    %v120 = vxor.u32 %v74, %v118
    %v121 = vxor.u32 %v75, %v119
    %s122 = sld [smem:[#allocation3 + $0xb]]
    %v123 = vstv %s122
    %v124 = vsel %vm114, %v123, 0
    %v125 = vsel %vm115, %v123, 0
    %v126 = vxor.u32 %v78, %v124
    %v127 = vxor.u32 %v79, %v125
    %s128 = scalar_lea.vmem %s1, 64
    %v129 = vld [vmem:[%s128] sm:$0xff]
    %v130 = vld [vmem:[%s128 + $0x8] sm:$0xff]
    %s131 = scalar_lea.vmem %s2, 32
    %v132 = vld [vmem:[%s131] sm:$0xff]
    %134 = vset.pattern.permute.xlu0 0
    %135 = vperm.xlu0 %134, %v132
    %v136 = vpop.permute.xlu0 %135
    %vm138 = vcmp.ge.f32.partialorder %v129, %v136
    %vm139 = vcmp.ge.f32.partialorder %v130, %v136
    %s140 = sld [smem:[#allocation3 + $0x4]]
    %v141 = vstv %s140
    %v142 = vsel %vm138, %v141, 0
    %v143 = vsel %vm139, %v141, 0
    %v144 = vxor.u32 %v96, %v142
    %v145 = vxor.u32 %v97, %v143
    %s146 = sld [smem:[#allocation3 + $0xc]]
    %v147 = vstv %s146
    %v148 = vsel %vm138, %v147, 0
    %v149 = vsel %vm139, %v147, 0
    %v150 = vxor.u32 %v102, %v148
    %v151 = vxor.u32 %v103, %v149
    %s152 = scalar_lea.vmem %s1, 80
    %v153 = vld [vmem:[%s152] sm:$0xff]
    %v154 = vld [vmem:[%s152 + $0x8] sm:$0xff]
    %s155 = scalar_lea.vmem %s2, 40
    %v156 = vld [vmem:[%s155] sm:$0xff]
    %158 = vset.pattern.permute.xlu0 0
    %159 = vperm.xlu0 %158, %v156
    %v160 = vpop.permute.xlu0 %159
    %vm162 = vcmp.ge.f32.partialorder %v153, %v160
    %vm163 = vcmp.ge.f32.partialorder %v154, %v160
    %s164 = sld [smem:[#allocation3 + $0x5]]
    %v165 = vstv %s164
    %v166 = vsel %vm162, %v165, 0
    %v167 = vsel %vm163, %v165, 0
    %v168 = vxor.u32 %v120, %v166
    %v169 = vxor.u32 %v121, %v167
    %s170 = sld [smem:[#allocation3 + $0xd]]
    %v171 = vstv %s170
    %v172 = vsel %vm162, %v171, 0
    %v173 = vsel %vm163, %v171, 0
    %v174 = vxor.u32 %v126, %v172
    %v175 = vxor.u32 %v127, %v173
    %s176 = scalar_lea.vmem %s1, 96
    %v177 = vld [vmem:[%s176] sm:$0xff]
    %v178 = vld [vmem:[%s176 + $0x8] sm:$0xff]
    %s179 = scalar_lea.vmem %s2, 48
    %v180 = vld [vmem:[%s179] sm:$0xff]
    %182 = vset.pattern.permute.xlu0 0
    %183 = vperm.xlu0 %182, %v180
    %v184 = vpop.permute.xlu0 %183
    %vm186 = vcmp.ge.f32.partialorder %v177, %v184
    %vm187 = vcmp.ge.f32.partialorder %v178, %v184
    %s188 = sld [smem:[#allocation3 + $0x6]]
    %v189 = vstv %s188
    %v190 = vsel %vm186, %v189, 0
    %v191 = vsel %vm187, %v189, 0
    %v192 = vxor.u32 %v144, %v190
    %v193 = vxor.u32 %v145, %v191
    %s194 = sld [smem:[#allocation3 + $0xe]]
    %v195 = vstv %s194
    %v196 = vsel %vm186, %v195, 0
    %v197 = vsel %vm187, %v195, 0
    %v198 = vxor.u32 %v150, %v196
    %v199 = vxor.u32 %v151, %v197
    %s200 = scalar_lea.vmem %s1, 112
    %v201 = vld [vmem:[%s200] sm:$0xff]
    %v202 = vld [vmem:[%s200 + $0x8] sm:$0xff]
    %s203 = scalar_lea.vmem %s2, 56
    %v204 = vld [vmem:[%s203] sm:$0xff]
    %206 = vset.pattern.permute.xlu0 0
    %207 = vperm.xlu0 %206, %v204
    %v208 = vpop.permute.xlu0 %207
    %vm210 = vcmp.ge.f32.partialorder %v201, %v208
    %vm211 = vcmp.ge.f32.partialorder %v202, %v208
    %s212 = sld [smem:[#allocation3 + $0x7]]
    %v213 = vstv %s212
    %v214 = vsel %vm210, %v213, 0
    %v215 = vsel %vm211, %v213, 0
    %v216 = vxor.u32 %v168, %v214
    %v217 = vxor.u32 %v169, %v215
    %s218 = sld [smem:[#allocation3 + $0xf]]
    %v219 = vstv %s218
    %v220 = vsel %vm210, %v219, 0
    %v221 = vsel %vm211, %v219, 0
    %v222 = vxor.u32 %v174, %v220
    %v223 = vxor.u32 %v175, %v221
    %v224 = vxor.u32 %v192, %v216
    %v225 = vxor.u32 %v193, %v217
    %v226 = vxor.u32 %v198, %v222
    %v227 = vxor.u32 %v199, %v223
    %v228 = vlaneseq
    %v229 = vshrl.u32 %v228, 7
    %v230 = vadd.s32 %v229, 8
    %v231 = vadd.s32 %v229, 16
    %v232 = vadd.s32 %v229, 24
    %v233 = vadd.s32 %v229, 32
    %v234 = vadd.s32 %v229, 40
    %v235 = vadd.s32 %v229, 48
    %v236 = vadd.s32 %v229, 56
    %v237 = vcombine.low %v224, %v225
    %v238 = vcombine.high %v224, %v225
    %v240 = vunpack.c.l.s4 1966171168
    %v241 = vunpack.c.0.s8 %v240
    %v242 = vlaneseq
    %v243 = vshrl.u32 %v242, 7
    %v244 = vsub.s32 %v241, %v243
    %v245 = vrot.slane %v237, %v244
    %v247 = vunpack.c.l.s4 1966171168
    %v248 = vunpack.c.0.s8 %v247
    %v249 = vlaneseq
    %v250 = vshrl.u32 %v249, 7
    %v251 = vsub.s32 %v248, %v250
    %v252 = vrot.slane %v238, %v251
    %v253 = vcombine.high %v245, %v245
    %v254 = vcombine.high %v252, %v252
    %v256 = vunpack.c.l.s4 1966171168
    %v257 = vunpack.c.0.s8 %v256
    %v258 = vlaneseq
    %v259 = vshrl.u32 %v258, 7
    %v260 = vsub.s32 %v257, %v259
    %v261 = vrot.slane %v245, %v260
    %v263 = vunpack.c.l.s4 1966171168
    %v264 = vunpack.c.0.s8 %v263
    %v265 = vlaneseq
    %v266 = vshrl.u32 %v265, 7
    %v267 = vsub.s32 %v264, %v266
    %v268 = vrot.slane %v252, %v267
    %v270 = vunpack.c.l.s4 1966171168
    %v271 = vunpack.c.0.s8 %v270
    %v272 = vlaneseq
    %v273 = vshrl.u32 %v272, 7
    %v274 = vsub.s32 %v271, %v273
    %v275 = vrot.slane %v253, %v274
    %v277 = vunpack.c.l.s4 1966171168
    %v278 = vunpack.c.0.s8 %v277
    %v279 = vlaneseq
    %v280 = vshrl.u32 %v279, 7
    %v281 = vsub.s32 %v278, %v280
    %v282 = vrot.slane %v254, %v281
    %v283 = vcombine.high %v261, %v261
    %v284 = vcombine.high %v268, %v268
    %v285 = vcombine.high %v275, %v275
    %v286 = vcombine.high %v282, %v282
    %v287 = vlaneseq
    %v288 = vshrl.u32 %v287, 7
    %v289 = vsub.s32 0, %v288
    %v290 = vrot.slane %v261, %v289
    %v291 = vlaneseq
    %v292 = vshrl.u32 %v291, 7
    %v293 = vsub.s32 1, %v292
    %v294 = vrot.slane %v261, %v293
    %v295 = vlaneseq
    %v296 = vshrl.u32 %v295, 7
    %v297 = vsub.s32 0, %v296
    %v298 = vrot.slane %v275, %v297
    %v299 = vlaneseq
    %v300 = vshrl.u32 %v299, 7
    %v301 = vsub.s32 1, %v300
    %v302 = vrot.slane %v275, %v301
    %v303 = vlaneseq
    %v304 = vshrl.u32 %v303, 7
    %v305 = vsub.s32 0, %v304
    %v306 = vrot.slane %v283, %v305
    %v307 = vlaneseq
    %v308 = vshrl.u32 %v307, 7
    %v309 = vsub.s32 1, %v308
    %v310 = vrot.slane %v283, %v309
    %v311 = vlaneseq
    %v312 = vshrl.u32 %v311, 7
    %v313 = vsub.s32 0, %v312
    %v314 = vrot.slane %v285, %v313
    %v315 = vlaneseq
    %v316 = vshrl.u32 %v315, 7
    %v317 = vsub.s32 1, %v316
    %v318 = vrot.slane %v285, %v317
    %v319 = vlaneseq
    %v320 = vshrl.u32 %v319, 7
    %v321 = vsub.s32 0, %v320
    %v322 = vrot.slane %v268, %v321
    %v323 = vlaneseq
    %v324 = vshrl.u32 %v323, 7
    %v325 = vsub.s32 1, %v324
    %v326 = vrot.slane %v268, %v325
    %v327 = vlaneseq
    %v328 = vshrl.u32 %v327, 7
    %v329 = vsub.s32 0, %v328
    %v330 = vrot.slane %v282, %v329
    %v331 = vlaneseq
    %v332 = vshrl.u32 %v331, 7
    %v333 = vsub.s32 1, %v332
    %v334 = vrot.slane %v282, %v333
    %v335 = vlaneseq
    %v336 = vshrl.u32 %v335, 7
    %v337 = vsub.s32 0, %v336
    %v338 = vrot.slane %v284, %v337
    %v339 = vlaneseq
    %v340 = vshrl.u32 %v339, 7
    %v341 = vsub.s32 1, %v340
    %v342 = vrot.slane %v284, %v341
    %v343 = vlaneseq
    %v344 = vshrl.u32 %v343, 7
    %v345 = vsub.s32 0, %v344
    %v346 = vrot.slane %v286, %v345
    %v347 = vlaneseq
    %v348 = vshrl.u32 %v347, 7
    %v349 = vsub.s32 1, %v348
    %v350 = vrot.slane %v286, %v349
    %vm351 = vcmp.eq.s32.totalorder %v290, %v229
    %vm352 = vcmp.eq.s32.totalorder %v294, %v229
    %vm353 = vcmp.eq.s32.totalorder %v290, %v230
    %vm354 = vcmp.eq.s32.totalorder %v294, %v230
    %vm355 = vcmp.eq.s32.totalorder %v290, %v231
    %vm356 = vcmp.eq.s32.totalorder %v294, %v231
    %vm357 = vcmp.eq.s32.totalorder %v290, %v232
    %vm358 = vcmp.eq.s32.totalorder %v294, %v232
    %vm359 = vcmp.eq.s32.totalorder %v290, %v233
    %vm360 = vcmp.eq.s32.totalorder %v294, %v233
    %vm361 = vcmp.eq.s32.totalorder %v290, %v234
    %vm362 = vcmp.eq.s32.totalorder %v294, %v234
    %vm363 = vcmp.eq.s32.totalorder %v290, %v235
    %vm364 = vcmp.eq.s32.totalorder %v294, %v235
    %vm365 = vcmp.eq.s32.totalorder %v290, %v236
    %vm366 = vcmp.eq.s32.totalorder %v294, %v236
    %vm367 = vcmp.eq.s32.totalorder %v298, %v229
    %vm368 = vcmp.eq.s32.totalorder %v302, %v229
    %vm369 = vcmp.eq.s32.totalorder %v298, %v230
    %vm370 = vcmp.eq.s32.totalorder %v302, %v230
    %vm371 = vcmp.eq.s32.totalorder %v298, %v231
    %vm372 = vcmp.eq.s32.totalorder %v302, %v231
    %vm373 = vcmp.eq.s32.totalorder %v298, %v232
    %vm374 = vcmp.eq.s32.totalorder %v302, %v232
    %vm375 = vcmp.eq.s32.totalorder %v298, %v233
    %vm376 = vcmp.eq.s32.totalorder %v302, %v233
    %vm377 = vcmp.eq.s32.totalorder %v298, %v234
    %vm378 = vcmp.eq.s32.totalorder %v302, %v234
    %vm379 = vcmp.eq.s32.totalorder %v298, %v235
    %vm380 = vcmp.eq.s32.totalorder %v302, %v235
    %vm381 = vcmp.eq.s32.totalorder %v298, %v236
    %vm382 = vcmp.eq.s32.totalorder %v302, %v236
    %vm383 = vcmp.eq.s32.totalorder %v306, %v229
    %vm384 = vcmp.eq.s32.totalorder %v310, %v229
    %vm385 = vcmp.eq.s32.totalorder %v306, %v230
    %vm386 = vcmp.eq.s32.totalorder %v310, %v230
    %vm387 = vcmp.eq.s32.totalorder %v306, %v231
    %vm388 = vcmp.eq.s32.totalorder %v310, %v231
    %vm389 = vcmp.eq.s32.totalorder %v306, %v232
    %vm390 = vcmp.eq.s32.totalorder %v310, %v232
    %vm391 = vcmp.eq.s32.totalorder %v306, %v233
    %vm392 = vcmp.eq.s32.totalorder %v310, %v233
    %vm393 = vcmp.eq.s32.totalorder %v306, %v234
    %vm394 = vcmp.eq.s32.totalorder %v310, %v234
    %vm395 = vcmp.eq.s32.totalorder %v306, %v235
    %vm396 = vcmp.eq.s32.totalorder %v310, %v235
    %vm397 = vcmp.eq.s32.totalorder %v306, %v236
    %vm398 = vcmp.eq.s32.totalorder %v310, %v236
    %vm399 = vcmp.eq.s32.totalorder %v314, %v229
    %vm400 = vcmp.eq.s32.totalorder %v318, %v229
    %vm401 = vcmp.eq.s32.totalorder %v314, %v230
    %vm402 = vcmp.eq.s32.totalorder %v318, %v230
    %vm403 = vcmp.eq.s32.totalorder %v314, %v231
    %vm404 = vcmp.eq.s32.totalorder %v318, %v231
    %vm405 = vcmp.eq.s32.totalorder %v314, %v232
    %vm406 = vcmp.eq.s32.totalorder %v318, %v232
    %vm407 = vcmp.eq.s32.totalorder %v314, %v233
    %vm408 = vcmp.eq.s32.totalorder %v318, %v233
    %vm409 = vcmp.eq.s32.totalorder %v314, %v234
    %vm410 = vcmp.eq.s32.totalorder %v318, %v234
    %vm411 = vcmp.eq.s32.totalorder %v314, %v235
    %vm412 = vcmp.eq.s32.totalorder %v318, %v235
    %vm413 = vcmp.eq.s32.totalorder %v314, %v236
    %vm414 = vcmp.eq.s32.totalorder %v318, %v236
    %vm415 = vcmp.eq.s32.totalorder %v322, %v229
    %vm416 = vcmp.eq.s32.totalorder %v326, %v229
    %vm417 = vcmp.eq.s32.totalorder %v322, %v230
    %vm418 = vcmp.eq.s32.totalorder %v326, %v230
    %vm419 = vcmp.eq.s32.totalorder %v322, %v231
    %vm420 = vcmp.eq.s32.totalorder %v326, %v231
    %vm421 = vcmp.eq.s32.totalorder %v322, %v232
    %vm422 = vcmp.eq.s32.totalorder %v326, %v232
    %vm423 = vcmp.eq.s32.totalorder %v322, %v233
    %vm424 = vcmp.eq.s32.totalorder %v326, %v233
    %vm425 = vcmp.eq.s32.totalorder %v322, %v234
    %vm426 = vcmp.eq.s32.totalorder %v326, %v234
    %vm427 = vcmp.eq.s32.totalorder %v322, %v235
    %vm428 = vcmp.eq.s32.totalorder %v326, %v235
    %vm429 = vcmp.eq.s32.totalorder %v322, %v236
    %vm430 = vcmp.eq.s32.totalorder %v326, %v236
    %vm431 = vcmp.eq.s32.totalorder %v330, %v229
    %vm432 = vcmp.eq.s32.totalorder %v334, %v229
    %vm433 = vcmp.eq.s32.totalorder %v330, %v230
    %vm434 = vcmp.eq.s32.totalorder %v334, %v230
    %vm435 = vcmp.eq.s32.totalorder %v330, %v231
    %vm436 = vcmp.eq.s32.totalorder %v334, %v231
    %vm437 = vcmp.eq.s32.totalorder %v330, %v232
    %vm438 = vcmp.eq.s32.totalorder %v334, %v232
    %vm439 = vcmp.eq.s32.totalorder %v330, %v233
    %vm440 = vcmp.eq.s32.totalorder %v334, %v233
    %vm441 = vcmp.eq.s32.totalorder %v330, %v234
    %vm442 = vcmp.eq.s32.totalorder %v334, %v234
    %vm443 = vcmp.eq.s32.totalorder %v330, %v235
    %vm444 = vcmp.eq.s32.totalorder %v334, %v235
    %vm445 = vcmp.eq.s32.totalorder %v330, %v236
    %vm446 = vcmp.eq.s32.totalorder %v334, %v236
    %vm447 = vcmp.eq.s32.totalorder %v338, %v229
    %vm448 = vcmp.eq.s32.totalorder %v342, %v229
    %vm449 = vcmp.eq.s32.totalorder %v338, %v230
    %vm450 = vcmp.eq.s32.totalorder %v342, %v230
    %vm451 = vcmp.eq.s32.totalorder %v338, %v231
    %vm452 = vcmp.eq.s32.totalorder %v342, %v231
    %vm453 = vcmp.eq.s32.totalorder %v338, %v232
    %vm454 = vcmp.eq.s32.totalorder %v342, %v232
    %vm455 = vcmp.eq.s32.totalorder %v338, %v233
    %vm456 = vcmp.eq.s32.totalorder %v342, %v233
    %vm457 = vcmp.eq.s32.totalorder %v338, %v234
    %vm458 = vcmp.eq.s32.totalorder %v342, %v234
    %vm459 = vcmp.eq.s32.totalorder %v338, %v235
    %vm460 = vcmp.eq.s32.totalorder %v342, %v235
    %vm461 = vcmp.eq.s32.totalorder %v338, %v236
    %vm462 = vcmp.eq.s32.totalorder %v342, %v236
    %vm463 = vcmp.eq.s32.totalorder %v346, %v229
    %vm464 = vcmp.eq.s32.totalorder %v350, %v229
    %vm465 = vcmp.eq.s32.totalorder %v346, %v230
    %vm466 = vcmp.eq.s32.totalorder %v350, %v230
    %vm467 = vcmp.eq.s32.totalorder %v346, %v231
    %vm468 = vcmp.eq.s32.totalorder %v350, %v231
    %vm469 = vcmp.eq.s32.totalorder %v346, %v232
    %vm470 = vcmp.eq.s32.totalorder %v350, %v232
    %vm471 = vcmp.eq.s32.totalorder %v346, %v233
    %vm472 = vcmp.eq.s32.totalorder %v350, %v233
    %vm473 = vcmp.eq.s32.totalorder %v346, %v234
    %vm474 = vcmp.eq.s32.totalorder %v350, %v234
    %vm475 = vcmp.eq.s32.totalorder %v346, %v235
    %vm476 = vcmp.eq.s32.totalorder %v350, %v235
    %vm477 = vcmp.eq.s32.totalorder %v346, %v236
    %vm478 = vcmp.eq.s32.totalorder %v350, %v236
    %v479 = vsel %vm351, 1, 0
    %v480 = vsel %vm352, 1, 0
    %v481 = vsel %vm353, 1, 0
    %v482 = vsel %vm354, 1, 0
    %v483 = vsel %vm355, 1, 0
    %v484 = vsel %vm356, 1, 0
    %v485 = vsel %vm357, 1, 0
    %v486 = vsel %vm358, 1, 0
    %v487 = vsel %vm359, 1, 0
    %v488 = vsel %vm360, 1, 0
    %v489 = vsel %vm361, 1, 0
    %v490 = vsel %vm362, 1, 0
    %v491 = vsel %vm363, 1, 0
    %v492 = vsel %vm364, 1, 0
    %v493 = vsel %vm365, 1, 0
    %v494 = vsel %vm366, 1, 0
    %v495 = vsel %vm367, 1, 0
    %v496 = vsel %vm368, 1, 0
    %v497 = vsel %vm369, 1, 0
    %v498 = vsel %vm370, 1, 0
    %v499 = vsel %vm371, 1, 0
    %v500 = vsel %vm372, 1, 0
    %v501 = vsel %vm373, 1, 0
    %v502 = vsel %vm374, 1, 0
    %v503 = vsel %vm375, 1, 0
    %v504 = vsel %vm376, 1, 0
    %v505 = vsel %vm377, 1, 0
    %v506 = vsel %vm378, 1, 0
    %v507 = vsel %vm379, 1, 0
    %v508 = vsel %vm380, 1, 0
    %v509 = vsel %vm381, 1, 0
    %v510 = vsel %vm382, 1, 0
    %v511 = vsel %vm383, 1, 0
    %v512 = vsel %vm384, 1, 0
    %v513 = vsel %vm385, 1, 0
    %v514 = vsel %vm386, 1, 0
    %v515 = vsel %vm387, 1, 0
    %v516 = vsel %vm388, 1, 0
    %v517 = vsel %vm389, 1, 0
    %v518 = vsel %vm390, 1, 0
    %v519 = vsel %vm391, 1, 0
    %v520 = vsel %vm392, 1, 0
    %v521 = vsel %vm393, 1, 0
    %v522 = vsel %vm394, 1, 0
    %v523 = vsel %vm395, 1, 0
    %v524 = vsel %vm396, 1, 0
    %v525 = vsel %vm397, 1, 0
    %v526 = vsel %vm398, 1, 0
    %v527 = vsel %vm399, 1, 0
    %v528 = vsel %vm400, 1, 0
    %v529 = vsel %vm401, 1, 0
    %v530 = vsel %vm402, 1, 0
    %v531 = vsel %vm403, 1, 0
    %v532 = vsel %vm404, 1, 0
    %v533 = vsel %vm405, 1, 0
    %v534 = vsel %vm406, 1, 0
    %v535 = vsel %vm407, 1, 0
    %v536 = vsel %vm408, 1, 0
    %v537 = vsel %vm409, 1, 0
    %v538 = vsel %vm410, 1, 0
    %v539 = vsel %vm411, 1, 0
    %v540 = vsel %vm412, 1, 0
    %v541 = vsel %vm413, 1, 0
    %v542 = vsel %vm414, 1, 0
    %v543 = vsel %vm415, 1, 0
    %v544 = vsel %vm416, 1, 0
    %v545 = vsel %vm417, 1, 0
    %v546 = vsel %vm418, 1, 0
    %v547 = vsel %vm419, 1, 0
    %v548 = vsel %vm420, 1, 0
    %v549 = vsel %vm421, 1, 0
    %v550 = vsel %vm422, 1, 0
    %v551 = vsel %vm423, 1, 0
    %v552 = vsel %vm424, 1, 0
    %v553 = vsel %vm425, 1, 0
    %v554 = vsel %vm426, 1, 0
    %v555 = vsel %vm427, 1, 0
    %v556 = vsel %vm428, 1, 0
    %v557 = vsel %vm429, 1, 0
    %v558 = vsel %vm430, 1, 0
    %v559 = vsel %vm431, 1, 0
    %v560 = vsel %vm432, 1, 0
    %v561 = vsel %vm433, 1, 0
    %v562 = vsel %vm434, 1, 0
    %v563 = vsel %vm435, 1, 0
    %v564 = vsel %vm436, 1, 0
    %v565 = vsel %vm437, 1, 0
    %v566 = vsel %vm438, 1, 0
    %v567 = vsel %vm439, 1, 0
    %v568 = vsel %vm440, 1, 0
    %v569 = vsel %vm441, 1, 0
    %v570 = vsel %vm442, 1, 0
    %v571 = vsel %vm443, 1, 0
    %v572 = vsel %vm444, 1, 0
    %v573 = vsel %vm445, 1, 0
    %v574 = vsel %vm446, 1, 0
    %v575 = vsel %vm447, 1, 0
    %v576 = vsel %vm448, 1, 0
    %v577 = vsel %vm449, 1, 0
    %v578 = vsel %vm450, 1, 0
    %v579 = vsel %vm451, 1, 0
    %v580 = vsel %vm452, 1, 0
    %v581 = vsel %vm453, 1, 0
    %v582 = vsel %vm454, 1, 0
    %v583 = vsel %vm455, 1, 0
    %v584 = vsel %vm456, 1, 0
    %v585 = vsel %vm457, 1, 0
    %v586 = vsel %vm458, 1, 0
    %v587 = vsel %vm459, 1, 0
    %v588 = vsel %vm460, 1, 0
    %v589 = vsel %vm461, 1, 0
    %v590 = vsel %vm462, 1, 0
    %v591 = vsel %vm463, 1, 0
    %v592 = vsel %vm464, 1, 0
    %v593 = vsel %vm465, 1, 0
    %v594 = vsel %vm466, 1, 0
    %v595 = vsel %vm467, 1, 0
    %v596 = vsel %vm468, 1, 0
    %v597 = vsel %vm469, 1, 0
    %v598 = vsel %vm470, 1, 0
    %v599 = vsel %vm471, 1, 0
    %v600 = vsel %vm472, 1, 0
    %v601 = vsel %vm473, 1, 0
    %v602 = vsel %vm474, 1, 0
    %v603 = vsel %vm475, 1, 0
    %v604 = vsel %vm476, 1, 0
    %v605 = vsel %vm477, 1, 0
    %v606 = vsel %vm478, 1, 0
    %v607 = vcvt.s32.f32 %v479
    %v608 = vcvt.s32.f32 %v480
    %v609 = vcvt.s32.f32 %v481
    %v610 = vcvt.s32.f32 %v482
    %v611 = vcvt.s32.f32 %v483
    %v612 = vcvt.s32.f32 %v484
    %v613 = vcvt.s32.f32 %v485
    %v614 = vcvt.s32.f32 %v486
    %v615 = vcvt.s32.f32 %v487
    %v616 = vcvt.s32.f32 %v488
    %v617 = vcvt.s32.f32 %v489
    %v618 = vcvt.s32.f32 %v490
    %v619 = vcvt.s32.f32 %v491
    %v620 = vcvt.s32.f32 %v492
    %v621 = vcvt.s32.f32 %v493
    %v622 = vcvt.s32.f32 %v494
    %v623 = vcvt.s32.f32 %v495
    %v624 = vcvt.s32.f32 %v496
    %v625 = vcvt.s32.f32 %v497
    %v626 = vcvt.s32.f32 %v498
    %v627 = vcvt.s32.f32 %v499
    %v628 = vcvt.s32.f32 %v500
    %v629 = vcvt.s32.f32 %v501
    %v630 = vcvt.s32.f32 %v502
    %v631 = vcvt.s32.f32 %v503
    %v632 = vcvt.s32.f32 %v504
    %v633 = vcvt.s32.f32 %v505
    %v634 = vcvt.s32.f32 %v506
    %v635 = vcvt.s32.f32 %v507
    %v636 = vcvt.s32.f32 %v508
    %v637 = vcvt.s32.f32 %v509
    %v638 = vcvt.s32.f32 %v510
    %v639 = vcvt.s32.f32 %v511
    %v640 = vcvt.s32.f32 %v512
    %v641 = vcvt.s32.f32 %v513
    %v642 = vcvt.s32.f32 %v514
    %v643 = vcvt.s32.f32 %v515
    %v644 = vcvt.s32.f32 %v516
    %v645 = vcvt.s32.f32 %v517
    %v646 = vcvt.s32.f32 %v518
    %v647 = vcvt.s32.f32 %v519
    %v648 = vcvt.s32.f32 %v520
    %v649 = vcvt.s32.f32 %v521
    %v650 = vcvt.s32.f32 %v522
    %v651 = vcvt.s32.f32 %v523
    %v652 = vcvt.s32.f32 %v524
    %v653 = vcvt.s32.f32 %v525
    %v654 = vcvt.s32.f32 %v526
    %v655 = vcvt.s32.f32 %v527
    %v656 = vcvt.s32.f32 %v528
    %v657 = vcvt.s32.f32 %v529
    %v658 = vcvt.s32.f32 %v530
    %v659 = vcvt.s32.f32 %v531
    %v660 = vcvt.s32.f32 %v532
    %v661 = vcvt.s32.f32 %v533
    %v662 = vcvt.s32.f32 %v534
    %v663 = vcvt.s32.f32 %v535
    %v664 = vcvt.s32.f32 %v536
    %v665 = vcvt.s32.f32 %v537
    %v666 = vcvt.s32.f32 %v538
    %v667 = vcvt.s32.f32 %v539
    %v668 = vcvt.s32.f32 %v540
    %v669 = vcvt.s32.f32 %v541
    %v670 = vcvt.s32.f32 %v542
    %v671 = vcvt.s32.f32 %v543
    %v672 = vcvt.s32.f32 %v544
    %v673 = vcvt.s32.f32 %v545
    %v674 = vcvt.s32.f32 %v546
    %v675 = vcvt.s32.f32 %v547
    %v676 = vcvt.s32.f32 %v548
    %v677 = vcvt.s32.f32 %v549
    %v678 = vcvt.s32.f32 %v550
    %v679 = vcvt.s32.f32 %v551
    %v680 = vcvt.s32.f32 %v552
    %v681 = vcvt.s32.f32 %v553
    %v682 = vcvt.s32.f32 %v554
    %v683 = vcvt.s32.f32 %v555
    %v684 = vcvt.s32.f32 %v556
    %v685 = vcvt.s32.f32 %v557
    %v686 = vcvt.s32.f32 %v558
    %v687 = vcvt.s32.f32 %v559
    %v688 = vcvt.s32.f32 %v560
    %v689 = vcvt.s32.f32 %v561
    %v690 = vcvt.s32.f32 %v562
    %v691 = vcvt.s32.f32 %v563
    %v692 = vcvt.s32.f32 %v564
    %v693 = vcvt.s32.f32 %v565
    %v694 = vcvt.s32.f32 %v566
    %v695 = vcvt.s32.f32 %v567
    %v696 = vcvt.s32.f32 %v568
    %v697 = vcvt.s32.f32 %v569
    %v698 = vcvt.s32.f32 %v570
    %v699 = vcvt.s32.f32 %v571
    %v700 = vcvt.s32.f32 %v572
    %v701 = vcvt.s32.f32 %v573
    %v702 = vcvt.s32.f32 %v574
    %v703 = vcvt.s32.f32 %v575
    %v704 = vcvt.s32.f32 %v576
    %v705 = vcvt.s32.f32 %v577
    %v706 = vcvt.s32.f32 %v578
    %v707 = vcvt.s32.f32 %v579
    %v708 = vcvt.s32.f32 %v580
    %v709 = vcvt.s32.f32 %v581
    %v710 = vcvt.s32.f32 %v582
    %v711 = vcvt.s32.f32 %v583
    %v712 = vcvt.s32.f32 %v584
    %v713 = vcvt.s32.f32 %v585
    %v714 = vcvt.s32.f32 %v586
    %v715 = vcvt.s32.f32 %v587
    %v716 = vcvt.s32.f32 %v588
    %v717 = vcvt.s32.f32 %v589
    %v718 = vcvt.s32.f32 %v590
    %v719 = vcvt.s32.f32 %v591
    %v720 = vcvt.s32.f32 %v592
    %v721 = vcvt.s32.f32 %v593
    %v722 = vcvt.s32.f32 %v594
    %v723 = vcvt.s32.f32 %v595
    %v724 = vcvt.s32.f32 %v596
    %v725 = vcvt.s32.f32 %v597
    %v726 = vcvt.s32.f32 %v598
    %v727 = vcvt.s32.f32 %v599
    %v728 = vcvt.s32.f32 %v600
    %v729 = vcvt.s32.f32 %v601
    %v730 = vcvt.s32.f32 %v602
    %v731 = vcvt.s32.f32 %v603
    %v732 = vcvt.s32.f32 %v604
    %v733 = vcvt.s32.f32 %v605
    %v734 = vcvt.s32.f32 %v606
    %v735 = vpack.c.bf16 %v609, %v607
    %v736 = vpack.c.bf16 %v610, %v608
    %v737 = vpack.c.bf16 %v613, %v611
    %v738 = vpack.c.bf16 %v614, %v612
    %v739 = vpack.c.bf16 %v617, %v615
    %v740 = vpack.c.bf16 %v618, %v616
    %v741 = vpack.c.bf16 %v621, %v619
    %v742 = vpack.c.bf16 %v622, %v620
    %v743 = vpack.c.bf16 %v625, %v623
    %v744 = vpack.c.bf16 %v626, %v624
    %v745 = vpack.c.bf16 %v629, %v627
    %v746 = vpack.c.bf16 %v630, %v628
    %v747 = vpack.c.bf16 %v633, %v631
    %v748 = vpack.c.bf16 %v634, %v632
    %v749 = vpack.c.bf16 %v637, %v635
    %v750 = vpack.c.bf16 %v638, %v636
    %v751 = vpack.c.bf16 %v641, %v639
    %v752 = vpack.c.bf16 %v642, %v640
    %v753 = vpack.c.bf16 %v645, %v643
    %v754 = vpack.c.bf16 %v646, %v644
    %v755 = vpack.c.bf16 %v649, %v647
    %v756 = vpack.c.bf16 %v650, %v648
    %v757 = vpack.c.bf16 %v653, %v651
    %v758 = vpack.c.bf16 %v654, %v652
    %v759 = vpack.c.bf16 %v657, %v655
    %v760 = vpack.c.bf16 %v658, %v656
    %v761 = vpack.c.bf16 %v661, %v659
    %v762 = vpack.c.bf16 %v662, %v660
    %v763 = vpack.c.bf16 %v665, %v663
    %v764 = vpack.c.bf16 %v666, %v664
    %v765 = vpack.c.bf16 %v669, %v667
    %v766 = vpack.c.bf16 %v670, %v668
    %v767 = vpack.c.bf16 %v673, %v671
    %v768 = vpack.c.bf16 %v674, %v672
    %v769 = vpack.c.bf16 %v677, %v675
    %v770 = vpack.c.bf16 %v678, %v676
    %v771 = vpack.c.bf16 %v681, %v679
    %v772 = vpack.c.bf16 %v682, %v680
    %v773 = vpack.c.bf16 %v685, %v683
    %v774 = vpack.c.bf16 %v686, %v684
    %v775 = vpack.c.bf16 %v689, %v687
    %v776 = vpack.c.bf16 %v690, %v688
    %v777 = vpack.c.bf16 %v693, %v691
    %v778 = vpack.c.bf16 %v694, %v692
    %v779 = vpack.c.bf16 %v697, %v695
    %v780 = vpack.c.bf16 %v698, %v696
    %v781 = vpack.c.bf16 %v701, %v699
    %v782 = vpack.c.bf16 %v702, %v700
    %v783 = vpack.c.bf16 %v705, %v703
    %v784 = vpack.c.bf16 %v706, %v704
    %v785 = vpack.c.bf16 %v709, %v707
    %v786 = vpack.c.bf16 %v710, %v708
    %v787 = vpack.c.bf16 %v713, %v711
    %v788 = vpack.c.bf16 %v714, %v712
    %v789 = vpack.c.bf16 %v717, %v715
    %v790 = vpack.c.bf16 %v718, %v716
    %v791 = vpack.c.bf16 %v721, %v719
    %v792 = vpack.c.bf16 %v722, %v720
    %v793 = vpack.c.bf16 %v725, %v723
    %v794 = vpack.c.bf16 %v726, %v724
    %v795 = vpack.c.bf16 %v729, %v727
    %v796 = vpack.c.bf16 %v730, %v728
    %v797 = vpack.c.bf16 %v733, %v731
    %v798 = vpack.c.bf16 %v734, %v732
    %v799 = vld [vmem:[#allocation4] sm:$0xff]
    %v800 = vld [vmem:[#allocation4 + $0x8] sm:$0xff]
    %v801 = vld [vmem:[#allocation4 + $0x10] sm:$0xff]
    %v802 = vld [vmem:[#allocation4 + $0x18] sm:$0xff]
    %v803 = vld [vmem:[#allocation4 + $0x20] sm:$0xff]
    %v804 = vld [vmem:[#allocation4 + $0x28] sm:$0xff]
    %v805 = vld [vmem:[#allocation4 + $0x30] sm:$0xff]
    %v806 = vld [vmem:[#allocation4 + $0x38] sm:$0xff]
    %v807 = vld [vmem:[#allocation4 + $0x40] sm:$0xff]
    %v808 = vld [vmem:[#allocation4 + $0x48] sm:$0xff]
    %v809 = vld [vmem:[#allocation4 + $0x50] sm:$0xff]
    %v810 = vld [vmem:[#allocation4 + $0x58] sm:$0xff]
    %v811 = vld [vmem:[#allocation4 + $0x60] sm:$0xff]
    %v812 = vld [vmem:[#allocation4 + $0x68] sm:$0xff]
    %v813 = vld [vmem:[#allocation4 + $0x70] sm:$0xff]
    %v814 = vld [vmem:[#allocation4 + $0x78] sm:$0xff]
    %v815 = vcombine.low %v226, %v227
    %v816 = vcombine.high %v226, %v227
    %v818 = vunpack.c.l.s4 1966171168
    %v819 = vunpack.c.0.s8 %v818
    %v820 = vlaneseq
    %v821 = vshrl.u32 %v820, 7
    %v822 = vsub.s32 %v819, %v821
    %v823 = vrot.slane %v815, %v822
    %v825 = vunpack.c.l.s4 1966171168
    %v826 = vunpack.c.0.s8 %v825
    %v827 = vlaneseq
    %v828 = vshrl.u32 %v827, 7
    %v829 = vsub.s32 %v826, %v828
    %v830 = vrot.slane %v816, %v829
    %v831 = vcombine.high %v823, %v823
    %v832 = vcombine.high %v830, %v830
    %v834 = vunpack.c.l.s4 1966171168
    %v835 = vunpack.c.0.s8 %v834
    %v836 = vlaneseq
    %v837 = vshrl.u32 %v836, 7
    %v838 = vsub.s32 %v835, %v837
    %v839 = vrot.slane %v823, %v838
    %v841 = vunpack.c.l.s4 1966171168
    %v842 = vunpack.c.0.s8 %v841
    %v843 = vlaneseq
    %v844 = vshrl.u32 %v843, 7
    %v845 = vsub.s32 %v842, %v844
    %v846 = vrot.slane %v830, %v845
    %v848 = vunpack.c.l.s4 1966171168
    %v849 = vunpack.c.0.s8 %v848
    %v850 = vlaneseq
    %v851 = vshrl.u32 %v850, 7
    %v852 = vsub.s32 %v849, %v851
    %v853 = vrot.slane %v831, %v852
    %v855 = vunpack.c.l.s4 1966171168
    %v856 = vunpack.c.0.s8 %v855
    %v857 = vlaneseq
    %v858 = vshrl.u32 %v857, 7
    %v859 = vsub.s32 %v856, %v858
    %v860 = vrot.slane %v832, %v859
    %v861 = vcombine.high %v839, %v839
    %v862 = vcombine.high %v846, %v846
    %v863 = vcombine.high %v853, %v853
    %v864 = vcombine.high %v860, %v860
    %v865 = vlaneseq
    %v866 = vshrl.u32 %v865, 7
    %v867 = vsub.s32 0, %v866
    %v868 = vrot.slane %v839, %v867
    %v869 = vlaneseq
    %v870 = vshrl.u32 %v869, 7
    %v871 = vsub.s32 1, %v870
    %v872 = vrot.slane %v839, %v871
    %v873 = vlaneseq
    %v874 = vshrl.u32 %v873, 7
    %v875 = vsub.s32 0, %v874
    %v876 = vrot.slane %v853, %v875
    %v877 = vlaneseq
    %v878 = vshrl.u32 %v877, 7
    %v879 = vsub.s32 1, %v878
    %v880 = vrot.slane %v853, %v879
    %v881 = vlaneseq
    %v882 = vshrl.u32 %v881, 7
    %v883 = vsub.s32 0, %v882
    %v884 = vrot.slane %v861, %v883
    %v885 = vlaneseq
    %v886 = vshrl.u32 %v885, 7
    %v887 = vsub.s32 1, %v886
    %v888 = vrot.slane %v861, %v887
    %v889 = vlaneseq
    %v890 = vshrl.u32 %v889, 7
    %v891 = vsub.s32 0, %v890
    %v892 = vrot.slane %v863, %v891
    %v893 = vlaneseq
    %v894 = vshrl.u32 %v893, 7
    %v895 = vsub.s32 1, %v894
    %v896 = vrot.slane %v863, %v895
    %v897 = vlaneseq
    %v898 = vshrl.u32 %v897, 7
    %v899 = vsub.s32 0, %v898
    %v900 = vrot.slane %v846, %v899
    %v901 = vlaneseq
    %v902 = vshrl.u32 %v901, 7
    %v903 = vsub.s32 1, %v902
    %v904 = vrot.slane %v846, %v903
    %v905 = vlaneseq
    %v906 = vshrl.u32 %v905, 7
    %v907 = vsub.s32 0, %v906
    %v908 = vrot.slane %v860, %v907
    %v909 = vlaneseq
    %v910 = vshrl.u32 %v909, 7
    %v911 = vsub.s32 1, %v910
    %v912 = vrot.slane %v860, %v911
    %v913 = vlaneseq
    %v914 = vshrl.u32 %v913, 7
    %v915 = vsub.s32 0, %v914
    %v916 = vrot.slane %v862, %v915
    %v917 = vlaneseq
    %v918 = vshrl.u32 %v917, 7
    %v919 = vsub.s32 1, %v918
    %v920 = vrot.slane %v862, %v919
    %v921 = vlaneseq
    %v922 = vshrl.u32 %v921, 7
    %v923 = vsub.s32 0, %v922
    %v924 = vrot.slane %v864, %v923
    %v925 = vlaneseq
    %v926 = vshrl.u32 %v925, 7
    %v927 = vsub.s32 1, %v926
    %v928 = vrot.slane %v864, %v927
    %vm929 = vcmp.eq.s32.totalorder %v868, %v229
    %vm930 = vcmp.eq.s32.totalorder %v872, %v229
    %vm931 = vcmp.eq.s32.totalorder %v868, %v230
    %vm932 = vcmp.eq.s32.totalorder %v872, %v230
    %vm933 = vcmp.eq.s32.totalorder %v868, %v231
    %vm934 = vcmp.eq.s32.totalorder %v872, %v231
    %vm935 = vcmp.eq.s32.totalorder %v868, %v232
    %vm936 = vcmp.eq.s32.totalorder %v872, %v232
    %vm937 = vcmp.eq.s32.totalorder %v868, %v233
    %vm938 = vcmp.eq.s32.totalorder %v872, %v233
    %vm939 = vcmp.eq.s32.totalorder %v868, %v234
    %vm940 = vcmp.eq.s32.totalorder %v872, %v234
    %vm941 = vcmp.eq.s32.totalorder %v868, %v235
    %vm942 = vcmp.eq.s32.totalorder %v872, %v235
    %vm943 = vcmp.eq.s32.totalorder %v868, %v236
    %vm944 = vcmp.eq.s32.totalorder %v872, %v236
    %vm945 = vcmp.eq.s32.totalorder %v876, %v229
    %vm946 = vcmp.eq.s32.totalorder %v880, %v229
    %vm947 = vcmp.eq.s32.totalorder %v876, %v230
    %vm948 = vcmp.eq.s32.totalorder %v880, %v230
    %vm949 = vcmp.eq.s32.totalorder %v876, %v231
    %vm950 = vcmp.eq.s32.totalorder %v880, %v231
    %vm951 = vcmp.eq.s32.totalorder %v876, %v232
    %vm952 = vcmp.eq.s32.totalorder %v880, %v232
    %vm953 = vcmp.eq.s32.totalorder %v876, %v233
    %vm954 = vcmp.eq.s32.totalorder %v880, %v233
    %vm955 = vcmp.eq.s32.totalorder %v876, %v234
    %vm956 = vcmp.eq.s32.totalorder %v880, %v234
    %vm957 = vcmp.eq.s32.totalorder %v876, %v235
    %vm958 = vcmp.eq.s32.totalorder %v880, %v235
    %vm959 = vcmp.eq.s32.totalorder %v876, %v236
    %vm960 = vcmp.eq.s32.totalorder %v880, %v236
    %vm961 = vcmp.eq.s32.totalorder %v884, %v229
    %vm962 = vcmp.eq.s32.totalorder %v888, %v229
    %vm963 = vcmp.eq.s32.totalorder %v884, %v230
    %vm964 = vcmp.eq.s32.totalorder %v888, %v230
    %vm965 = vcmp.eq.s32.totalorder %v884, %v231
    %vm966 = vcmp.eq.s32.totalorder %v888, %v231
    %vm967 = vcmp.eq.s32.totalorder %v884, %v232
    %vm968 = vcmp.eq.s32.totalorder %v888, %v232
    %vm969 = vcmp.eq.s32.totalorder %v884, %v233
    %vm970 = vcmp.eq.s32.totalorder %v888, %v233
    %vm971 = vcmp.eq.s32.totalorder %v884, %v234
    %vm972 = vcmp.eq.s32.totalorder %v888, %v234
    %vm973 = vcmp.eq.s32.totalorder %v884, %v235
    %vm974 = vcmp.eq.s32.totalorder %v888, %v235
    %vm975 = vcmp.eq.s32.totalorder %v884, %v236
    %vm976 = vcmp.eq.s32.totalorder %v888, %v236
    %vm977 = vcmp.eq.s32.totalorder %v892, %v229
    %vm978 = vcmp.eq.s32.totalorder %v896, %v229
    %vm979 = vcmp.eq.s32.totalorder %v892, %v230
    %vm980 = vcmp.eq.s32.totalorder %v896, %v230
    %vm981 = vcmp.eq.s32.totalorder %v892, %v231
    %vm982 = vcmp.eq.s32.totalorder %v896, %v231
    %vm983 = vcmp.eq.s32.totalorder %v892, %v232
    %vm984 = vcmp.eq.s32.totalorder %v896, %v232
    %vm985 = vcmp.eq.s32.totalorder %v892, %v233
    %vm986 = vcmp.eq.s32.totalorder %v896, %v233
    %vm987 = vcmp.eq.s32.totalorder %v892, %v234
    %vm988 = vcmp.eq.s32.totalorder %v896, %v234
    %vm989 = vcmp.eq.s32.totalorder %v892, %v235
    %vm990 = vcmp.eq.s32.totalorder %v896, %v235
    %vm991 = vcmp.eq.s32.totalorder %v892, %v236
    %vm992 = vcmp.eq.s32.totalorder %v896, %v236
    %vm993 = vcmp.eq.s32.totalorder %v900, %v229
    %vm994 = vcmp.eq.s32.totalorder %v904, %v229
    %vm995 = vcmp.eq.s32.totalorder %v900, %v230
    %vm996 = vcmp.eq.s32.totalorder %v904, %v230
    %vm997 = vcmp.eq.s32.totalorder %v900, %v231
    %vm998 = vcmp.eq.s32.totalorder %v904, %v231
    %vm999 = vcmp.eq.s32.totalorder %v900, %v232
    %vm1000 = vcmp.eq.s32.totalorder %v904, %v232
    %vm1001 = vcmp.eq.s32.totalorder %v900, %v233
    %vm1002 = vcmp.eq.s32.totalorder %v904, %v233
    %vm1003 = vcmp.eq.s32.totalorder %v900, %v234
    %vm1004 = vcmp.eq.s32.totalorder %v904, %v234
    %vm1005 = vcmp.eq.s32.totalorder %v900, %v235
    %vm1006 = vcmp.eq.s32.totalorder %v904, %v235
    %vm1007 = vcmp.eq.s32.totalorder %v900, %v236
    %vm1008 = vcmp.eq.s32.totalorder %v904, %v236
    %vm1009 = vcmp.eq.s32.totalorder %v908, %v229
    %vm1010 = vcmp.eq.s32.totalorder %v912, %v229
    %vm1011 = vcmp.eq.s32.totalorder %v908, %v230
    %vm1012 = vcmp.eq.s32.totalorder %v912, %v230
    %vm1013 = vcmp.eq.s32.totalorder %v908, %v231
    %vm1014 = vcmp.eq.s32.totalorder %v912, %v231
    %vm1015 = vcmp.eq.s32.totalorder %v908, %v232
    %vm1016 = vcmp.eq.s32.totalorder %v912, %v232
    %vm1017 = vcmp.eq.s32.totalorder %v908, %v233
    %vm1018 = vcmp.eq.s32.totalorder %v912, %v233
    %vm1019 = vcmp.eq.s32.totalorder %v908, %v234
    %vm1020 = vcmp.eq.s32.totalorder %v912, %v234
    %vm1021 = vcmp.eq.s32.totalorder %v908, %v235
    %vm1022 = vcmp.eq.s32.totalorder %v912, %v235
    %vm1023 = vcmp.eq.s32.totalorder %v908, %v236
    %vm1024 = vcmp.eq.s32.totalorder %v912, %v236
    %vm1025 = vcmp.eq.s32.totalorder %v916, %v229
    %vm1026 = vcmp.eq.s32.totalorder %v920, %v229
    %vm1027 = vcmp.eq.s32.totalorder %v916, %v230
    %vm1028 = vcmp.eq.s32.totalorder %v920, %v230
    %vm1029 = vcmp.eq.s32.totalorder %v916, %v231
    %vm1030 = vcmp.eq.s32.totalorder %v920, %v231
    %vm1031 = vcmp.eq.s32.totalorder %v916, %v232
    %vm1032 = vcmp.eq.s32.totalorder %v920, %v232
    %vm1033 = vcmp.eq.s32.totalorder %v916, %v233
    %vm1034 = vcmp.eq.s32.totalorder %v920, %v233
    %vm1035 = vcmp.eq.s32.totalorder %v916, %v234
    %vm1036 = vcmp.eq.s32.totalorder %v920, %v234
    %vm1037 = vcmp.eq.s32.totalorder %v916, %v235
    %vm1038 = vcmp.eq.s32.totalorder %v920, %v235
    %vm1039 = vcmp.eq.s32.totalorder %v916, %v236
    %vm1040 = vcmp.eq.s32.totalorder %v920, %v236
    %vm1041 = vcmp.eq.s32.totalorder %v924, %v229
    %vm1042 = vcmp.eq.s32.totalorder %v928, %v229
    %vm1043 = vcmp.eq.s32.totalorder %v924, %v230
    %vm1044 = vcmp.eq.s32.totalorder %v928, %v230
    %vm1045 = vcmp.eq.s32.totalorder %v924, %v231
    %vm1046 = vcmp.eq.s32.totalorder %v928, %v231
    %vm1047 = vcmp.eq.s32.totalorder %v924, %v232
    %vm1048 = vcmp.eq.s32.totalorder %v928, %v232
    %vm1049 = vcmp.eq.s32.totalorder %v924, %v233
    %vm1050 = vcmp.eq.s32.totalorder %v928, %v233
    %vm1051 = vcmp.eq.s32.totalorder %v924, %v234
    %vm1052 = vcmp.eq.s32.totalorder %v928, %v234
    %vm1053 = vcmp.eq.s32.totalorder %v924, %v235
    %vm1054 = vcmp.eq.s32.totalorder %v928, %v235
    %vm1055 = vcmp.eq.s32.totalorder %v924, %v236
    %vm1056 = vcmp.eq.s32.totalorder %v928, %v236
    %v1057 = vsel %vm929, 1, 0
    %v1058 = vsel %vm930, 1, 0
    %v1059 = vsel %vm931, 1, 0
    %v1060 = vsel %vm932, 1, 0
    %v1061 = vsel %vm933, 1, 0
    %v1062 = vsel %vm934, 1, 0
    %v1063 = vsel %vm935, 1, 0
    %v1064 = vsel %vm936, 1, 0
    %v1065 = vsel %vm937, 1, 0
    %v1066 = vsel %vm938, 1, 0
    %v1067 = vsel %vm939, 1, 0
    %v1068 = vsel %vm940, 1, 0
    %v1069 = vsel %vm941, 1, 0
    %v1070 = vsel %vm942, 1, 0
    %v1071 = vsel %vm943, 1, 0
    %v1072 = vsel %vm944, 1, 0
    %v1073 = vsel %vm945, 1, 0
    %v1074 = vsel %vm946, 1, 0
    %v1075 = vsel %vm947, 1, 0
    %v1076 = vsel %vm948, 1, 0
    %v1077 = vsel %vm949, 1, 0
    %v1078 = vsel %vm950, 1, 0
    %v1079 = vsel %vm951, 1, 0
    %v1080 = vsel %vm952, 1, 0
    %v1081 = vsel %vm953, 1, 0
    %v1082 = vsel %vm954, 1, 0
    %v1083 = vsel %vm955, 1, 0
    %v1084 = vsel %vm956, 1, 0
    %v1085 = vsel %vm957, 1, 0
    %v1086 = vsel %vm958, 1, 0
    %v1087 = vsel %vm959, 1, 0
    %v1088 = vsel %vm960, 1, 0
    %v1089 = vsel %vm961, 1, 0
    %v1090 = vsel %vm962, 1, 0
    %v1091 = vsel %vm963, 1, 0
    %v1092 = vsel %vm964, 1, 0
    %v1093 = vsel %vm965, 1, 0
    %v1094 = vsel %vm966, 1, 0
    %v1095 = vsel %vm967, 1, 0
    %v1096 = vsel %vm968, 1, 0
    %v1097 = vsel %vm969, 1, 0
    %v1098 = vsel %vm970, 1, 0
    %v1099 = vsel %vm971, 1, 0
    %v1100 = vsel %vm972, 1, 0
    %v1101 = vsel %vm973, 1, 0
    %v1102 = vsel %vm974, 1, 0
    %v1103 = vsel %vm975, 1, 0
    %v1104 = vsel %vm976, 1, 0
    %v1105 = vsel %vm977, 1, 0
    %v1106 = vsel %vm978, 1, 0
    %v1107 = vsel %vm979, 1, 0
    %v1108 = vsel %vm980, 1, 0
    %v1109 = vsel %vm981, 1, 0
    %v1110 = vsel %vm982, 1, 0
    %v1111 = vsel %vm983, 1, 0
    %v1112 = vsel %vm984, 1, 0
    %v1113 = vsel %vm985, 1, 0
    %v1114 = vsel %vm986, 1, 0
    %v1115 = vsel %vm987, 1, 0
    %v1116 = vsel %vm988, 1, 0
    %v1117 = vsel %vm989, 1, 0
    %v1118 = vsel %vm990, 1, 0
    %v1119 = vsel %vm991, 1, 0
    %v1120 = vsel %vm992, 1, 0
    %v1121 = vsel %vm993, 1, 0
    %v1122 = vsel %vm994, 1, 0
    %v1123 = vsel %vm995, 1, 0
    %v1124 = vsel %vm996, 1, 0
    %v1125 = vsel %vm997, 1, 0
    %v1126 = vsel %vm998, 1, 0
    %v1127 = vsel %vm999, 1, 0
    %v1128 = vsel %vm1000, 1, 0
    %v1129 = vsel %vm1001, 1, 0
    %v1130 = vsel %vm1002, 1, 0
    %v1131 = vsel %vm1003, 1, 0
    %v1132 = vsel %vm1004, 1, 0
    %v1133 = vsel %vm1005, 1, 0
    %v1134 = vsel %vm1006, 1, 0
    %v1135 = vsel %vm1007, 1, 0
    %v1136 = vsel %vm1008, 1, 0
    %v1137 = vsel %vm1009, 1, 0
    %v1138 = vsel %vm1010, 1, 0
    %v1139 = vsel %vm1011, 1, 0
    %v1140 = vsel %vm1012, 1, 0
    %v1141 = vsel %vm1013, 1, 0
    %v1142 = vsel %vm1014, 1, 0
    %v1143 = vsel %vm1015, 1, 0
    %v1144 = vsel %vm1016, 1, 0
    %v1145 = vsel %vm1017, 1, 0
    %v1146 = vsel %vm1018, 1, 0
    %v1147 = vsel %vm1019, 1, 0
    %v1148 = vsel %vm1020, 1, 0
    %v1149 = vsel %vm1021, 1, 0
    %v1150 = vsel %vm1022, 1, 0
    %v1151 = vsel %vm1023, 1, 0
    %v1152 = vsel %vm1024, 1, 0
    %v1153 = vsel %vm1025, 1, 0
    %v1154 = vsel %vm1026, 1, 0
    %v1155 = vsel %vm1027, 1, 0
    %v1156 = vsel %vm1028, 1, 0
    %v1157 = vsel %vm1029, 1, 0
    %v1158 = vsel %vm1030, 1, 0
    %v1159 = vsel %vm1031, 1, 0
    %v1160 = vsel %vm1032, 1, 0
    %v1161 = vsel %vm1033, 1, 0
    %v1162 = vsel %vm1034, 1, 0
    %v1163 = vsel %vm1035, 1, 0
    %v1164 = vsel %vm1036, 1, 0
    %v1165 = vsel %vm1037, 1, 0
    %v1166 = vsel %vm1038, 1, 0
    %v1167 = vsel %vm1039, 1, 0
    %v1168 = vsel %vm1040, 1, 0
    %v1169 = vsel %vm1041, 1, 0
    %v1170 = vsel %vm1042, 1, 0
    %v1171 = vsel %vm1043, 1, 0
    %v1172 = vsel %vm1044, 1, 0
    %v1173 = vsel %vm1045, 1, 0
    %v1174 = vsel %vm1046, 1, 0
    %v1175 = vsel %vm1047, 1, 0
    %v1176 = vsel %vm1048, 1, 0
    %v1177 = vsel %vm1049, 1, 0
    %v1178 = vsel %vm1050, 1, 0
    %v1179 = vsel %vm1051, 1, 0
    %v1180 = vsel %vm1052, 1, 0
    %v1181 = vsel %vm1053, 1, 0
    %v1182 = vsel %vm1054, 1, 0
    %v1183 = vsel %vm1055, 1, 0
    %v1184 = vsel %vm1056, 1, 0
    %v1185 = vcvt.s32.f32 %v1057
    %v1186 = vcvt.s32.f32 %v1058
    %v1187 = vcvt.s32.f32 %v1059
    %v1188 = vcvt.s32.f32 %v1060
    %v1189 = vcvt.s32.f32 %v1061
    %v1190 = vcvt.s32.f32 %v1062
    %v1191 = vcvt.s32.f32 %v1063
    %v1192 = vcvt.s32.f32 %v1064
    %v1193 = vcvt.s32.f32 %v1065
    %v1194 = vcvt.s32.f32 %v1066
    %v1195 = vcvt.s32.f32 %v1067
    %v1196 = vcvt.s32.f32 %v1068
    %v1197 = vcvt.s32.f32 %v1069
    %v1198 = vcvt.s32.f32 %v1070
    %v1199 = vcvt.s32.f32 %v1071
    %v1200 = vcvt.s32.f32 %v1072
    %v1201 = vcvt.s32.f32 %v1073
    %v1202 = vcvt.s32.f32 %v1074
    %v1203 = vcvt.s32.f32 %v1075
    %v1204 = vcvt.s32.f32 %v1076
    %v1205 = vcvt.s32.f32 %v1077
    %v1206 = vcvt.s32.f32 %v1078
    %v1207 = vcvt.s32.f32 %v1079
    %v1208 = vcvt.s32.f32 %v1080
    %v1209 = vcvt.s32.f32 %v1081
    %v1210 = vcvt.s32.f32 %v1082
    %v1211 = vcvt.s32.f32 %v1083
    %v1212 = vcvt.s32.f32 %v1084
    %v1213 = vcvt.s32.f32 %v1085
    %v1214 = vcvt.s32.f32 %v1086
    %v1215 = vcvt.s32.f32 %v1087
    %v1216 = vcvt.s32.f32 %v1088
    %v1217 = vcvt.s32.f32 %v1089
    %v1218 = vcvt.s32.f32 %v1090
    %v1219 = vcvt.s32.f32 %v1091
    %v1220 = vcvt.s32.f32 %v1092
    %v1221 = vcvt.s32.f32 %v1093
    %v1222 = vcvt.s32.f32 %v1094
    %v1223 = vcvt.s32.f32 %v1095
    %v1224 = vcvt.s32.f32 %v1096
    %v1225 = vcvt.s32.f32 %v1097
    %v1226 = vcvt.s32.f32 %v1098
    %v1227 = vcvt.s32.f32 %v1099
    %v1228 = vcvt.s32.f32 %v1100
    %v1229 = vcvt.s32.f32 %v1101
    %v1230 = vcvt.s32.f32 %v1102
    %v1231 = vcvt.s32.f32 %v1103
    %v1232 = vcvt.s32.f32 %v1104
    %v1233 = vcvt.s32.f32 %v1105
    %v1234 = vcvt.s32.f32 %v1106
    %v1235 = vcvt.s32.f32 %v1107
    %v1236 = vcvt.s32.f32 %v1108
    %v1237 = vcvt.s32.f32 %v1109
    %v1238 = vcvt.s32.f32 %v1110
    %v1239 = vcvt.s32.f32 %v1111
    %v1240 = vcvt.s32.f32 %v1112
    %v1241 = vcvt.s32.f32 %v1113
    %v1242 = vcvt.s32.f32 %v1114
    %v1243 = vcvt.s32.f32 %v1115
    %v1244 = vcvt.s32.f32 %v1116
    %v1245 = vcvt.s32.f32 %v1117
    %v1246 = vcvt.s32.f32 %v1118
    %v1247 = vcvt.s32.f32 %v1119
    %v1248 = vcvt.s32.f32 %v1120
    %v1249 = vcvt.s32.f32 %v1121
    %v1250 = vcvt.s32.f32 %v1122
    %v1251 = vcvt.s32.f32 %v1123
    %v1252 = vcvt.s32.f32 %v1124
    %v1253 = vcvt.s32.f32 %v1125
    %v1254 = vcvt.s32.f32 %v1126
    %v1255 = vcvt.s32.f32 %v1127
    %v1256 = vcvt.s32.f32 %v1128
    %v1257 = vcvt.s32.f32 %v1129
    %v1258 = vcvt.s32.f32 %v1130
    %v1259 = vcvt.s32.f32 %v1131
    %v1260 = vcvt.s32.f32 %v1132
    %v1261 = vcvt.s32.f32 %v1133
    %v1262 = vcvt.s32.f32 %v1134
    %v1263 = vcvt.s32.f32 %v1135
    %v1264 = vcvt.s32.f32 %v1136
    %v1265 = vcvt.s32.f32 %v1137
    %v1266 = vcvt.s32.f32 %v1138
    %v1267 = vcvt.s32.f32 %v1139
    %v1268 = vcvt.s32.f32 %v1140
    %v1269 = vcvt.s32.f32 %v1141
    %v1270 = vcvt.s32.f32 %v1142
    %v1271 = vcvt.s32.f32 %v1143
    %v1272 = vcvt.s32.f32 %v1144
    %v1273 = vcvt.s32.f32 %v1145
    %v1274 = vcvt.s32.f32 %v1146
    %v1275 = vcvt.s32.f32 %v1147
    %v1276 = vcvt.s32.f32 %v1148
    %v1277 = vcvt.s32.f32 %v1149
    %v1278 = vcvt.s32.f32 %v1150
    %v1279 = vcvt.s32.f32 %v1151
    %v1280 = vcvt.s32.f32 %v1152
    %v1281 = vcvt.s32.f32 %v1153
    %v1282 = vcvt.s32.f32 %v1154
    %v1283 = vcvt.s32.f32 %v1155
    %v1284 = vcvt.s32.f32 %v1156
    %v1285 = vcvt.s32.f32 %v1157
    %v1286 = vcvt.s32.f32 %v1158
    %v1287 = vcvt.s32.f32 %v1159
    %v1288 = vcvt.s32.f32 %v1160
    %v1289 = vcvt.s32.f32 %v1161
    %v1290 = vcvt.s32.f32 %v1162
    %v1291 = vcvt.s32.f32 %v1163
    %v1292 = vcvt.s32.f32 %v1164
    %v1293 = vcvt.s32.f32 %v1165
    %v1294 = vcvt.s32.f32 %v1166
    %v1295 = vcvt.s32.f32 %v1167
    %v1296 = vcvt.s32.f32 %v1168
    %v1297 = vcvt.s32.f32 %v1169
    %v1298 = vcvt.s32.f32 %v1170
    %v1299 = vcvt.s32.f32 %v1171
    %v1300 = vcvt.s32.f32 %v1172
    %v1301 = vcvt.s32.f32 %v1173
    %v1302 = vcvt.s32.f32 %v1174
    %v1303 = vcvt.s32.f32 %v1175
    %v1304 = vcvt.s32.f32 %v1176
    %v1305 = vcvt.s32.f32 %v1177
    %v1306 = vcvt.s32.f32 %v1178
    %v1307 = vcvt.s32.f32 %v1179
    %v1308 = vcvt.s32.f32 %v1180
    %v1309 = vcvt.s32.f32 %v1181
    %v1310 = vcvt.s32.f32 %v1182
    %v1311 = vcvt.s32.f32 %v1183
    %v1312 = vcvt.s32.f32 %v1184
    %v1313 = vpack.c.bf16 %v1187, %v1185
    %v1314 = vpack.c.bf16 %v1188, %v1186
    %v1315 = vpack.c.bf16 %v1191, %v1189
    %v1316 = vpack.c.bf16 %v1192, %v1190
    %v1317 = vpack.c.bf16 %v1195, %v1193
    %v1318 = vpack.c.bf16 %v1196, %v1194
    %v1319 = vpack.c.bf16 %v1199, %v1197
    %v1320 = vpack.c.bf16 %v1200, %v1198
    %v1321 = vpack.c.bf16 %v1203, %v1201
    %v1322 = vpack.c.bf16 %v1204, %v1202
    %v1323 = vpack.c.bf16 %v1207, %v1205
    %v1324 = vpack.c.bf16 %v1208, %v1206
    %v1325 = vpack.c.bf16 %v1211, %v1209
    %v1326 = vpack.c.bf16 %v1212, %v1210
    %v1327 = vpack.c.bf16 %v1215, %v1213
    %v1328 = vpack.c.bf16 %v1216, %v1214
    %v1329 = vpack.c.bf16 %v1219, %v1217
    %v1330 = vpack.c.bf16 %v1220, %v1218
    %v1331 = vpack.c.bf16 %v1223, %v1221
    %v1332 = vpack.c.bf16 %v1224, %v1222
    %v1333 = vpack.c.bf16 %v1227, %v1225
    %v1334 = vpack.c.bf16 %v1228, %v1226
    %v1335 = vpack.c.bf16 %v1231, %v1229
    %v1336 = vpack.c.bf16 %v1232, %v1230
    %v1337 = vpack.c.bf16 %v1235, %v1233
    %v1338 = vpack.c.bf16 %v1236, %v1234
    %v1339 = vpack.c.bf16 %v1239, %v1237
    %v1340 = vpack.c.bf16 %v1240, %v1238
    %v1341 = vpack.c.bf16 %v1243, %v1241
    %v1342 = vpack.c.bf16 %v1244, %v1242
    %v1343 = vpack.c.bf16 %v1247, %v1245
    %v1344 = vpack.c.bf16 %v1248, %v1246
    %v1345 = vpack.c.bf16 %v1251, %v1249
    %v1346 = vpack.c.bf16 %v1252, %v1250
    %v1347 = vpack.c.bf16 %v1255, %v1253
    %v1348 = vpack.c.bf16 %v1256, %v1254
    %v1349 = vpack.c.bf16 %v1259, %v1257
    %v1350 = vpack.c.bf16 %v1260, %v1258
    %v1351 = vpack.c.bf16 %v1263, %v1261
    %v1352 = vpack.c.bf16 %v1264, %v1262
    %v1353 = vpack.c.bf16 %v1267, %v1265
    %v1354 = vpack.c.bf16 %v1268, %v1266
    %v1355 = vpack.c.bf16 %v1271, %v1269
    %v1356 = vpack.c.bf16 %v1272, %v1270
    %v1357 = vpack.c.bf16 %v1275, %v1273
    %v1358 = vpack.c.bf16 %v1276, %v1274
    %v1359 = vpack.c.bf16 %v1279, %v1277
    %v1360 = vpack.c.bf16 %v1280, %v1278
    %v1361 = vpack.c.bf16 %v1283, %v1281
    %v1362 = vpack.c.bf16 %v1284, %v1282
    %v1363 = vpack.c.bf16 %v1287, %v1285
    %v1364 = vpack.c.bf16 %v1288, %v1286
    %v1365 = vpack.c.bf16 %v1291, %v1289
    %v1366 = vpack.c.bf16 %v1292, %v1290
    %v1367 = vpack.c.bf16 %v1295, %v1293
    %v1368 = vpack.c.bf16 %v1296, %v1294
    %v1369 = vpack.c.bf16 %v1299, %v1297
    %v1370 = vpack.c.bf16 %v1300, %v1298
    %v1371 = vpack.c.bf16 %v1303, %v1301
    %v1372 = vpack.c.bf16 %v1304, %v1302
    %v1373 = vpack.c.bf16 %v1307, %v1305
    %v1374 = vpack.c.bf16 %v1308, %v1306
    %v1375 = vpack.c.bf16 %v1311, %v1309
    %v1376 = vpack.c.bf16 %v1312, %v1310
    %v1393 = vunpack.c.l.b16 %v799
    %v1394 = vunpack.c.h.b16 %v799
    %v1395 = vunpack.c.l.b16 %v800
    %v1396 = vunpack.c.h.b16 %v800
    %v1397 = vunpack.c.l.b16 %v801
    %v1398 = vunpack.c.h.b16 %v801
    %v1399 = vunpack.c.l.b16 %v802
    %v1400 = vunpack.c.h.b16 %v802
    %v1401 = vunpack.c.l.b16 %v803
    %v1402 = vunpack.c.h.b16 %v803
    %v1403 = vunpack.c.l.b16 %v804
    %v1404 = vunpack.c.h.b16 %v804
    %v1405 = vunpack.c.l.b16 %v805
    %v1406 = vunpack.c.h.b16 %v805
    %v1407 = vunpack.c.l.b16 %v806
    %v1408 = vunpack.c.h.b16 %v806
    %v1409 = vunpack.c.l.b16 %v807
    %v1410 = vunpack.c.h.b16 %v807
    %v1411 = vunpack.c.l.b16 %v808
    %v1412 = vunpack.c.h.b16 %v808
    %v1413 = vunpack.c.l.b16 %v809
    %v1414 = vunpack.c.h.b16 %v809
    %v1415 = vunpack.c.l.b16 %v810
    %v1416 = vunpack.c.h.b16 %v810
    %v1417 = vunpack.c.l.b16 %v811
    %v1418 = vunpack.c.h.b16 %v811
    %v1419 = vunpack.c.l.b16 %v812
    %v1420 = vunpack.c.h.b16 %v812
    %v1421 = vunpack.c.l.b16 %v813
    %v1422 = vunpack.c.h.b16 %v813
    %v1423 = vunpack.c.l.b16 %v814
    %v1424 = vunpack.c.h.b16 %v814
    %v1425 = vpack.c.b16 %v1397, %v1393
    %v1426 = vpack.c.b16 %v1398, %v1394
    %v1427 = vpack.c.b16 %v1399, %v1395
    %v1428 = vpack.c.b16 %v1400, %v1396
    %v1429 = vpack.c.b16 %v1405, %v1401
    %v1430 = vpack.c.b16 %v1406, %v1402
    %v1431 = vpack.c.b16 %v1407, %v1403
    %v1432 = vpack.c.b16 %v1408, %v1404
    %v1433 = vpack.c.b16 %v1413, %v1409
    %v1434 = vpack.c.b16 %v1414, %v1410
    %v1435 = vpack.c.b16 %v1415, %v1411
    %v1436 = vpack.c.b16 %v1416, %v1412
    %v1437 = vpack.c.b16 %v1421, %v1417
    %v1438 = vpack.c.b16 %v1422, %v1418
    %v1439 = vpack.c.b16 %v1423, %v1419
    %v1440 = vpack.c.b16 %v1424, %v1420
    %1457 = vmatprep.subr.bf16.mxu0 %v1314
    %1458 = vmatpush1.bf16.msra.mxu0 %v1313
    %1459 = vmatprep.subr.bf16.mxu0 %v1316
    %1460 = vmatpush1.bf16.msra.mxu0 %v1315
    %1461 = vmatprep.subr.bf16.mxu0 %v1318
    %1462 = vmatpush1.bf16.msra.mxu0 %v1317
    %1463 = vmatprep.subr.bf16.mxu0 %v1320
    %1464 = vmatpush1.bf16.msra.mxu0 %v1319
    %1465 = vmatprep.subr.bf16.mxu0 %v1322
    %1466 = vmatpush1.bf16.msra.mxu0 %v1321
    %1467 = vmatprep.subr.bf16.mxu0 %v1324
    %1468 = vmatpush1.bf16.msra.mxu0 %v1323
    %1469 = vmatprep.subr.bf16.mxu0 %v1326
    %1470 = vmatpush1.bf16.msra.mxu0 %v1325
    %1471 = vmatprep.subr.bf16.mxu0 %v1328
    %1472 = vmatpush1.bf16.msra.mxu0 %v1327
    %1473 = vmatprep.subr.bf16.mxu0 %v1330
    %1474 = vmatpush1.bf16.msra.mxu0 %v1329
    %1475 = vmatprep.subr.bf16.mxu0 %v1332
    %1476 = vmatpush1.bf16.msra.mxu0 %v1331
    %1477 = vmatprep.subr.bf16.mxu0 %v1334
    %1478 = vmatpush1.bf16.msra.mxu0 %v1333
    %1479 = vmatprep.subr.bf16.mxu0 %v1336
    %1480 = vmatpush1.bf16.msra.mxu0 %v1335
    %1481 = vmatprep.subr.bf16.mxu0 %v1338
    %1482 = vmatpush1.bf16.msra.mxu0 %v1337
    %1483 = vmatprep.subr.bf16.mxu0 %v1340
    %1484 = vmatpush1.bf16.msra.mxu0 %v1339
    %1485 = vmatprep.subr.bf16.mxu0 %v1342
    %1486 = vmatpush1.bf16.msra.mxu0 %v1341
    %1487 = vmatprep.subr.bf16.mxu0 %v1344
    %1488 = vmatpush1.bf16.msra.mxu0 %v1343
    %1489 = vmatprep.mubr.bf16.mxu0 %v1426
    %1490 = vmatmul.mubr.bf16.gmra.mrb[0].mxu0 %v1425
    %v1491 = vpop.f32.mrb[0].mxu0
    %v1492 = vadd.f32 0.0, %v1491
    %v1493 = vpop.f32.mrb[0].mxu0
    %v1494 = vadd.f32 0.0, %v1493
    %v1495 = vpop.f32.mrb[0].mxu0
    %v1496 = vadd.f32 0.0, %v1495
    %v1497 = vpop.f32.mrb[0].mxu0
    %v1498 = vadd.f32 0.0, %v1497
    %1499 = vmatprep.mubr.bf16.mxu0 %v1430
    %1500 = vmatmul.mubr.bf16.gmra.mrb[0].mxu0 %v1429
    %v1501 = vpop.f32.mrb[0].mxu0
    %v1502 = vadd.f32 0.0, %v1501
    %v1503 = vpop.f32.mrb[0].mxu0
    %v1504 = vadd.f32 0.0, %v1503
    %v1505 = vpop.f32.mrb[0].mxu0
    %v1506 = vadd.f32 0.0, %v1505
    %v1507 = vpop.f32.mrb[0].mxu0
    %v1508 = vadd.f32 0.0, %v1507
    %1509 = vmatprep.mubr.bf16.mxu0 %v1434
    %1510 = vmatmul.mubr.bf16.gmra.mrb[0].mxu0 %v1433
    %v1511 = vpop.f32.mrb[0].mxu0
    %v1512 = vadd.f32 0.0, %v1511
    %v1513 = vpop.f32.mrb[0].mxu0
    %v1514 = vadd.f32 0.0, %v1513
    %v1515 = vpop.f32.mrb[0].mxu0
    %v1516 = vadd.f32 0.0, %v1515
    %v1517 = vpop.f32.mrb[0].mxu0
    %v1518 = vadd.f32 0.0, %v1517
    %1519 = vmatprep.mubr.bf16.mxu0 %v1438
    %1520 = vmatmul.mubr.bf16.gmra.mrb[0].mxu0 %v1437
    %v1521 = vpop.f32.mrb[0].mxu0
    %v1522 = vadd.f32 0.0, %v1521
    %v1523 = vpop.f32.mrb[0].mxu0
    %v1524 = vadd.f32 0.0, %v1523
    %v1525 = vpop.f32.mrb[0].mxu0
    %v1526 = vadd.f32 0.0, %v1525
    %v1527 = vpop.f32.mrb[0].mxu0
    %v1528 = vadd.f32 0.0, %v1527
    %1529 = vdwg.mxu0
    %1530 = vmatprep.subr.bf16.mxu0 %v1346
    %1531 = vmatpush1.bf16.msra.mxu0 %v1345
    %1532 = vmatprep.subr.bf16.mxu0 %v1348
    %1533 = vmatpush1.bf16.msra.mxu0 %v1347
    %1534 = vmatprep.subr.bf16.mxu0 %v1350
    %1535 = vmatpush1.bf16.msra.mxu0 %v1349
    %1536 = vmatprep.subr.bf16.mxu0 %v1352
    %1537 = vmatpush1.bf16.msra.mxu0 %v1351
    %1538 = vmatprep.subr.bf16.mxu0 %v1354
    %1539 = vmatpush1.bf16.msra.mxu0 %v1353
    %1540 = vmatprep.subr.bf16.mxu0 %v1356
    %1541 = vmatpush1.bf16.msra.mxu0 %v1355
    %1542 = vmatprep.subr.bf16.mxu0 %v1358
    %1543 = vmatpush1.bf16.msra.mxu0 %v1357
    %1544 = vmatprep.subr.bf16.mxu0 %v1360
    %1545 = vmatpush1.bf16.msra.mxu0 %v1359
    %1546 = vmatprep.subr.bf16.mxu0 %v1362
    %1547 = vmatpush1.bf16.msra.mxu0 %v1361
    %1548 = vmatprep.subr.bf16.mxu0 %v1364
    %1549 = vmatpush1.bf16.msra.mxu0 %v1363
    %1550 = vmatprep.subr.bf16.mxu0 %v1366
    %1551 = vmatpush1.bf16.msra.mxu0 %v1365
    %1552 = vmatprep.subr.bf16.mxu0 %v1368
    %1553 = vmatpush1.bf16.msra.mxu0 %v1367
    %1554 = vmatprep.subr.bf16.mxu0 %v1370
    %1555 = vmatpush1.bf16.msra.mxu0 %v1369
    %1556 = vmatprep.subr.bf16.mxu0 %v1372
    %1557 = vmatpush1.bf16.msra.mxu0 %v1371
    %1558 = vmatprep.subr.bf16.mxu0 %v1374
    %1559 = vmatpush1.bf16.msra.mxu0 %v1373
    %1560 = vmatprep.subr.bf16.mxu0 %v1376
    %1561 = vmatpush1.bf16.msra.mxu0 %v1375
    %1562 = vmatprep.mubr.bf16.mxu0 %v1428
    %1563 = vmatmul.mubr.bf16.gmra.mrb[0].mxu0 %v1427
    %v1564 = vpop.f32.mrb[0].mxu0
    %v1565 = vadd.f32 %v1492, %v1564
    %v1566 = vpop.f32.mrb[0].mxu0
    %v1567 = vadd.f32 %v1494, %v1566
    %v1568 = vpop.f32.mrb[0].mxu0
    %v1569 = vadd.f32 %v1496, %v1568
    %v1570 = vpop.f32.mrb[0].mxu0
    %v1571 = vadd.f32 %v1498, %v1570
    %1572 = vmatprep.mubr.bf16.mxu0 %v1432
    %1573 = vmatmul.mubr.bf16.gmra.mrb[0].mxu0 %v1431
    %v1574 = vpop.f32.mrb[0].mxu0
    %v1575 = vadd.f32 %v1502, %v1574
    %v1576 = vpop.f32.mrb[0].mxu0
    %v1577 = vadd.f32 %v1504, %v1576
    %v1578 = vpop.f32.mrb[0].mxu0
    %v1579 = vadd.f32 %v1506, %v1578
    %v1580 = vpop.f32.mrb[0].mxu0
    %v1581 = vadd.f32 %v1508, %v1580
    %1582 = vmatprep.mubr.bf16.mxu0 %v1436
    %1583 = vmatmul.mubr.bf16.gmra.mrb[0].mxu0 %v1435
    %v1584 = vpop.f32.mrb[0].mxu0
    %v1585 = vadd.f32 %v1512, %v1584
    %v1586 = vpop.f32.mrb[0].mxu0
    %v1587 = vadd.f32 %v1514, %v1586
    %v1588 = vpop.f32.mrb[0].mxu0
    %v1589 = vadd.f32 %v1516, %v1588
    %v1590 = vpop.f32.mrb[0].mxu0
    %v1591 = vadd.f32 %v1518, %v1590
    %1592 = vmatprep.mubr.bf16.mxu0 %v1440
    %1593 = vmatmul.mubr.bf16.gmra.mrb[0].mxu0 %v1439
    %v1594 = vpop.f32.mrb[0].mxu0
    %v1595 = vadd.f32 %v1522, %v1594
    %v1596 = vpop.f32.mrb[0].mxu0
    %v1597 = vadd.f32 %v1524, %v1596
    %v1598 = vpop.f32.mrb[0].mxu0
    %v1599 = vadd.f32 %v1526, %v1598
    %v1600 = vpop.f32.mrb[0].mxu0
    %v1601 = vadd.f32 %v1528, %v1600
    %1602 = vdwg.mxu0
    %1603 = vmatprep.subr.bf16.mxu0 %v736
    %1604 = vmatpush1.bf16.msra.mxu0 %v735
    %1605 = vmatprep.subr.bf16.mxu0 %v738
    %1606 = vmatpush1.bf16.msra.mxu0 %v737
    %1607 = vmatprep.subr.bf16.mxu0 %v740
    %1608 = vmatpush1.bf16.msra.mxu0 %v739
    %1609 = vmatprep.subr.bf16.mxu0 %v742
    %1610 = vmatpush1.bf16.msra.mxu0 %v741
    %1611 = vmatprep.subr.bf16.mxu0 %v744
    %1612 = vmatpush1.bf16.msra.mxu0 %v743
    %1613 = vmatprep.subr.bf16.mxu0 %v746
    %1614 = vmatpush1.bf16.msra.mxu0 %v745
    %1615 = vmatprep.subr.bf16.mxu0 %v748
    %1616 = vmatpush1.bf16.msra.mxu0 %v747
    %1617 = vmatprep.subr.bf16.mxu0 %v750
    %1618 = vmatpush1.bf16.msra.mxu0 %v749
    %1619 = vmatprep.subr.bf16.mxu0 %v752
    %1620 = vmatpush1.bf16.msra.mxu0 %v751
    %1621 = vmatprep.subr.bf16.mxu0 %v754
    %1622 = vmatpush1.bf16.msra.mxu0 %v753
    %1623 = vmatprep.subr.bf16.mxu0 %v756
    %1624 = vmatpush1.bf16.msra.mxu0 %v755
    %1625 = vmatprep.subr.bf16.mxu0 %v758
    %1626 = vmatpush1.bf16.msra.mxu0 %v757
    %1627 = vmatprep.subr.bf16.mxu0 %v760
    %1628 = vmatpush1.bf16.msra.mxu0 %v759
    %1629 = vmatprep.subr.bf16.mxu0 %v762
    %1630 = vmatpush1.bf16.msra.mxu0 %v761
    %1631 = vmatprep.subr.bf16.mxu0 %v764
    %1632 = vmatpush1.bf16.msra.mxu0 %v763
    %1633 = vmatprep.subr.bf16.mxu0 %v766
    %1634 = vmatpush1.bf16.msra.mxu0 %v765
    %1635 = vmatprep.mubr.bf16.mxu0 %v1426
    %1636 = vmatmul.mubr.bf16.gmra.mrb[0].mxu0 %v1425
    %v1637 = vpop.f32.mrb[0].mxu0
    %v1638 = vadd.f32 %v1565, %v1637
    %v1639 = vpop.f32.mrb[0].mxu0
    %v1640 = vadd.f32 %v1567, %v1639
    %v1641 = vpop.f32.mrb[0].mxu0
    %v1642 = vadd.f32 %v1569, %v1641
    %v1643 = vpop.f32.mrb[0].mxu0
    %v1644 = vadd.f32 %v1571, %v1643
    %1645 = vmatprep.mubr.bf16.mxu0 %v1430
    %1646 = vmatmul.mubr.bf16.gmra.mrb[0].mxu0 %v1429
    %v1647 = vpop.f32.mrb[0].mxu0
    %v1648 = vadd.f32 %v1575, %v1647
    %v1649 = vpop.f32.mrb[0].mxu0
    %v1650 = vadd.f32 %v1577, %v1649
    %v1651 = vpop.f32.mrb[0].mxu0
    %v1652 = vadd.f32 %v1579, %v1651
    %v1653 = vpop.f32.mrb[0].mxu0
    %v1654 = vadd.f32 %v1581, %v1653
    %1655 = vmatprep.mubr.bf16.mxu0 %v1434
    %1656 = vmatmul.mubr.bf16.gmra.mrb[0].mxu0 %v1433
    %v1657 = vpop.f32.mrb[0].mxu0
    %v1658 = vadd.f32 %v1585, %v1657
    %v1659 = vpop.f32.mrb[0].mxu0
    %v1660 = vadd.f32 %v1587, %v1659
    %v1661 = vpop.f32.mrb[0].mxu0
    %v1662 = vadd.f32 %v1589, %v1661
    %v1663 = vpop.f32.mrb[0].mxu0
    %v1664 = vadd.f32 %v1591, %v1663
    %1665 = vmatprep.mubr.bf16.mxu0 %v1438
    %1666 = vmatmul.mubr.bf16.gmra.mrb[0].mxu0 %v1437
    %v1667 = vpop.f32.mrb[0].mxu0
    %v1668 = vadd.f32 %v1595, %v1667
    %v1669 = vpop.f32.mrb[0].mxu0
    %v1670 = vadd.f32 %v1597, %v1669
    %v1671 = vpop.f32.mrb[0].mxu0
    %v1672 = vadd.f32 %v1599, %v1671
    %v1673 = vpop.f32.mrb[0].mxu0
    %v1674 = vadd.f32 %v1601, %v1673
    %1675 = vdwg.mxu0
    %1676 = vmatprep.subr.bf16.mxu0 %v768
    %1677 = vmatpush1.bf16.msra.mxu0 %v767
    %1678 = vmatprep.subr.bf16.mxu0 %v770
    %1679 = vmatpush1.bf16.msra.mxu0 %v769
    %1680 = vmatprep.subr.bf16.mxu0 %v772
    %1681 = vmatpush1.bf16.msra.mxu0 %v771
    %1682 = vmatprep.subr.bf16.mxu0 %v774
    %1683 = vmatpush1.bf16.msra.mxu0 %v773
    %1684 = vmatprep.subr.bf16.mxu0 %v776
    %1685 = vmatpush1.bf16.msra.mxu0 %v775
    %1686 = vmatprep.subr.bf16.mxu0 %v778
    %1687 = vmatpush1.bf16.msra.mxu0 %v777
    %1688 = vmatprep.subr.bf16.mxu0 %v780
    %1689 = vmatpush1.bf16.msra.mxu0 %v779
    %1690 = vmatprep.subr.bf16.mxu0 %v782
    %1691 = vmatpush1.bf16.msra.mxu0 %v781
    %1692 = vmatprep.subr.bf16.mxu0 %v784
    %1693 = vmatpush1.bf16.msra.mxu0 %v783
    %1694 = vmatprep.subr.bf16.mxu0 %v786
    %1695 = vmatpush1.bf16.msra.mxu0 %v785
    %1696 = vmatprep.subr.bf16.mxu0 %v788
    %1697 = vmatpush1.bf16.msra.mxu0 %v787
    %1698 = vmatprep.subr.bf16.mxu0 %v790
    %1699 = vmatpush1.bf16.msra.mxu0 %v789
    %1700 = vmatprep.subr.bf16.mxu0 %v792
    %1701 = vmatpush1.bf16.msra.mxu0 %v791
    %1702 = vmatprep.subr.bf16.mxu0 %v794
    %1703 = vmatpush1.bf16.msra.mxu0 %v793
    %1704 = vmatprep.subr.bf16.mxu0 %v796
    %1705 = vmatpush1.bf16.msra.mxu0 %v795
    %1706 = vmatprep.subr.bf16.mxu0 %v798
    %1707 = vmatpush1.bf16.msra.mxu0 %v797
    %1708 = vmatprep.mubr.bf16.mxu0 %v1428
    %1709 = vmatmul.mubr.bf16.gmra.mrb[0].mxu0 %v1427
    %v1710 = vpop.f32.mrb[0].mxu0
    %v1711 = vadd.f32 %v1638, %v1710
    %v1712 = vpop.f32.mrb[0].mxu0
    %v1713 = vadd.f32 %v1640, %v1712
    %v1714 = vpop.f32.mrb[0].mxu0
    %v1715 = vadd.f32 %v1642, %v1714
    %v1716 = vpop.f32.mrb[0].mxu0
    %v1717 = vadd.f32 %v1644, %v1716
    %1718 = vmatprep.mubr.bf16.mxu0 %v1432
    %1719 = vmatmul.mubr.bf16.gmra.mrb[0].mxu0 %v1431
    %v1720 = vpop.f32.mrb[0].mxu0
    %v1721 = vadd.f32 %v1648, %v1720
    %v1722 = vpop.f32.mrb[0].mxu0
    %v1723 = vadd.f32 %v1650, %v1722
    %v1724 = vpop.f32.mrb[0].mxu0
    %v1725 = vadd.f32 %v1652, %v1724
    %v1726 = vpop.f32.mrb[0].mxu0
    %v1727 = vadd.f32 %v1654, %v1726
    %1728 = vmatprep.mubr.bf16.mxu0 %v1436
    %1729 = vmatmul.mubr.bf16.gmra.mrb[0].mxu0 %v1435
    %v1730 = vpop.f32.mrb[0].mxu0
    %v1731 = vadd.f32 %v1658, %v1730
    %v1732 = vpop.f32.mrb[0].mxu0
    %v1733 = vadd.f32 %v1660, %v1732
    %v1734 = vpop.f32.mrb[0].mxu0
    %v1735 = vadd.f32 %v1662, %v1734
    %v1736 = vpop.f32.mrb[0].mxu0
    %v1737 = vadd.f32 %v1664, %v1736
    %1738 = vmatprep.mubr.bf16.mxu0 %v1440
    %1739 = vmatmul.mubr.bf16.gmra.mrb[0].mxu0 %v1439
    %v1740 = vpop.f32.mrb[0].mxu0
    %v1741 = vadd.f32 %v1668, %v1740
    %v1742 = vpop.f32.mrb[0].mxu0
    %v1743 = vadd.f32 %v1670, %v1742
    %v1744 = vpop.f32.mrb[0].mxu0
    %v1745 = vadd.f32 %v1672, %v1744
    %v1746 = vpop.f32.mrb[0].mxu0
    %v1747 = vadd.f32 %v1674, %v1746
    %1748 = vdwg.mxu0
    %vm1749 = vcmp.gt.f32.partialorder %v1711, 1.5
    %vm1750 = vcmp.gt.f32.partialorder %v1713, 1.5
    %vm1751 = vcmp.gt.f32.partialorder %v1715, 1.5
    %vm1752 = vcmp.gt.f32.partialorder %v1717, 1.5
    %vm1753 = vcmp.gt.f32.partialorder %v1721, 1.5
    %vm1754 = vcmp.gt.f32.partialorder %v1723, 1.5
    %vm1755 = vcmp.gt.f32.partialorder %v1725, 1.5
    %vm1756 = vcmp.gt.f32.partialorder %v1727, 1.5
    %vm1757 = vcmp.gt.f32.partialorder %v1731, 1.5
    %vm1758 = vcmp.gt.f32.partialorder %v1733, 1.5
    %vm1759 = vcmp.gt.f32.partialorder %v1735, 1.5
    %vm1760 = vcmp.gt.f32.partialorder %v1737, 1.5
    %vm1761 = vcmp.gt.f32.partialorder %v1741, 1.5
    %vm1762 = vcmp.gt.f32.partialorder %v1743, 1.5
    %vm1763 = vcmp.gt.f32.partialorder %v1745, 1.5
    %vm1764 = vcmp.gt.f32.partialorder %v1747, 1.5
    %v1765 = vsel %vm1749, 1, 0
    %v1766 = vsel %vm1750, 1, 0
    %v1767 = vsel %vm1751, 1, 0
    %v1768 = vsel %vm1752, 1, 0
    %v1769 = vsel %vm1753, 1, 0
    %v1770 = vsel %vm1754, 1, 0
    %v1771 = vsel %vm1755, 1, 0
    %v1772 = vsel %vm1756, 1, 0
    %v1773 = vsel %vm1757, 1, 0
    %v1774 = vsel %vm1758, 1, 0
    %v1775 = vsel %vm1759, 1, 0
    %v1776 = vsel %vm1760, 1, 0
    %v1777 = vsel %vm1761, 1, 0
    %v1778 = vsel %vm1762, 1, 0
    %v1779 = vsel %vm1763, 1, 0
    %v1780 = vsel %vm1764, 1, 0
    %v1781 = vcvt.s32.f32 %v1765
    %v1782 = vcvt.s32.f32 %v1766
    %v1783 = vcvt.s32.f32 %v1767
    %v1784 = vcvt.s32.f32 %v1768
    %v1785 = vcvt.s32.f32 %v1769
    %v1786 = vcvt.s32.f32 %v1770
    %v1787 = vcvt.s32.f32 %v1771
    %v1788 = vcvt.s32.f32 %v1772
    %v1789 = vcvt.s32.f32 %v1773
    %v1790 = vcvt.s32.f32 %v1774
    %v1791 = vcvt.s32.f32 %v1775
    %v1792 = vcvt.s32.f32 %v1776
    %v1793 = vcvt.s32.f32 %v1777
    %v1794 = vcvt.s32.f32 %v1778
    %v1795 = vcvt.s32.f32 %v1779
    %v1796 = vcvt.s32.f32 %v1780
    %v1797 = vld [vmem:[%s4] sm:$0xff]
    %v1798 = vld [vmem:[%s4 + $0x8] sm:$0xff]
    %v1799 = vld [vmem:[%s4 + $0x10] sm:$0xff]
    %v1800 = vld [vmem:[%s4 + $0x18] sm:$0xff]
    %v1801 = vld [vmem:[%s4 + $0x20] sm:$0xff]
    %v1802 = vld [vmem:[%s4 + $0x28] sm:$0xff]
    %v1803 = vld [vmem:[%s4 + $0x30] sm:$0xff]
    %v1804 = vld [vmem:[%s4 + $0x38] sm:$0xff]
    %1806 = vset.pattern.permute.xlu0 0
    %1807 = vperm.xlu0 %1806, %v1797
    %v1808 = vpop.permute.xlu0 %1807
    %1811 = vset.pattern.permute.xlu0 0
    %1812 = vperm.xlu0 %1811, %v1798
    %v1813 = vpop.permute.xlu0 %1812
    %1816 = vset.pattern.permute.xlu0 0
    %1817 = vperm.xlu0 %1816, %v1799
    %v1818 = vpop.permute.xlu0 %1817
    %1821 = vset.pattern.permute.xlu0 0
    %1822 = vperm.xlu0 %1821, %v1800
    %v1823 = vpop.permute.xlu0 %1822
    %1826 = vset.pattern.permute.xlu0 0
    %1827 = vperm.xlu0 %1826, %v1801
    %v1828 = vpop.permute.xlu0 %1827
    %1831 = vset.pattern.permute.xlu0 0
    %1832 = vperm.xlu0 %1831, %v1802
    %v1833 = vpop.permute.xlu0 %1832
    %1836 = vset.pattern.permute.xlu0 0
    %1837 = vperm.xlu0 %1836, %v1803
    %v1838 = vpop.permute.xlu0 %1837
    %1841 = vset.pattern.permute.xlu0 0
    %1842 = vperm.xlu0 %1841, %v1804
    %v1843 = vpop.permute.xlu0 %1842
    %v1845 = vmul.f32 %v1781, %v1808
    %v1846 = vmul.f32 %v1782, %v1808
    %v1847 = vmul.f32 %v1783, %v1813
    %v1848 = vmul.f32 %v1784, %v1813
    %v1849 = vmul.f32 %v1785, %v1818
    %v1850 = vmul.f32 %v1786, %v1818
    %v1851 = vmul.f32 %v1787, %v1823
    %v1852 = vmul.f32 %v1788, %v1823
    %v1853 = vmul.f32 %v1789, %v1828
    %v1854 = vmul.f32 %v1790, %v1828
    %v1855 = vmul.f32 %v1791, %v1833
    %v1856 = vmul.f32 %v1792, %v1833
    %v1857 = vmul.f32 %v1793, %v1838
    %v1858 = vmul.f32 %v1794, %v1838
    %v1859 = vmul.f32 %v1795, %v1843
    %v1860 = vmul.f32 %v1796, %v1843
    %v1861 = vadd.f32 %v1845, %v1847
    %v1862 = vadd.f32 %v1861, %v1849
    %v1863 = vadd.f32 %v1862, %v1851
    %v1864 = vadd.f32 %v1863, %v1853
    %v1865 = vadd.f32 %v1864, %v1855
    %v1866 = vadd.f32 %v1865, %v1857
    %v1867 = vadd.f32 %v1866, %v1859
    %v1868 = vadd.f32 %v1846, %v1848
    %v1869 = vadd.f32 %v1868, %v1850
    %v1870 = vadd.f32 %v1869, %v1852
    %v1871 = vadd.f32 %v1870, %v1854
    %v1872 = vadd.f32 %v1871, %v1856
    %v1873 = vadd.f32 %v1872, %v1858
    %v1874 = vadd.f32 %v1873, %v1860
    %v1875 = vld [vmem:[%s5] sm:$0xff]
    %1877 = vset.pattern.permute.xlu0 0
    %1878 = vperm.xlu0 %1877, %v1875
    %v1879 = vpop.permute.xlu0 %1878
    %v1881 = vadd.f32 %v1867, %v1879
    %v1882 = vadd.f32 %v1874, %v1879
    %1883 = vst [vmem:[#allocation7] sm:$0xff] %v1881
    %1884 = vst [vmem:[#allocation7 + $0x8] sm:$0xff] %v1882
    // Predicated region
    $region26: #{tpu_custom_call.1} parent=1 // pred_check
      _
    $region27: #{tpu_custom_call.1} parent=1 // pred_check_branch
      %1886 = sbr.rel (0) target = $region29
    $region28: #{tpu_custom_call.1} parent=1 // pred_region
      %s1888 = ssub.s32 256, 256
      %1889 = vsyncadd [#allocation6], %s1888
      %s1891 = sshll.u32 [#allocation7], 4
      %s1892 = int_to_ptr.vmem [resolvable:$true] %s1891
      %1894 = dma.vmem_to_hbm [thread:$0]  %s1892, 256, %s6, [#allocation6]
    $region29: #{tpu_custom_call.1} parent=1 // pred_fallthru
      _
    // Predicated region
    $region30: #{tpu_custom_call.1} parent=1 // pred_check
      _
    $region31: #{tpu_custom_call.1} parent=1 // pred_check_branch
      %1896 = sbr.rel (0) target = $region33
    $region32: #{tpu_custom_call.1} parent=1 // pred_region
      %1897 = dma.done [#allocation6], 256
    $region33: #{tpu_custom_call.1} parent=1 // pred_fallthru
      _
    %1898 = vsyncpa [#allocation5], 1
    %1899 = vsyncpa [#allocation6], 1

</llo_original>
